<compile_context>
chip_gen: v5e
topology: v5e:2x2
jax: 0.10.0
libtpu: 0.0.40
codegen_flags: <defaults>
</compile_context>

<pallas_src>
import functools

import jax
import jax.numpy as jnp
from jax import lax
from jax.experimental import pallas as pl
from jax.experimental.pallas import tpu as pltpu

SOS_TOKEN = 1
LANE = 128  # TPU lane width; GRU gate blocks are padded to LANE alignment.


def _round_up(x, m):
    return (x + m - 1) // m * m


# ----------------------------------------------------------------------------
# Fused GRU cell (PyTorch nn.GRU semantics, gate order r, z, n).
#   x   : (1, H)    bf16 input
#   h   : (1, H)    f32  previous hidden
#   wih : (H, 3*GS) bf16 fused input->hidden weights (gate g in lanes
#                        [g*GS, g*GS+H), GS = round_up(H, 128))
#   whh : (H, 3*GS) bf16 fused hidden->hidden weights
#   bih, bhh : (1, 3*GS) f32 fused biases
# One x@Wih and one h@Whh MXU push per cell; gate splits are vreg-aligned.
# ----------------------------------------------------------------------------
def gru_cell(x, h, wih, whh, bih, bhh):
    H = h.shape[1]
    GS = wih.shape[1] // 3
    gi = jnp.dot(x.astype(jnp.bfloat16), wih,
                 preferred_element_type=jnp.float32) + bih          # (1, 3GS)
    gh = jnp.dot(h.astype(jnp.bfloat16), whh,
                 preferred_element_type=jnp.float32) + bhh          # (1, 3GS)
    r = jax.nn.sigmoid(gi[:, 0:H] + gh[:, 0:H])
    z = jax.nn.sigmoid(gi[:, GS:GS + H] + gh[:, GS:GS + H])
    n = jnp.tanh(gi[:, 2 * GS:2 * GS + H] + r * gh[:, 2 * GS:2 * GS + H])
    return (1.0 - z) * n + z * h


# ----------------------------------------------------------------------------
# Fused encoder + greedy-decoder kernel (single grid step).
# ----------------------------------------------------------------------------
def seq2seq_greedy_kernel(
        emb_seq_ref,                                         # (T, H)    bf16
        emb_tbl_ref,                                         # (V, 1, H) bf16
        ewih_f_ref, ewhh_f_ref, ebih_f_ref, ebhh_f_ref,      # encoder fwd GRU
        ewih_b_ref, ewhh_b_ref, ebih_b_ref, ebhh_b_ref,      # encoder bwd GRU
        dwih_ref, dwhh_ref, dbih_ref, dbhh_ref,              # decoder GRU
        wc_r_ref, wc_c_ref, bc_ref,                          # concat layer
        wout_ref, bout_ref,                                  # (H, V), (1, V)
        tokens_ref, scores_ref,                              # outputs (1, L)
        fwd_ref, bwd_ref,                                    # (T, H) f32
        enc_ref,                                             # (T, H) bf16
        h_ref,                                               # (1, H) f32
        tok_ref):                                            # (1, 1) int32
    T, H = emb_seq_ref.shape
    V = emb_tbl_ref.shape[0]
    L = tokens_ref.shape[1]

    # ----------------------- encoder: bidirectional GRU ----------------------
    ewih_f = ewih_f_ref[...]; ewhh_f = ewhh_f_ref[...]
    ebih_f = ebih_f_ref[...]; ebhh_f = ebhh_f_ref[...]
    ewih_b = ewih_b_ref[...]; ewhh_b = ewhh_b_ref[...]
    ebih_b = ebih_b_ref[...]; ebhh_b = ebhh_b_ref[...]

    h_f = jnp.zeros((1, H), jnp.float32)
    h_b = jnp.zeros((1, H), jnp.float32)
    # fwd step t and bwd step T-1-t interleaved: two independent dependency
    # chains per iteration hide MXU result latency.  Static Python loop ==
    # fully unrolled (fine at small T).
    # TODO(synk): for large T switch to lax.fori_loop(..., unroll=k).
    for t in range(T):
        u = T - 1 - t
        x_f = emb_seq_ref[t:t + 1, :]
        x_b = emb_seq_ref[u:u + 1, :]
        h_f = gru_cell(x_f, h_f, ewih_f, ewhh_f, ebih_f, ebhh_f)
        h_b = gru_cell(x_b, h_b, ewih_b, ewhh_b, ebih_b, ebhh_b)
        fwd_ref[t:t + 1, :] = h_f
        bwd_ref[u:u + 1, :] = h_b

    # encoder_outputs = fwd + bwd (tutorial: outputs[:,:,:H] + outputs[:,:,H:]);
    # stored bf16 so the attention matmuls take bf16 operands.
    enc_ref[...] = (fwd_ref[...] + bwd_ref[...]).astype(jnp.bfloat16)
    # decoder_hidden = encoder_hidden[:n_layers] -> forward-direction final h.
    h_ref[...] = h_f
    tok_ref[...] = jnp.full((1, 1), SOS_TOKEN, jnp.int32)
    tokens_ref[...] = jnp.zeros((1, L), jnp.int32)
    scores_ref[...] = jnp.zeros((1, L), jnp.float32)

    # hoisted iotas (JAX does not CSE broadcast_in_dim inside the loop)
    vocab_iota = lax.broadcasted_iota(jnp.int32, (1, V), 1)
    lane_iota = lax.broadcasted_iota(jnp.int32, (1, L), 1)

    # ----------------------- greedy decode loop ------------------------------
    def decode_step(step, carry):
        # embedding of the previous (data-dependent) token: dynamic row load
        tok = tok_ref[0, 0]                                  # scalar int32
        x = emb_tbl_ref[tok]                                 # (1, H) bf16

        # 1-layer GRU: rnn_output == new hidden
        h_new = gru_cell(x, h_ref[...], dwih_ref[...], dwhh_ref[...],
                         dbih_ref[...], dbhh_ref[...])       # (1, H) f32
        rnn_bf = h_new.astype(jnp.bfloat16)

        # Luong "dot" attention over encoder outputs
        enc = enc_ref[...]                                   # (T, H) bf16
        energies = lax.dot_general(rnn_bf, enc, (((1,), (1,)), ((), ())),
                                   preferred_element_type=jnp.float32)  # (1,T)
        e = jnp.exp(energies - jnp.max(energies, axis=1, keepdims=True))
        attn = e * pl.reciprocal(jnp.sum(e, axis=1, keepdims=True),
                                 approx=True)                # (1, T)
        context = jnp.dot(attn.astype(jnp.bfloat16), enc,
                          preferred_element_type=jnp.float32)  # (1, H)

        # concat layer: tanh(W_concat @ [rnn_out ; context] + b)
        concat_out = jnp.tanh(
            jnp.dot(rnn_bf, wc_r_ref[...], preferred_element_type=jnp.float32)
            + jnp.dot(context.astype(jnp.bfloat16), wc_c_ref[...],
                      preferred_element_type=jnp.float32)
            + bc_ref[...])                                   # (1, H)

        # output projection (lane-dense (1,V) logits); greedy max/argmax taken
        # directly from the logits instead of materializing the full softmax.
        logits = jnp.dot(concat_out.astype(jnp.bfloat16), wout_ref[...],
                         preferred_element_type=jnp.float32) + bout_ref[...]
        max_logit = jnp.max(logits, axis=1, keepdims=True)   # (1, 1)
        # first-argmax -> same tie-breaking as torch.max(dim=1)
        new_tok = jnp.min(jnp.where(logits == max_logit, vocab_iota, V),
                          axis=1, keepdims=True)             # (1, 1) int32
        # max softmax prob = exp(max - logsumexp) = 1 / sum(exp(logits - max))
        score = 1.0 / jnp.sum(jnp.exp(logits - max_logit),
                              axis=1, keepdims=True)         # (1, 1) f32

        # all_tokens[step] = token ; all_scores[step] = score
        sel = lane_iota == step
        tokens_ref[...] = jnp.where(sel, new_tok, tokens_ref[...])
        scores_ref[...] = jnp.where(sel, score, scores_ref[...])

        # carry state to the next step
        h_ref[...] = h_new
        tok_ref[...] = new_tok
        return carry

    lax.fori_loop(0, L, decode_step, 0)


# ----------------------------------------------------------------------------
# Wrappers
# ----------------------------------------------------------------------------
def _vmem_spec(shape):
    nd = len(shape)
    return pl.BlockSpec(shape, lambda *_: (0,) * nd)


def _pack_gru(w_ih, w_hh, b_ih, b_hh, gs):
    """torch GRU params (w:(3H,H) rows=[r;z;n], b:(3H,)) -> fused, lane-padded
    kernel layout: weights (H, 3*gs) bf16, biases (1, 3*gs) f32."""
    hh = w_ih.shape[1]

    def pack_w(w):
        out = jnp.zeros((hh, 3 * gs), jnp.float32)
        for g in range(3):
            out = out.at[:, g * gs:g * gs + hh].set(w[g * hh:(g + 1) * hh, :].T)
        return out.astype(jnp.bfloat16)

    def pack_b(b):
        out = jnp.zeros((1, 3 * gs), jnp.float32)
        for g in range(3):
            out = out.at[:, g * gs:g * gs + hh].set(b[g * hh:(g + 1) * hh][None, :])
        return out

    return pack_w(w_ih), pack_w(w_hh), pack_b(b_ih), pack_b(b_hh)


def run_seq2seq_greedy(p, input_seq, max_length):
    V, H = p["embedding"].shape
    T = input_seq.shape[0]
    L = max_length
    gs = _round_up(H, LANE)

    # --- weight re-layout: bf16 matmul operands, fused gates, lane-dense out
    emb_bf = p["embedding"].astype(jnp.bfloat16)              # (V, H)
    emb_tbl = emb_bf[:, None, :]                              # (V, 1, H)
    emb_seq = jnp.take(emb_bf, input_seq[:, 0], axis=0)       # (T, H)

    enc_f = _pack_gru(p["enc_wih_f"], p["enc_whh_f"],
                      p["enc_bih_f"], p["enc_bhh_f"], gs)
    enc_b = _pack_gru(p["enc_wih_b"], p["enc_whh_b"],
                      p["enc_bih_b"], p["enc_bhh_b"], gs)
    dec = _pack_gru(p["dec_wih"], p["dec_whh"], p["dec_bih"], p["dec_bhh"], gs)

    wc = p["w_concat"]                                        # (H, 2H)
    wc_r = wc[:, :H].T.astype(jnp.bfloat16)                   # (H, H)
    wc_c = wc[:, H:].T.astype(jnp.bfloat16)                   # (H, H)
    bc = p["b_concat"][None, :].astype(jnp.float32)           # (1, H)
    wout = p["w_out"].T.astype(jnp.bfloat16)                  # (H, V)
    bout = p["b_out"][None, :].astype(jnp.float32)            # (1, V)

    inputs = (emb_seq, emb_tbl, *enc_f, *enc_b, *dec, wc_r, wc_c, bc, wout, bout)

    # NOTE: at realistic sizes (V~8k, H~500) keep embedding / w_out bf16 (done)
    # and consider memory_space=pl.ANY + manual row DMA to stay inside v7x's
    # 64 MiB VMEM; at these toy sizes everything comfortably fits.
    tokens2d, scores2d = pl.pallas_call(
        seq2seq_greedy_kernel,
        out_shape=(jax.ShapeDtypeStruct((1, L), jnp.int32),
                   jax.ShapeDtypeStruct((1, L), jnp.float32)),
        grid=(1,),
        in_specs=[_vmem_spec(x.shape) for x in inputs],
        out_specs=(_vmem_spec((1, L)), _vmem_spec((1, L))),
        scratch_shapes=[pltpu.VMEM((T, H), jnp.float32),      # fwd hidden states
                        pltpu.VMEM((T, H), jnp.float32),      # bwd hidden states
                        pltpu.VMEM((T, H), jnp.bfloat16),     # encoder_outputs
                        pltpu.VMEM((1, H), jnp.float32),      # decoder hidden
                        pltpu.VMEM((1, 1), jnp.int32)],       # current token
        compiler_params=pltpu.CompilerParams(
            dimension_semantics=("arbitrary",)),
    )(*inputs)
    return tokens2d[0], scores2d[0]


@functools.partial(jax.jit, static_argnames=("max_length",))
def greedy_search_decoder(params, input_seq, input_length, max_length):
    # TODO(synk): pack_padded_sequence not modeled; batch=1 with
    # input_length == seq_len so packing is a no-op.
    del input_length
    return run_seq2seq_greedy(params, input_seq, max_length)


# ----------------------------------------------------------------------------
# Deterministic synthetic parameters (torch-layout shapes: EncoderRNN /
# LuongAttnDecoderRNN with n_layers=1, attn='dot').
# ----------------------------------------------------------------------------
def init_params(key, vocab, hidden):
    names_shapes = [
        ("embedding", (vocab, hidden)),
        ("enc_wih_f", (3 * hidden, hidden)), ("enc_whh_f", (3 * hidden, hidden)),
        ("enc_bih_f", (3 * hidden,)), ("enc_bhh_f", (3 * hidden,)),
        ("enc_wih_b", (3 * hidden, hidden)), ("enc_whh_b", (3 * hidden, hidden)),
        ("enc_bih_b", (3 * hidden,)), ("enc_bhh_b", (3 * hidden,)),
        ("dec_wih", (3 * hidden, hidden)), ("dec_whh", (3 * hidden, hidden)),
        ("dec_bih", (3 * hidden,)), ("dec_bhh", (3 * hidden,)),
        ("w_concat", (hidden, 2 * hidden)), ("b_concat", (hidden,)),
        ("w_out", (vocab, hidden)), ("b_out", (vocab,)),
    ]
    params = {}
    scale = 1.0 / jnp.sqrt(jnp.float32(hidden))
    for i, (name, shape) in enumerate(names_shapes):
        k = jax.random.fold_in(key, i)
        params[name] = jax.random.normal(k, shape, jnp.float32) * scale
    return params


if __name__ == "__main__":
    VOCAB, HIDDEN, SEQ, MAX_LEN = 64, 32, 8, 8

    key = jax.random.PRNGKey(0)
    params = init_params(key, VOCAB, HIDDEN)

    k_in = jax.random.fold_in(key, 12345)
    input_seq = jax.random.randint(k_in, (SEQ, 1), 0, VOCAB, dtype=jnp.int32)
    input_length = jnp.array([SEQ], dtype=jnp.int32)

    all_tokens, all_scores = greedy_search_decoder(
        params, input_seq, input_length, MAX_LEN)
    jax.block_until_ready((all_tokens, all_scores))

    assert all_tokens.shape == (MAX_LEN,) and all_tokens.dtype == jnp.int32
    assert all_scores.shape == (MAX_LEN,) and all_scores.dtype == jnp.float32
    print("KERNEL_OK")
</pallas_src>

<mosaic_0001>
module attributes {stable_mosaic.version = 11 : i64} {
  func.func @seq2seq_greedy_kernel(%arg0: i32, %arg1: memref<8x32xbf16, #tpu.memory_space<vmem>>, %arg2: memref<64x1x32xbf16, #tpu.memory_space<vmem>>, %arg3: memref<32x384xbf16, #tpu.memory_space<vmem>>, %arg4: memref<32x384xbf16, #tpu.memory_space<vmem>>, %arg5: memref<1x384xf32, #tpu.memory_space<vmem>>, %arg6: memref<1x384xf32, #tpu.memory_space<vmem>>, %arg7: memref<32x384xbf16, #tpu.memory_space<vmem>>, %arg8: memref<32x384xbf16, #tpu.memory_space<vmem>>, %arg9: memref<1x384xf32, #tpu.memory_space<vmem>>, %arg10: memref<1x384xf32, #tpu.memory_space<vmem>>, %arg11: memref<32x384xbf16, #tpu.memory_space<vmem>>, %arg12: memref<32x384xbf16, #tpu.memory_space<vmem>>, %arg13: memref<1x384xf32, #tpu.memory_space<vmem>>, %arg14: memref<1x384xf32, #tpu.memory_space<vmem>>, %arg15: memref<32x32xbf16, #tpu.memory_space<vmem>>, %arg16: memref<32x32xbf16, #tpu.memory_space<vmem>>, %arg17: memref<1x32xf32, #tpu.memory_space<vmem>>, %arg18: memref<32x64xbf16, #tpu.memory_space<vmem>>, %arg19: memref<1x64xf32, #tpu.memory_space<vmem>>, %arg20: memref<1x8xi32, #tpu.memory_space<vmem>>, %arg21: memref<1x8xf32, #tpu.memory_space<vmem>>, %arg22: memref<8x32xf32, #tpu.memory_space<vmem>>, %arg23: memref<8x32xf32, #tpu.memory_space<vmem>>, %arg24: memref<8x32xbf16, #tpu.memory_space<vmem>>, %arg25: memref<1x32xf32, #tpu.memory_space<vmem>>, %arg26: memref<1x1xi32, #tpu.memory_space<vmem>>) attributes {dimension_semantics = [#tpu.dimension_semantics<arbitrary>], iteration_bounds = array<i64: 1>, scalar_prefetch = 0 : i64, scratch_operands = 5 : i64, tpu.core_type = #tpu.core_type<tc>, window_params = [{pipeline_mode = #tpu.pipeline_mode<synchronous>, transform_indices = @transform_0, window_bounds = array<i64: 8, 32>}, {pipeline_mode = #tpu.pipeline_mode<synchronous>, transform_indices = @transform_1, window_bounds = array<i64: 64, 1, 32>}, {pipeline_mode = #tpu.pipeline_mode<synchronous>, transform_indices = @transform_2, window_bounds = array<i64: 32, 384>}, {pipeline_mode = #tpu.pipeline_mode<synchronous>, transform_indices = @transform_3, window_bounds = array<i64: 32, 384>}, {pipeline_mode = #tpu.pipeline_mode<synchronous>, transform_indices = @transform_4, window_bounds = array<i64: 1, 384>}, {pipeline_mode = #tpu.pipeline_mode<synchronous>, transform_indices = @transform_5, window_bounds = array<i64: 1, 384>}, {pipeline_mode = #tpu.pipeline_mode<synchronous>, transform_indices = @transform_6, window_bounds = array<i64: 32, 384>}, {pipeline_mode = #tpu.pipeline_mode<synchronous>, transform_indices = @transform_7, window_bounds = array<i64: 32, 384>}, {pipeline_mode = #tpu.pipeline_mode<synchronous>, transform_indices = @transform_8, window_bounds = array<i64: 1, 384>}, {pipeline_mode = #tpu.pipeline_mode<synchronous>, transform_indices = @transform_9, window_bounds = array<i64: 1, 384>}, {pipeline_mode = #tpu.pipeline_mode<synchronous>, transform_indices = @transform_10, window_bounds = array<i64: 32, 384>}, {pipeline_mode = #tpu.pipeline_mode<synchronous>, transform_indices = @transform_11, window_bounds = array<i64: 32, 384>}, {pipeline_mode = #tpu.pipeline_mode<synchronous>, transform_indices = @transform_12, window_bounds = array<i64: 1, 384>}, {pipeline_mode = #tpu.pipeline_mode<synchronous>, transform_indices = @transform_13, window_bounds = array<i64: 1, 384>}, {pipeline_mode = #tpu.pipeline_mode<synchronous>, transform_indices = @transform_14, window_bounds = array<i64: 32, 32>}, {pipeline_mode = #tpu.pipeline_mode<synchronous>, transform_indices = @transform_15, window_bounds = array<i64: 32, 32>}, {pipeline_mode = #tpu.pipeline_mode<synchronous>, transform_indices = @transform_16, window_bounds = array<i64: 1, 32>}, {pipeline_mode = #tpu.pipeline_mode<synchronous>, transform_indices = @transform_17, window_bounds = array<i64: 32, 64>}, {pipeline_mode = #tpu.pipeline_mode<synchronous>, transform_indices = @transform_18, window_bounds = array<i64: 1, 64>}, {pipeline_mode = #tpu.pipeline_mode<synchronous>, transform_indices = @transform_19, window_bounds = array<i64: 1, 8>}, {pipeline_mode = #tpu.pipeline_mode<synchronous>, transform_indices = @transform_20, window_bounds = array<i64: 1, 8>}]} {
    %c0 = arith.constant 0 : index
    %c0_0 = arith.constant 0 : index
    %0 = vector.load %arg3[%c0, %c0_0] : memref<32x384xbf16, #tpu.memory_space<vmem>>, vector<32x384xbf16>
    %c0_1 = arith.constant 0 : index
    %c0_2 = arith.constant 0 : index
    %1 = vector.load %arg4[%c0_1, %c0_2] : memref<32x384xbf16, #tpu.memory_space<vmem>>, vector<32x384xbf16>
    %c0_3 = arith.constant 0 : index
    %c0_4 = arith.constant 0 : index
    %2 = vector.load %arg5[%c0_3, %c0_4] : memref<1x384xf32, #tpu.memory_space<vmem>>, vector<1x384xf32>
    %c0_5 = arith.constant 0 : index
    %c0_6 = arith.constant 0 : index
    %3 = vector.load %arg6[%c0_5, %c0_6] : memref<1x384xf32, #tpu.memory_space<vmem>>, vector<1x384xf32>
    %c0_7 = arith.constant 0 : index
    %c0_8 = arith.constant 0 : index
    %4 = vector.load %arg7[%c0_7, %c0_8] : memref<32x384xbf16, #tpu.memory_space<vmem>>, vector<32x384xbf16>
    %c0_9 = arith.constant 0 : index
    %c0_10 = arith.constant 0 : index
    %5 = vector.load %arg8[%c0_9, %c0_10] : memref<32x384xbf16, #tpu.memory_space<vmem>>, vector<32x384xbf16>
    %c0_11 = arith.constant 0 : index
    %c0_12 = arith.constant 0 : index
    %6 = vector.load %arg9[%c0_11, %c0_12] : memref<1x384xf32, #tpu.memory_space<vmem>>, vector<1x384xf32>
    %c0_13 = arith.constant 0 : index
    %c0_14 = arith.constant 0 : index
    %7 = vector.load %arg10[%c0_13, %c0_14] : memref<1x384xf32, #tpu.memory_space<vmem>>, vector<1x384xf32>
    %cst = arith.constant 0.000000e+00 : f32
    %8 = vector.broadcast %cst : f32 to vector<1x32xf32>
    %cst_15 = arith.constant 0.000000e+00 : f32
    %9 = vector.broadcast %cst_15 : f32 to vector<1x32xf32>
    %c0_16 = arith.constant 0 : index
    %c0_17 = arith.constant 0 : index
    %10 = vector.load %arg1[%c0_16, %c0_17] : memref<8x32xbf16, #tpu.memory_space<vmem>>, vector<1x32xbf16>
    %c7 = arith.constant 7 : index
    %c0_18 = arith.constant 0 : index
    %11 = vector.load %arg1[%c7, %c0_18] : memref<8x32xbf16, #tpu.memory_space<vmem>>, vector<1x32xbf16>
    %cst_19 = arith.constant dense<0.000000e+00> : vector<1x384xf32>
    %12 = tpu.matmul %10, %0, %cst_19 {dimension_numbers = #tpu.dot_dimension_numbers<[1], [0], [0], [1], [0, 0, 1, 1], [], []>} : vector<1x32xbf16>, vector<32x384xbf16>, vector<1x384xf32> -> vector<1x384xf32>
    %13 = arith.addf %12, %2 : vector<1x384xf32>
    %14 = arith.truncf %8 : vector<1x32xf32> to vector<1x32xbf16>
    %cst_20 = arith.constant dense<0.000000e+00> : vector<1x384xf32>
    %15 = tpu.matmul %14, %1, %cst_20 {dimension_numbers = #tpu.dot_dimension_numbers<[1], [0], [0], [1], [0, 0, 1, 1], [], []>} : vector<1x32xbf16>, vector<32x384xbf16>, vector<1x384xf32> -> vector<1x384xf32>
    %16 = arith.addf %15, %3 : vector<1x384xf32>
    %17 = vector.extract_strided_slice %13 {offsets = [0, 0], sizes = [1, 32], strides = [1, 1]} : vector<1x384xf32> to vector<1x32xf32>
    %18 = vector.extract_strided_slice %16 {offsets = [0, 0], sizes = [1, 32], strides = [1, 1]} : vector<1x384xf32> to vector<1x32xf32>
    %19 = arith.addf %17, %18 : vector<1x32xf32>
    %20 = arith.negf %19 : vector<1x32xf32>
    %21 = math.exp %20 : vector<1x32xf32>
    %cst_21 = arith.constant 1.000000e+00 : f32
    %22 = vector.broadcast %cst_21 : f32 to vector<1x32xf32>
    %23 = arith.addf %22, %21 : vector<1x32xf32>
    %24 = arith.divf %22, %23 : vector<1x32xf32>
    %25 = vector.extract_strided_slice %13 {offsets = [0, 128], sizes = [1, 32], strides = [1, 1]} : vector<1x384xf32> to vector<1x32xf32>
    %26 = vector.extract_strided_slice %16 {offsets = [0, 128], sizes = [1, 32], strides = [1, 1]} : vector<1x384xf32> to vector<1x32xf32>
    %27 = arith.addf %25, %26 : vector<1x32xf32>
    %28 = arith.negf %27 : vector<1x32xf32>
    %29 = math.exp %28 : vector<1x32xf32>
    %cst_22 = arith.constant 1.000000e+00 : f32
    %30 = vector.broadcast %cst_22 : f32 to vector<1x32xf32>
    %31 = arith.addf %30, %29 : vector<1x32xf32>
    %32 = arith.divf %30, %31 : vector<1x32xf32>
    %33 = vector.extract_strided_slice %13 {offsets = [0, 256], sizes = [1, 32], strides = [1, 1]} : vector<1x384xf32> to vector<1x32xf32>
    %34 = vector.extract_strided_slice %16 {offsets = [0, 256], sizes = [1, 32], strides = [1, 1]} : vector<1x384xf32> to vector<1x32xf32>
    %35 = arith.mulf %24, %34 : vector<1x32xf32>
    %36 = arith.addf %33, %35 : vector<1x32xf32>
    %37 = math.tanh %36 : vector<1x32xf32>
    %cst_23 = arith.constant 1.000000e+00 : f32
    %38 = vector.broadcast %cst_23 : f32 to vector<1x32xf32>
    %39 = arith.subf %38, %32 : vector<1x32xf32>
    %40 = arith.mulf %39, %37 : vector<1x32xf32>
    %41 = arith.mulf %32, %8 : vector<1x32xf32>
    %42 = arith.addf %40, %41 : vector<1x32xf32>
    %cst_24 = arith.constant dense<0.000000e+00> : vector<1x384xf32>
    %43 = tpu.matmul %11, %4, %cst_24 {dimension_numbers = #tpu.dot_dimension_numbers<[1], [0], [0], [1], [0, 0, 1, 1], [], []>} : vector<1x32xbf16>, vector<32x384xbf16>, vector<1x384xf32> -> vector<1x384xf32>
    %44 = arith.addf %43, %6 : vector<1x384xf32>
    %45 = arith.truncf %9 : vector<1x32xf32> to vector<1x32xbf16>
    %cst_25 = arith.constant dense<0.000000e+00> : vector<1x384xf32>
    %46 = tpu.matmul %45, %5, %cst_25 {dimension_numbers = #tpu.dot_dimension_numbers<[1], [0], [0], [1], [0, 0, 1, 1], [], []>} : vector<1x32xbf16>, vector<32x384xbf16>, vector<1x384xf32> -> vector<1x384xf32>
    %47 = arith.addf %46, %7 : vector<1x384xf32>
    %48 = vector.extract_strided_slice %44 {offsets = [0, 0], sizes = [1, 32], strides = [1, 1]} : vector<1x384xf32> to vector<1x32xf32>
    %49 = vector.extract_strided_slice %47 {offsets = [0, 0], sizes = [1, 32], strides = [1, 1]} : vector<1x384xf32> to vector<1x32xf32>
    %50 = arith.addf %48, %49 : vector<1x32xf32>
    %51 = arith.negf %50 : vector<1x32xf32>
    %52 = math.exp %51 : vector<1x32xf32>
    %cst_26 = arith.constant 1.000000e+00 : f32
    %53 = vector.broadcast %cst_26 : f32 to vector<1x32xf32>
    %54 = arith.addf %53, %52 : vector<1x32xf32>
    %55 = arith.divf %53, %54 : vector<1x32xf32>
    %56 = vector.extract_strided_slice %44 {offsets = [0, 128], sizes = [1, 32], strides = [1, 1]} : vector<1x384xf32> to vector<1x32xf32>
    %57 = vector.extract_strided_slice %47 {offsets = [0, 128], sizes = [1, 32], strides = [1, 1]} : vector<1x384xf32> to vector<1x32xf32>
    %58 = arith.addf %56, %57 : vector<1x32xf32>
    %59 = arith.negf %58 : vector<1x32xf32>
    %60 = math.exp %59 : vector<1x32xf32>
    %cst_27 = arith.constant 1.000000e+00 : f32
    %61 = vector.broadcast %cst_27 : f32 to vector<1x32xf32>
    %62 = arith.addf %61, %60 : vector<1x32xf32>
    %63 = arith.divf %61, %62 : vector<1x32xf32>
    %64 = vector.extract_strided_slice %44 {offsets = [0, 256], sizes = [1, 32], strides = [1, 1]} : vector<1x384xf32> to vector<1x32xf32>
    %65 = vector.extract_strided_slice %47 {offsets = [0, 256], sizes = [1, 32], strides = [1, 1]} : vector<1x384xf32> to vector<1x32xf32>
    %66 = arith.mulf %55, %65 : vector<1x32xf32>
    %67 = arith.addf %64, %66 : vector<1x32xf32>
    %68 = math.tanh %67 : vector<1x32xf32>
    %cst_28 = arith.constant 1.000000e+00 : f32
    %69 = vector.broadcast %cst_28 : f32 to vector<1x32xf32>
    %70 = arith.subf %69, %63 : vector<1x32xf32>
    %71 = arith.mulf %70, %68 : vector<1x32xf32>
    %72 = arith.mulf %63, %9 : vector<1x32xf32>
    %73 = arith.addf %71, %72 : vector<1x32xf32>
    %c0_29 = arith.constant 0 : index
    %c0_30 = arith.constant 0 : index
    %74 = vector.load %arg22[%c0_29, %c0_30] : memref<8x32xf32, #tpu.memory_space<vmem>>, vector<1x32xf32>
    tpu.vector_store %arg22[%c0_29, %c0_30], %42 {strides = array<i32>} : memref<8x32xf32, #tpu.memory_space<vmem>>, vector<1x32xf32>,
    %c7_31 = arith.constant 7 : index
    %c0_32 = arith.constant 0 : index
    %75 = vector.load %arg23[%c7_31, %c0_32] : memref<8x32xf32, #tpu.memory_space<vmem>>, vector<1x32xf32>
    tpu.vector_store %arg23[%c7_31, %c0_32], %73 {strides = array<i32>} : memref<8x32xf32, #tpu.memory_space<vmem>>, vector<1x32xf32>,
    %c1 = arith.constant 1 : index
    %c0_33 = arith.constant 0 : index
    %76 = vector.load %arg1[%c1, %c0_33] : memref<8x32xbf16, #tpu.memory_space<vmem>>, vector<1x32xbf16>
    %c6 = arith.constant 6 : index
    %c0_34 = arith.constant 0 : index
    %77 = vector.load %arg1[%c6, %c0_34] : memref<8x32xbf16, #tpu.memory_space<vmem>>, vector<1x32xbf16>
    %cst_35 = arith.constant dense<0.000000e+00> : vector<1x384xf32>
    %78 = tpu.matmul %76, %0, %cst_35 {dimension_numbers = #tpu.dot_dimension_numbers<[1], [0], [0], [1], [0, 0, 1, 1], [], []>} : vector<1x32xbf16>, vector<32x384xbf16>, vector<1x384xf32> -> vector<1x384xf32>
    %79 = arith.addf %78, %2 : vector<1x384xf32>
    %80 = arith.truncf %42 : vector<1x32xf32> to vector<1x32xbf16>
    %cst_36 = arith.constant dense<0.000000e+00> : vector<1x384xf32>
    %81 = tpu.matmul %80, %1, %cst_36 {dimension_numbers = #tpu.dot_dimension_numbers<[1], [0], [0], [1], [0, 0, 1, 1], [], []>} : vector<1x32xbf16>, vector<32x384xbf16>, vector<1x384xf32> -> vector<1x384xf32>
    %82 = arith.addf %81, %3 : vector<1x384xf32>
    %83 = vector.extract_strided_slice %79 {offsets = [0, 0], sizes = [1, 32], strides = [1, 1]} : vector<1x384xf32> to vector<1x32xf32>
    %84 = vector.extract_strided_slice %82 {offsets = [0, 0], sizes = [1, 32], strides = [1, 1]} : vector<1x384xf32> to vector<1x32xf32>
    %85 = arith.addf %83, %84 : vector<1x32xf32>
    %86 = arith.negf %85 : vector<1x32xf32>
    %87 = math.exp %86 : vector<1x32xf32>
    %cst_37 = arith.constant 1.000000e+00 : f32
    %88 = vector.broadcast %cst_37 : f32 to vector<1x32xf32>
    %89 = arith.addf %88, %87 : vector<1x32xf32>
    %90 = arith.divf %88, %89 : vector<1x32xf32>
    %91 = vector.extract_strided_slice %79 {offsets = [0, 128], sizes = [1, 32], strides = [1, 1]} : vector<1x384xf32> to vector<1x32xf32>
    %92 = vector.extract_strided_slice %82 {offsets = [0, 128], sizes = [1, 32], strides = [1, 1]} : vector<1x384xf32> to vector<1x32xf32>
    %93 = arith.addf %91, %92 : vector<1x32xf32>
    %94 = arith.negf %93 : vector<1x32xf32>
    %95 = math.exp %94 : vector<1x32xf32>
    %cst_38 = arith.constant 1.000000e+00 : f32
    %96 = vector.broadcast %cst_38 : f32 to vector<1x32xf32>
    %97 = arith.addf %96, %95 : vector<1x32xf32>
    %98 = arith.divf %96, %97 : vector<1x32xf32>
    %99 = vector.extract_strided_slice %79 {offsets = [0, 256], sizes = [1, 32], strides = [1, 1]} : vector<1x384xf32> to vector<1x32xf32>
    %100 = vector.extract_strided_slice %82 {offsets = [0, 256], sizes = [1, 32], strides = [1, 1]} : vector<1x384xf32> to vector<1x32xf32>
    %101 = arith.mulf %90, %100 : vector<1x32xf32>
    %102 = arith.addf %99, %101 : vector<1x32xf32>
    %103 = math.tanh %102 : vector<1x32xf32>
    %cst_39 = arith.constant 1.000000e+00 : f32
    %104 = vector.broadcast %cst_39 : f32 to vector<1x32xf32>
    %105 = arith.subf %104, %98 : vector<1x32xf32>
    %106 = arith.mulf %105, %103 : vector<1x32xf32>
    %107 = arith.mulf %98, %42 : vector<1x32xf32>
    %108 = arith.addf %106, %107 : vector<1x32xf32>
    %cst_40 = arith.constant dense<0.000000e+00> : vector<1x384xf32>
    %109 = tpu.matmul %77, %4, %cst_40 {dimension_numbers = #tpu.dot_dimension_numbers<[1], [0], [0], [1], [0, 0, 1, 1], [], []>} : vector<1x32xbf16>, vector<32x384xbf16>, vector<1x384xf32> -> vector<1x384xf32>
    %110 = arith.addf %109, %6 : vector<1x384xf32>
    %111 = arith.truncf %73 : vector<1x32xf32> to vector<1x32xbf16>
    %cst_41 = arith.constant dense<0.000000e+00> : vector<1x384xf32>
    %112 = tpu.matmul %111, %5, %cst_41 {dimension_numbers = #tpu.dot_dimension_numbers<[1], [0], [0], [1], [0, 0, 1, 1], [], []>} : vector<1x32xbf16>, vector<32x384xbf16>, vector<1x384xf32> -> vector<1x384xf32>
    %113 = arith.addf %112, %7 : vector<1x384xf32>
    %114 = vector.extract_strided_slice %110 {offsets = [0, 0], sizes = [1, 32], strides = [1, 1]} : vector<1x384xf32> to vector<1x32xf32>
    %115 = vector.extract_strided_slice %113 {offsets = [0, 0], sizes = [1, 32], strides = [1, 1]} : vector<1x384xf32> to vector<1x32xf32>
    %116 = arith.addf %114, %115 : vector<1x32xf32>
    %117 = arith.negf %116 : vector<1x32xf32>
    %118 = math.exp %117 : vector<1x32xf32>
    %cst_42 = arith.constant 1.000000e+00 : f32
    %119 = vector.broadcast %cst_42 : f32 to vector<1x32xf32>
    %120 = arith.addf %119, %118 : vector<1x32xf32>
    %121 = arith.divf %119, %120 : vector<1x32xf32>
    %122 = vector.extract_strided_slice %110 {offsets = [0, 128], sizes = [1, 32], strides = [1, 1]} : vector<1x384xf32> to vector<1x32xf32>
    %123 = vector.extract_strided_slice %113 {offsets = [0, 128], sizes = [1, 32], strides = [1, 1]} : vector<1x384xf32> to vector<1x32xf32>
    %124 = arith.addf %122, %123 : vector<1x32xf32>
    %125 = arith.negf %124 : vector<1x32xf32>
    %126 = math.exp %125 : vector<1x32xf32>
    %cst_43 = arith.constant 1.000000e+00 : f32
    %127 = vector.broadcast %cst_43 : f32 to vector<1x32xf32>
    %128 = arith.addf %127, %126 : vector<1x32xf32>
    %129 = arith.divf %127, %128 : vector<1x32xf32>
    %130 = vector.extract_strided_slice %110 {offsets = [0, 256], sizes = [1, 32], strides = [1, 1]} : vector<1x384xf32> to vector<1x32xf32>
    %131 = vector.extract_strided_slice %113 {offsets = [0, 256], sizes = [1, 32], strides = [1, 1]} : vector<1x384xf32> to vector<1x32xf32>
    %132 = arith.mulf %121, %131 : vector<1x32xf32>
    %133 = arith.addf %130, %132 : vector<1x32xf32>
    %134 = math.tanh %133 : vector<1x32xf32>
    %cst_44 = arith.constant 1.000000e+00 : f32
    %135 = vector.broadcast %cst_44 : f32 to vector<1x32xf32>
    %136 = arith.subf %135, %129 : vector<1x32xf32>
    %137 = arith.mulf %136, %134 : vector<1x32xf32>
    %138 = arith.mulf %129, %73 : vector<1x32xf32>
    %139 = arith.addf %137, %138 : vector<1x32xf32>
    %c1_45 = arith.constant 1 : index
    %c0_46 = arith.constant 0 : index
    %140 = vector.load %arg22[%c1_45, %c0_46] : memref<8x32xf32, #tpu.memory_space<vmem>>, vector<1x32xf32>
    tpu.vector_store %arg22[%c1_45, %c0_46], %108 {strides = array<i32>} : memref<8x32xf32, #tpu.memory_space<vmem>>, vector<1x32xf32>,
    %c6_47 = arith.constant 6 : index
    %c0_48 = arith.constant 0 : index
    %141 = vector.load %arg23[%c6_47, %c0_48] : memref<8x32xf32, #tpu.memory_space<vmem>>, vector<1x32xf32>
    tpu.vector_store %arg23[%c6_47, %c0_48], %139 {strides = array<i32>} : memref<8x32xf32, #tpu.memory_space<vmem>>, vector<1x32xf32>,
    %c2 = arith.constant 2 : index
    %c0_49 = arith.constant 0 : index
    %142 = vector.load %arg1[%c2, %c0_49] : memref<8x32xbf16, #tpu.memory_space<vmem>>, vector<1x32xbf16>
    %c5 = arith.constant 5 : index
    %c0_50 = arith.constant 0 : index
    %143 = vector.load %arg1[%c5, %c0_50] : memref<8x32xbf16, #tpu.memory_space<vmem>>, vector<1x32xbf16>
    %cst_51 = arith.constant dense<0.000000e+00> : vector<1x384xf32>
    %144 = tpu.matmul %142, %0, %cst_51 {dimension_numbers = #tpu.dot_dimension_numbers<[1], [0], [0], [1], [0, 0, 1, 1], [], []>} : vector<1x32xbf16>, vector<32x384xbf16>, vector<1x384xf32> -> vector<1x384xf32>
    %145 = arith.addf %144, %2 : vector<1x384xf32>
    %146 = arith.truncf %108 : vector<1x32xf32> to vector<1x32xbf16>
    %cst_52 = arith.constant dense<0.000000e+00> : vector<1x384xf32>
    %147 = tpu.matmul %146, %1, %cst_52 {dimension_numbers = #tpu.dot_dimension_numbers<[1], [0], [0], [1], [0, 0, 1, 1], [], []>} : vector<1x32xbf16>, vector<32x384xbf16>, vector<1x384xf32> -> vector<1x384xf32>
    %148 = arith.addf %147, %3 : vector<1x384xf32>
    %149 = vector.extract_strided_slice %145 {offsets = [0, 0], sizes = [1, 32], strides = [1, 1]} : vector<1x384xf32> to vector<1x32xf32>
    %150 = vector.extract_strided_slice %148 {offsets = [0, 0], sizes = [1, 32], strides = [1, 1]} : vector<1x384xf32> to vector<1x32xf32>
    %151 = arith.addf %149, %150 : vector<1x32xf32>
    %152 = arith.negf %151 : vector<1x32xf32>
    %153 = math.exp %152 : vector<1x32xf32>
    %cst_53 = arith.constant 1.000000e+00 : f32
    %154 = vector.broadcast %cst_53 : f32 to vector<1x32xf32>
    %155 = arith.addf %154, %153 : vector<1x32xf32>
    %156 = arith.divf %154, %155 : vector<1x32xf32>
    %157 = vector.extract_strided_slice %145 {offsets = [0, 128], sizes = [1, 32], strides = [1, 1]} : vector<1x384xf32> to vector<1x32xf32>
    %158 = vector.extract_strided_slice %148 {offsets = [0, 128], sizes = [1, 32], strides = [1, 1]} : vector<1x384xf32> to vector<1x32xf32>
    %159 = arith.addf %157, %158 : vector<1x32xf32>
    %160 = arith.negf %159 : vector<1x32xf32>
    %161 = math.exp %160 : vector<1x32xf32>
    %cst_54 = arith.constant 1.000000e+00 : f32
    %162 = vector.broadcast %cst_54 : f32 to vector<1x32xf32>
    %163 = arith.addf %162, %161 : vector<1x32xf32>
    %164 = arith.divf %162, %163 : vector<1x32xf32>
    %165 = vector.extract_strided_slice %145 {offsets = [0, 256], sizes = [1, 32], strides = [1, 1]} : vector<1x384xf32> to vector<1x32xf32>
    %166 = vector.extract_strided_slice %148 {offsets = [0, 256], sizes = [1, 32], strides = [1, 1]} : vector<1x384xf32> to vector<1x32xf32>
    %167 = arith.mulf %156, %166 : vector<1x32xf32>
    %168 = arith.addf %165, %167 : vector<1x32xf32>
    %169 = math.tanh %168 : vector<1x32xf32>
    %cst_55 = arith.constant 1.000000e+00 : f32
    %170 = vector.broadcast %cst_55 : f32 to vector<1x32xf32>
    %171 = arith.subf %170, %164 : vector<1x32xf32>
    %172 = arith.mulf %171, %169 : vector<1x32xf32>
    %173 = arith.mulf %164, %108 : vector<1x32xf32>
    %174 = arith.addf %172, %173 : vector<1x32xf32>
    %cst_56 = arith.constant dense<0.000000e+00> : vector<1x384xf32>
    %175 = tpu.matmul %143, %4, %cst_56 {dimension_numbers = #tpu.dot_dimension_numbers<[1], [0], [0], [1], [0, 0, 1, 1], [], []>} : vector<1x32xbf16>, vector<32x384xbf16>, vector<1x384xf32> -> vector<1x384xf32>
    %176 = arith.addf %175, %6 : vector<1x384xf32>
    %177 = arith.truncf %139 : vector<1x32xf32> to vector<1x32xbf16>
    %cst_57 = arith.constant dense<0.000000e+00> : vector<1x384xf32>
    %178 = tpu.matmul %177, %5, %cst_57 {dimension_numbers = #tpu.dot_dimension_numbers<[1], [0], [0], [1], [0, 0, 1, 1], [], []>} : vector<1x32xbf16>, vector<32x384xbf16>, vector<1x384xf32> -> vector<1x384xf32>
    %179 = arith.addf %178, %7 : vector<1x384xf32>
    %180 = vector.extract_strided_slice %176 {offsets = [0, 0], sizes = [1, 32], strides = [1, 1]} : vector<1x384xf32> to vector<1x32xf32>
    %181 = vector.extract_strided_slice %179 {offsets = [0, 0], sizes = [1, 32], strides = [1, 1]} : vector<1x384xf32> to vector<1x32xf32>
    %182 = arith.addf %180, %181 : vector<1x32xf32>
    %183 = arith.negf %182 : vector<1x32xf32>
    %184 = math.exp %183 : vector<1x32xf32>
    %cst_58 = arith.constant 1.000000e+00 : f32
    %185 = vector.broadcast %cst_58 : f32 to vector<1x32xf32>
    %186 = arith.addf %185, %184 : vector<1x32xf32>
    %187 = arith.divf %185, %186 : vector<1x32xf32>
    %188 = vector.extract_strided_slice %176 {offsets = [0, 128], sizes = [1, 32], strides = [1, 1]} : vector<1x384xf32> to vector<1x32xf32>
    %189 = vector.extract_strided_slice %179 {offsets = [0, 128], sizes = [1, 32], strides = [1, 1]} : vector<1x384xf32> to vector<1x32xf32>
    %190 = arith.addf %188, %189 : vector<1x32xf32>
    %191 = arith.negf %190 : vector<1x32xf32>
    %192 = math.exp %191 : vector<1x32xf32>
    %cst_59 = arith.constant 1.000000e+00 : f32
    %193 = vector.broadcast %cst_59 : f32 to vector<1x32xf32>
    %194 = arith.addf %193, %192 : vector<1x32xf32>
    %195 = arith.divf %193, %194 : vector<1x32xf32>
    %196 = vector.extract_strided_slice %176 {offsets = [0, 256], sizes = [1, 32], strides = [1, 1]} : vector<1x384xf32> to vector<1x32xf32>
    %197 = vector.extract_strided_slice %179 {offsets = [0, 256], sizes = [1, 32], strides = [1, 1]} : vector<1x384xf32> to vector<1x32xf32>
    %198 = arith.mulf %187, %197 : vector<1x32xf32>
    %199 = arith.addf %196, %198 : vector<1x32xf32>
    %200 = math.tanh %199 : vector<1x32xf32>
    %cst_60 = arith.constant 1.000000e+00 : f32
    %201 = vector.broadcast %cst_60 : f32 to vector<1x32xf32>
    %202 = arith.subf %201, %195 : vector<1x32xf32>
    %203 = arith.mulf %202, %200 : vector<1x32xf32>
    %204 = arith.mulf %195, %139 : vector<1x32xf32>
    %205 = arith.addf %203, %204 : vector<1x32xf32>
    %c2_61 = arith.constant 2 : index
    %c0_62 = arith.constant 0 : index
    %206 = vector.load %arg22[%c2_61, %c0_62] : memref<8x32xf32, #tpu.memory_space<vmem>>, vector<1x32xf32>
    tpu.vector_store %arg22[%c2_61, %c0_62], %174 {strides = array<i32>} : memref<8x32xf32, #tpu.memory_space<vmem>>, vector<1x32xf32>,
    %c5_63 = arith.constant 5 : index
    %c0_64 = arith.constant 0 : index
    %207 = vector.load %arg23[%c5_63, %c0_64] : memref<8x32xf32, #tpu.memory_space<vmem>>, vector<1x32xf32>
    tpu.vector_store %arg23[%c5_63, %c0_64], %205 {strides = array<i32>} : memref<8x32xf32, #tpu.memory_space<vmem>>, vector<1x32xf32>,
    %c3 = arith.constant 3 : index
    %c0_65 = arith.constant 0 : index
    %208 = vector.load %arg1[%c3, %c0_65] : memref<8x32xbf16, #tpu.memory_space<vmem>>, vector<1x32xbf16>
    %c4 = arith.constant 4 : index
    %c0_66 = arith.constant 0 : index
    %209 = vector.load %arg1[%c4, %c0_66] : memref<8x32xbf16, #tpu.memory_space<vmem>>, vector<1x32xbf16>
    %cst_67 = arith.constant dense<0.000000e+00> : vector<1x384xf32>
    %210 = tpu.matmul %208, %0, %cst_67 {dimension_numbers = #tpu.dot_dimension_numbers<[1], [0], [0], [1], [0, 0, 1, 1], [], []>} : vector<1x32xbf16>, vector<32x384xbf16>, vector<1x384xf32> -> vector<1x384xf32>
    %211 = arith.addf %210, %2 : vector<1x384xf32>
    %212 = arith.truncf %174 : vector<1x32xf32> to vector<1x32xbf16>
    %cst_68 = arith.constant dense<0.000000e+00> : vector<1x384xf32>
    %213 = tpu.matmul %212, %1, %cst_68 {dimension_numbers = #tpu.dot_dimension_numbers<[1], [0], [0], [1], [0, 0, 1, 1], [], []>} : vector<1x32xbf16>, vector<32x384xbf16>, vector<1x384xf32> -> vector<1x384xf32>
    %214 = arith.addf %213, %3 : vector<1x384xf32>
    %215 = vector.extract_strided_slice %211 {offsets = [0, 0], sizes = [1, 32], strides = [1, 1]} : vector<1x384xf32> to vector<1x32xf32>
    %216 = vector.extract_strided_slice %214 {offsets = [0, 0], sizes = [1, 32], strides = [1, 1]} : vector<1x384xf32> to vector<1x32xf32>
    %217 = arith.addf %215, %216 : vector<1x32xf32>
    %218 = arith.negf %217 : vector<1x32xf32>
    %219 = math.exp %218 : vector<1x32xf32>
    %cst_69 = arith.constant 1.000000e+00 : f32
    %220 = vector.broadcast %cst_69 : f32 to vector<1x32xf32>
    %221 = arith.addf %220, %219 : vector<1x32xf32>
    %222 = arith.divf %220, %221 : vector<1x32xf32>
    %223 = vector.extract_strided_slice %211 {offsets = [0, 128], sizes = [1, 32], strides = [1, 1]} : vector<1x384xf32> to vector<1x32xf32>
    %224 = vector.extract_strided_slice %214 {offsets = [0, 128], sizes = [1, 32], strides = [1, 1]} : vector<1x384xf32> to vector<1x32xf32>
    %225 = arith.addf %223, %224 : vector<1x32xf32>
    %226 = arith.negf %225 : vector<1x32xf32>
    %227 = math.exp %226 : vector<1x32xf32>
    %cst_70 = arith.constant 1.000000e+00 : f32
    %228 = vector.broadcast %cst_70 : f32 to vector<1x32xf32>
    %229 = arith.addf %228, %227 : vector<1x32xf32>
    %230 = arith.divf %228, %229 : vector<1x32xf32>
    %231 = vector.extract_strided_slice %211 {offsets = [0, 256], sizes = [1, 32], strides = [1, 1]} : vector<1x384xf32> to vector<1x32xf32>
    %232 = vector.extract_strided_slice %214 {offsets = [0, 256], sizes = [1, 32], strides = [1, 1]} : vector<1x384xf32> to vector<1x32xf32>
    %233 = arith.mulf %222, %232 : vector<1x32xf32>
    %234 = arith.addf %231, %233 : vector<1x32xf32>
    %235 = math.tanh %234 : vector<1x32xf32>
    %cst_71 = arith.constant 1.000000e+00 : f32
    %236 = vector.broadcast %cst_71 : f32 to vector<1x32xf32>
    %237 = arith.subf %236, %230 : vector<1x32xf32>
    %238 = arith.mulf %237, %235 : vector<1x32xf32>
    %239 = arith.mulf %230, %174 : vector<1x32xf32>
    %240 = arith.addf %238, %239 : vector<1x32xf32>
    %cst_72 = arith.constant dense<0.000000e+00> : vector<1x384xf32>
    %241 = tpu.matmul %209, %4, %cst_72 {dimension_numbers = #tpu.dot_dimension_numbers<[1], [0], [0], [1], [0, 0, 1, 1], [], []>} : vector<1x32xbf16>, vector<32x384xbf16>, vector<1x384xf32> -> vector<1x384xf32>
    %242 = arith.addf %241, %6 : vector<1x384xf32>
    %243 = arith.truncf %205 : vector<1x32xf32> to vector<1x32xbf16>
    %cst_73 = arith.constant dense<0.000000e+00> : vector<1x384xf32>
    %244 = tpu.matmul %243, %5, %cst_73 {dimension_numbers = #tpu.dot_dimension_numbers<[1], [0], [0], [1], [0, 0, 1, 1], [], []>} : vector<1x32xbf16>, vector<32x384xbf16>, vector<1x384xf32> -> vector<1x384xf32>
    %245 = arith.addf %244, %7 : vector<1x384xf32>
    %246 = vector.extract_strided_slice %242 {offsets = [0, 0], sizes = [1, 32], strides = [1, 1]} : vector<1x384xf32> to vector<1x32xf32>
    %247 = vector.extract_strided_slice %245 {offsets = [0, 0], sizes = [1, 32], strides = [1, 1]} : vector<1x384xf32> to vector<1x32xf32>
    %248 = arith.addf %246, %247 : vector<1x32xf32>
    %249 = arith.negf %248 : vector<1x32xf32>
    %250 = math.exp %249 : vector<1x32xf32>
    %cst_74 = arith.constant 1.000000e+00 : f32
    %251 = vector.broadcast %cst_74 : f32 to vector<1x32xf32>
    %252 = arith.addf %251, %250 : vector<1x32xf32>
    %253 = arith.divf %251, %252 : vector<1x32xf32>
    %254 = vector.extract_strided_slice %242 {offsets = [0, 128], sizes = [1, 32], strides = [1, 1]} : vector<1x384xf32> to vector<1x32xf32>
    %255 = vector.extract_strided_slice %245 {offsets = [0, 128], sizes = [1, 32], strides = [1, 1]} : vector<1x384xf32> to vector<1x32xf32>
    %256 = arith.addf %254, %255 : vector<1x32xf32>
    %257 = arith.negf %256 : vector<1x32xf32>
    %258 = math.exp %257 : vector<1x32xf32>
    %cst_75 = arith.constant 1.000000e+00 : f32
    %259 = vector.broadcast %cst_75 : f32 to vector<1x32xf32>
    %260 = arith.addf %259, %258 : vector<1x32xf32>
    %261 = arith.divf %259, %260 : vector<1x32xf32>
    %262 = vector.extract_strided_slice %242 {offsets = [0, 256], sizes = [1, 32], strides = [1, 1]} : vector<1x384xf32> to vector<1x32xf32>
    %263 = vector.extract_strided_slice %245 {offsets = [0, 256], sizes = [1, 32], strides = [1, 1]} : vector<1x384xf32> to vector<1x32xf32>
    %264 = arith.mulf %253, %263 : vector<1x32xf32>
    %265 = arith.addf %262, %264 : vector<1x32xf32>
    %266 = math.tanh %265 : vector<1x32xf32>
    %cst_76 = arith.constant 1.000000e+00 : f32
    %267 = vector.broadcast %cst_76 : f32 to vector<1x32xf32>
    %268 = arith.subf %267, %261 : vector<1x32xf32>
    %269 = arith.mulf %268, %266 : vector<1x32xf32>
    %270 = arith.mulf %261, %205 : vector<1x32xf32>
    %271 = arith.addf %269, %270 : vector<1x32xf32>
    %c3_77 = arith.constant 3 : index
    %c0_78 = arith.constant 0 : index
    %272 = vector.load %arg22[%c3_77, %c0_78] : memref<8x32xf32, #tpu.memory_space<vmem>>, vector<1x32xf32>
    tpu.vector_store %arg22[%c3_77, %c0_78], %240 {strides = array<i32>} : memref<8x32xf32, #tpu.memory_space<vmem>>, vector<1x32xf32>,
    %c4_79 = arith.constant 4 : index
    %c0_80 = arith.constant 0 : index
    %273 = vector.load %arg23[%c4_79, %c0_80] : memref<8x32xf32, #tpu.memory_space<vmem>>, vector<1x32xf32>
    tpu.vector_store %arg23[%c4_79, %c0_80], %271 {strides = array<i32>} : memref<8x32xf32, #tpu.memory_space<vmem>>, vector<1x32xf32>,
    %c4_81 = arith.constant 4 : index
    %c0_82 = arith.constant 0 : index
    %274 = vector.load %arg1[%c4_81, %c0_82] : memref<8x32xbf16, #tpu.memory_space<vmem>>, vector<1x32xbf16>
    %c3_83 = arith.constant 3 : index
    %c0_84 = arith.constant 0 : index
    %275 = vector.load %arg1[%c3_83, %c0_84] : memref<8x32xbf16, #tpu.memory_space<vmem>>, vector<1x32xbf16>
    %cst_85 = arith.constant dense<0.000000e+00> : vector<1x384xf32>
    %276 = tpu.matmul %274, %0, %cst_85 {dimension_numbers = #tpu.dot_dimension_numbers<[1], [0], [0], [1], [0, 0, 1, 1], [], []>} : vector<1x32xbf16>, vector<32x384xbf16>, vector<1x384xf32> -> vector<1x384xf32>
    %277 = arith.addf %276, %2 : vector<1x384xf32>
    %278 = arith.truncf %240 : vector<1x32xf32> to vector<1x32xbf16>
    %cst_86 = arith.constant dense<0.000000e+00> : vector<1x384xf32>
    %279 = tpu.matmul %278, %1, %cst_86 {dimension_numbers = #tpu.dot_dimension_numbers<[1], [0], [0], [1], [0, 0, 1, 1], [], []>} : vector<1x32xbf16>, vector<32x384xbf16>, vector<1x384xf32> -> vector<1x384xf32>
    %280 = arith.addf %279, %3 : vector<1x384xf32>
    %281 = vector.extract_strided_slice %277 {offsets = [0, 0], sizes = [1, 32], strides = [1, 1]} : vector<1x384xf32> to vector<1x32xf32>
    %282 = vector.extract_strided_slice %280 {offsets = [0, 0], sizes = [1, 32], strides = [1, 1]} : vector<1x384xf32> to vector<1x32xf32>
    %283 = arith.addf %281, %282 : vector<1x32xf32>
    %284 = arith.negf %283 : vector<1x32xf32>
    %285 = math.exp %284 : vector<1x32xf32>
    %cst_87 = arith.constant 1.000000e+00 : f32
    %286 = vector.broadcast %cst_87 : f32 to vector<1x32xf32>
    %287 = arith.addf %286, %285 : vector<1x32xf32>
    %288 = arith.divf %286, %287 : vector<1x32xf32>
    %289 = vector.extract_strided_slice %277 {offsets = [0, 128], sizes = [1, 32], strides = [1, 1]} : vector<1x384xf32> to vector<1x32xf32>
    %290 = vector.extract_strided_slice %280 {offsets = [0, 128], sizes = [1, 32], strides = [1, 1]} : vector<1x384xf32> to vector<1x32xf32>
    %291 = arith.addf %289, %290 : vector<1x32xf32>
    %292 = arith.negf %291 : vector<1x32xf32>
    %293 = math.exp %292 : vector<1x32xf32>
    %cst_88 = arith.constant 1.000000e+00 : f32
    %294 = vector.broadcast %cst_88 : f32 to vector<1x32xf32>
    %295 = arith.addf %294, %293 : vector<1x32xf32>
    %296 = arith.divf %294, %295 : vector<1x32xf32>
    %297 = vector.extract_strided_slice %277 {offsets = [0, 256], sizes = [1, 32], strides = [1, 1]} : vector<1x384xf32> to vector<1x32xf32>
    %298 = vector.extract_strided_slice %280 {offsets = [0, 256], sizes = [1, 32], strides = [1, 1]} : vector<1x384xf32> to vector<1x32xf32>
    %299 = arith.mulf %288, %298 : vector<1x32xf32>
    %300 = arith.addf %297, %299 : vector<1x32xf32>
    %301 = math.tanh %300 : vector<1x32xf32>
    %cst_89 = arith.constant 1.000000e+00 : f32
    %302 = vector.broadcast %cst_89 : f32 to vector<1x32xf32>
    %303 = arith.subf %302, %296 : vector<1x32xf32>
    %304 = arith.mulf %303, %301 : vector<1x32xf32>
    %305 = arith.mulf %296, %240 : vector<1x32xf32>
    %306 = arith.addf %304, %305 : vector<1x32xf32>
    %cst_90 = arith.constant dense<0.000000e+00> : vector<1x384xf32>
    %307 = tpu.matmul %275, %4, %cst_90 {dimension_numbers = #tpu.dot_dimension_numbers<[1], [0], [0], [1], [0, 0, 1, 1], [], []>} : vector<1x32xbf16>, vector<32x384xbf16>, vector<1x384xf32> -> vector<1x384xf32>
    %308 = arith.addf %307, %6 : vector<1x384xf32>
    %309 = arith.truncf %271 : vector<1x32xf32> to vector<1x32xbf16>
    %cst_91 = arith.constant dense<0.000000e+00> : vector<1x384xf32>
    %310 = tpu.matmul %309, %5, %cst_91 {dimension_numbers = #tpu.dot_dimension_numbers<[1], [0], [0], [1], [0, 0, 1, 1], [], []>} : vector<1x32xbf16>, vector<32x384xbf16>, vector<1x384xf32> -> vector<1x384xf32>
    %311 = arith.addf %310, %7 : vector<1x384xf32>
    %312 = vector.extract_strided_slice %308 {offsets = [0, 0], sizes = [1, 32], strides = [1, 1]} : vector<1x384xf32> to vector<1x32xf32>
    %313 = vector.extract_strided_slice %311 {offsets = [0, 0], sizes = [1, 32], strides = [1, 1]} : vector<1x384xf32> to vector<1x32xf32>
    %314 = arith.addf %312, %313 : vector<1x32xf32>
    %315 = arith.negf %314 : vector<1x32xf32>
    %316 = math.exp %315 : vector<1x32xf32>
    %cst_92 = arith.constant 1.000000e+00 : f32
    %317 = vector.broadcast %cst_92 : f32 to vector<1x32xf32>
    %318 = arith.addf %317, %316 : vector<1x32xf32>
    %319 = arith.divf %317, %318 : vector<1x32xf32>
    %320 = vector.extract_strided_slice %308 {offsets = [0, 128], sizes = [1, 32], strides = [1, 1]} : vector<1x384xf32> to vector<1x32xf32>
    %321 = vector.extract_strided_slice %311 {offsets = [0, 128], sizes = [1, 32], strides = [1, 1]} : vector<1x384xf32> to vector<1x32xf32>
    %322 = arith.addf %320, %321 : vector<1x32xf32>
    %323 = arith.negf %322 : vector<1x32xf32>
    %324 = math.exp %323 : vector<1x32xf32>
    %cst_93 = arith.constant 1.000000e+00 : f32
    %325 = vector.broadcast %cst_93 : f32 to vector<1x32xf32>
    %326 = arith.addf %325, %324 : vector<1x32xf32>
    %327 = arith.divf %325, %326 : vector<1x32xf32>
    %328 = vector.extract_strided_slice %308 {offsets = [0, 256], sizes = [1, 32], strides = [1, 1]} : vector<1x384xf32> to vector<1x32xf32>
    %329 = vector.extract_strided_slice %311 {offsets = [0, 256], sizes = [1, 32], strides = [1, 1]} : vector<1x384xf32> to vector<1x32xf32>
    %330 = arith.mulf %319, %329 : vector<1x32xf32>
    %331 = arith.addf %328, %330 : vector<1x32xf32>
    %332 = math.tanh %331 : vector<1x32xf32>
    %cst_94 = arith.constant 1.000000e+00 : f32
    %333 = vector.broadcast %cst_94 : f32 to vector<1x32xf32>
    %334 = arith.subf %333, %327 : vector<1x32xf32>
    %335 = arith.mulf %334, %332 : vector<1x32xf32>
    %336 = arith.mulf %327, %271 : vector<1x32xf32>
    %337 = arith.addf %335, %336 : vector<1x32xf32>
    %c4_95 = arith.constant 4 : index
    %c0_96 = arith.constant 0 : index
    %338 = vector.load %arg22[%c4_95, %c0_96] : memref<8x32xf32, #tpu.memory_space<vmem>>, vector<1x32xf32>
    tpu.vector_store %arg22[%c4_95, %c0_96], %306 {strides = array<i32>} : memref<8x32xf32, #tpu.memory_space<vmem>>, vector<1x32xf32>,
    %c3_97 = arith.constant 3 : index
    %c0_98 = arith.constant 0 : index
    %339 = vector.load %arg23[%c3_97, %c0_98] : memref<8x32xf32, #tpu.memory_space<vmem>>, vector<1x32xf32>
    tpu.vector_store %arg23[%c3_97, %c0_98], %337 {strides = array<i32>} : memref<8x32xf32, #tpu.memory_space<vmem>>, vector<1x32xf32>,
    %c5_99 = arith.constant 5 : index
    %c0_100 = arith.constant 0 : index
    %340 = vector.load %arg1[%c5_99, %c0_100] : memref<8x32xbf16, #tpu.memory_space<vmem>>, vector<1x32xbf16>
    %c2_101 = arith.constant 2 : index
    %c0_102 = arith.constant 0 : index
    %341 = vector.load %arg1[%c2_101, %c0_102] : memref<8x32xbf16, #tpu.memory_space<vmem>>, vector<1x32xbf16>
    %cst_103 = arith.constant dense<0.000000e+00> : vector<1x384xf32>
    %342 = tpu.matmul %340, %0, %cst_103 {dimension_numbers = #tpu.dot_dimension_numbers<[1], [0], [0], [1], [0, 0, 1, 1], [], []>} : vector<1x32xbf16>, vector<32x384xbf16>, vector<1x384xf32> -> vector<1x384xf32>
    %343 = arith.addf %342, %2 : vector<1x384xf32>
    %344 = arith.truncf %306 : vector<1x32xf32> to vector<1x32xbf16>
    %cst_104 = arith.constant dense<0.000000e+00> : vector<1x384xf32>
    %345 = tpu.matmul %344, %1, %cst_104 {dimension_numbers = #tpu.dot_dimension_numbers<[1], [0], [0], [1], [0, 0, 1, 1], [], []>} : vector<1x32xbf16>, vector<32x384xbf16>, vector<1x384xf32> -> vector<1x384xf32>
    %346 = arith.addf %345, %3 : vector<1x384xf32>
    %347 = vector.extract_strided_slice %343 {offsets = [0, 0], sizes = [1, 32], strides = [1, 1]} : vector<1x384xf32> to vector<1x32xf32>
    %348 = vector.extract_strided_slice %346 {offsets = [0, 0], sizes = [1, 32], strides = [1, 1]} : vector<1x384xf32> to vector<1x32xf32>
    %349 = arith.addf %347, %348 : vector<1x32xf32>
    %350 = arith.negf %349 : vector<1x32xf32>
    %351 = math.exp %350 : vector<1x32xf32>
    %cst_105 = arith.constant 1.000000e+00 : f32
    %352 = vector.broadcast %cst_105 : f32 to vector<1x32xf32>
    %353 = arith.addf %352, %351 : vector<1x32xf32>
    %354 = arith.divf %352, %353 : vector<1x32xf32>
    %355 = vector.extract_strided_slice %343 {offsets = [0, 128], sizes = [1, 32], strides = [1, 1]} : vector<1x384xf32> to vector<1x32xf32>
    %356 = vector.extract_strided_slice %346 {offsets = [0, 128], sizes = [1, 32], strides = [1, 1]} : vector<1x384xf32> to vector<1x32xf32>
    %357 = arith.addf %355, %356 : vector<1x32xf32>
    %358 = arith.negf %357 : vector<1x32xf32>
    %359 = math.exp %358 : vector<1x32xf32>
    %cst_106 = arith.constant 1.000000e+00 : f32
    %360 = vector.broadcast %cst_106 : f32 to vector<1x32xf32>
    %361 = arith.addf %360, %359 : vector<1x32xf32>
    %362 = arith.divf %360, %361 : vector<1x32xf32>
    %363 = vector.extract_strided_slice %343 {offsets = [0, 256], sizes = [1, 32], strides = [1, 1]} : vector<1x384xf32> to vector<1x32xf32>
    %364 = vector.extract_strided_slice %346 {offsets = [0, 256], sizes = [1, 32], strides = [1, 1]} : vector<1x384xf32> to vector<1x32xf32>
    %365 = arith.mulf %354, %364 : vector<1x32xf32>
    %366 = arith.addf %363, %365 : vector<1x32xf32>
    %367 = math.tanh %366 : vector<1x32xf32>
    %cst_107 = arith.constant 1.000000e+00 : f32
    %368 = vector.broadcast %cst_107 : f32 to vector<1x32xf32>
    %369 = arith.subf %368, %362 : vector<1x32xf32>
    %370 = arith.mulf %369, %367 : vector<1x32xf32>
    %371 = arith.mulf %362, %306 : vector<1x32xf32>
    %372 = arith.addf %370, %371 : vector<1x32xf32>
    %cst_108 = arith.constant dense<0.000000e+00> : vector<1x384xf32>
    %373 = tpu.matmul %341, %4, %cst_108 {dimension_numbers = #tpu.dot_dimension_numbers<[1], [0], [0], [1], [0, 0, 1, 1], [], []>} : vector<1x32xbf16>, vector<32x384xbf16>, vector<1x384xf32> -> vector<1x384xf32>
    %374 = arith.addf %373, %6 : vector<1x384xf32>
    %375 = arith.truncf %337 : vector<1x32xf32> to vector<1x32xbf16>
    %cst_109 = arith.constant dense<0.000000e+00> : vector<1x384xf32>
    %376 = tpu.matmul %375, %5, %cst_109 {dimension_numbers = #tpu.dot_dimension_numbers<[1], [0], [0], [1], [0, 0, 1, 1], [], []>} : vector<1x32xbf16>, vector<32x384xbf16>, vector<1x384xf32> -> vector<1x384xf32>
    %377 = arith.addf %376, %7 : vector<1x384xf32>
    %378 = vector.extract_strided_slice %374 {offsets = [0, 0], sizes = [1, 32], strides = [1, 1]} : vector<1x384xf32> to vector<1x32xf32>
    %379 = vector.extract_strided_slice %377 {offsets = [0, 0], sizes = [1, 32], strides = [1, 1]} : vector<1x384xf32> to vector<1x32xf32>
    %380 = arith.addf %378, %379 : vector<1x32xf32>
    %381 = arith.negf %380 : vector<1x32xf32>
    %382 = math.exp %381 : vector<1x32xf32>
    %cst_110 = arith.constant 1.000000e+00 : f32
    %383 = vector.broadcast %cst_110 : f32 to vector<1x32xf32>
    %384 = arith.addf %383, %382 : vector<1x32xf32>
    %385 = arith.divf %383, %384 : vector<1x32xf32>
    %386 = vector.extract_strided_slice %374 {offsets = [0, 128], sizes = [1, 32], strides = [1, 1]} : vector<1x384xf32> to vector<1x32xf32>
    %387 = vector.extract_strided_slice %377 {offsets = [0, 128], sizes = [1, 32], strides = [1, 1]} : vector<1x384xf32> to vector<1x32xf32>
    %388 = arith.addf %386, %387 : vector<1x32xf32>
    %389 = arith.negf %388 : vector<1x32xf32>
    %390 = math.exp %389 : vector<1x32xf32>
    %cst_111 = arith.constant 1.000000e+00 : f32
    %391 = vector.broadcast %cst_111 : f32 to vector<1x32xf32>
    %392 = arith.addf %391, %390 : vector<1x32xf32>
    %393 = arith.divf %391, %392 : vector<1x32xf32>
    %394 = vector.extract_strided_slice %374 {offsets = [0, 256], sizes = [1, 32], strides = [1, 1]} : vector<1x384xf32> to vector<1x32xf32>
    %395 = vector.extract_strided_slice %377 {offsets = [0, 256], sizes = [1, 32], strides = [1, 1]} : vector<1x384xf32> to vector<1x32xf32>
    %396 = arith.mulf %385, %395 : vector<1x32xf32>
    %397 = arith.addf %394, %396 : vector<1x32xf32>
    %398 = math.tanh %397 : vector<1x32xf32>
    %cst_112 = arith.constant 1.000000e+00 : f32
    %399 = vector.broadcast %cst_112 : f32 to vector<1x32xf32>
    %400 = arith.subf %399, %393 : vector<1x32xf32>
    %401 = arith.mulf %400, %398 : vector<1x32xf32>
    %402 = arith.mulf %393, %337 : vector<1x32xf32>
    %403 = arith.addf %401, %402 : vector<1x32xf32>
    %c5_113 = arith.constant 5 : index
    %c0_114 = arith.constant 0 : index
    %404 = vector.load %arg22[%c5_113, %c0_114] : memref<8x32xf32, #tpu.memory_space<vmem>>, vector<1x32xf32>
    tpu.vector_store %arg22[%c5_113, %c0_114], %372 {strides = array<i32>} : memref<8x32xf32, #tpu.memory_space<vmem>>, vector<1x32xf32>,
    %c2_115 = arith.constant 2 : index
    %c0_116 = arith.constant 0 : index
    %405 = vector.load %arg23[%c2_115, %c0_116] : memref<8x32xf32, #tpu.memory_space<vmem>>, vector<1x32xf32>
    tpu.vector_store %arg23[%c2_115, %c0_116], %403 {strides = array<i32>} : memref<8x32xf32, #tpu.memory_space<vmem>>, vector<1x32xf32>,
    %c6_117 = arith.constant 6 : index
    %c0_118 = arith.constant 0 : index
    %406 = vector.load %arg1[%c6_117, %c0_118] : memref<8x32xbf16, #tpu.memory_space<vmem>>, vector<1x32xbf16>
    %c1_119 = arith.constant 1 : index
    %c0_120 = arith.constant 0 : index
    %407 = vector.load %arg1[%c1_119, %c0_120] : memref<8x32xbf16, #tpu.memory_space<vmem>>, vector<1x32xbf16>
    %cst_121 = arith.constant dense<0.000000e+00> : vector<1x384xf32>
    %408 = tpu.matmul %406, %0, %cst_121 {dimension_numbers = #tpu.dot_dimension_numbers<[1], [0], [0], [1], [0, 0, 1, 1], [], []>} : vector<1x32xbf16>, vector<32x384xbf16>, vector<1x384xf32> -> vector<1x384xf32>
    %409 = arith.addf %408, %2 : vector<1x384xf32>
    %410 = arith.truncf %372 : vector<1x32xf32> to vector<1x32xbf16>
    %cst_122 = arith.constant dense<0.000000e+00> : vector<1x384xf32>
    %411 = tpu.matmul %410, %1, %cst_122 {dimension_numbers = #tpu.dot_dimension_numbers<[1], [0], [0], [1], [0, 0, 1, 1], [], []>} : vector<1x32xbf16>, vector<32x384xbf16>, vector<1x384xf32> -> vector<1x384xf32>
    %412 = arith.addf %411, %3 : vector<1x384xf32>
    %413 = vector.extract_strided_slice %409 {offsets = [0, 0], sizes = [1, 32], strides = [1, 1]} : vector<1x384xf32> to vector<1x32xf32>
    %414 = vector.extract_strided_slice %412 {offsets = [0, 0], sizes = [1, 32], strides = [1, 1]} : vector<1x384xf32> to vector<1x32xf32>
    %415 = arith.addf %413, %414 : vector<1x32xf32>
    %416 = arith.negf %415 : vector<1x32xf32>
    %417 = math.exp %416 : vector<1x32xf32>
    %cst_123 = arith.constant 1.000000e+00 : f32
    %418 = vector.broadcast %cst_123 : f32 to vector<1x32xf32>
    %419 = arith.addf %418, %417 : vector<1x32xf32>
    %420 = arith.divf %418, %419 : vector<1x32xf32>
    %421 = vector.extract_strided_slice %409 {offsets = [0, 128], sizes = [1, 32], strides = [1, 1]} : vector<1x384xf32> to vector<1x32xf32>
    %422 = vector.extract_strided_slice %412 {offsets = [0, 128], sizes = [1, 32], strides = [1, 1]} : vector<1x384xf32> to vector<1x32xf32>
    %423 = arith.addf %421, %422 : vector<1x32xf32>
    %424 = arith.negf %423 : vector<1x32xf32>
    %425 = math.exp %424 : vector<1x32xf32>
    %cst_124 = arith.constant 1.000000e+00 : f32
    %426 = vector.broadcast %cst_124 : f32 to vector<1x32xf32>
    %427 = arith.addf %426, %425 : vector<1x32xf32>
    %428 = arith.divf %426, %427 : vector<1x32xf32>
    %429 = vector.extract_strided_slice %409 {offsets = [0, 256], sizes = [1, 32], strides = [1, 1]} : vector<1x384xf32> to vector<1x32xf32>
    %430 = vector.extract_strided_slice %412 {offsets = [0, 256], sizes = [1, 32], strides = [1, 1]} : vector<1x384xf32> to vector<1x32xf32>
    %431 = arith.mulf %420, %430 : vector<1x32xf32>
    %432 = arith.addf %429, %431 : vector<1x32xf32>
    %433 = math.tanh %432 : vector<1x32xf32>
    %cst_125 = arith.constant 1.000000e+00 : f32
    %434 = vector.broadcast %cst_125 : f32 to vector<1x32xf32>
    %435 = arith.subf %434, %428 : vector<1x32xf32>
    %436 = arith.mulf %435, %433 : vector<1x32xf32>
    %437 = arith.mulf %428, %372 : vector<1x32xf32>
    %438 = arith.addf %436, %437 : vector<1x32xf32>
    %cst_126 = arith.constant dense<0.000000e+00> : vector<1x384xf32>
    %439 = tpu.matmul %407, %4, %cst_126 {dimension_numbers = #tpu.dot_dimension_numbers<[1], [0], [0], [1], [0, 0, 1, 1], [], []>} : vector<1x32xbf16>, vector<32x384xbf16>, vector<1x384xf32> -> vector<1x384xf32>
    %440 = arith.addf %439, %6 : vector<1x384xf32>
    %441 = arith.truncf %403 : vector<1x32xf32> to vector<1x32xbf16>
    %cst_127 = arith.constant dense<0.000000e+00> : vector<1x384xf32>
    %442 = tpu.matmul %441, %5, %cst_127 {dimension_numbers = #tpu.dot_dimension_numbers<[1], [0], [0], [1], [0, 0, 1, 1], [], []>} : vector<1x32xbf16>, vector<32x384xbf16>, vector<1x384xf32> -> vector<1x384xf32>
    %443 = arith.addf %442, %7 : vector<1x384xf32>
    %444 = vector.extract_strided_slice %440 {offsets = [0, 0], sizes = [1, 32], strides = [1, 1]} : vector<1x384xf32> to vector<1x32xf32>
    %445 = vector.extract_strided_slice %443 {offsets = [0, 0], sizes = [1, 32], strides = [1, 1]} : vector<1x384xf32> to vector<1x32xf32>
    %446 = arith.addf %444, %445 : vector<1x32xf32>
    %447 = arith.negf %446 : vector<1x32xf32>
    %448 = math.exp %447 : vector<1x32xf32>
    %cst_128 = arith.constant 1.000000e+00 : f32
    %449 = vector.broadcast %cst_128 : f32 to vector<1x32xf32>
    %450 = arith.addf %449, %448 : vector<1x32xf32>
    %451 = arith.divf %449, %450 : vector<1x32xf32>
    %452 = vector.extract_strided_slice %440 {offsets = [0, 128], sizes = [1, 32], strides = [1, 1]} : vector<1x384xf32> to vector<1x32xf32>
    %453 = vector.extract_strided_slice %443 {offsets = [0, 128], sizes = [1, 32], strides = [1, 1]} : vector<1x384xf32> to vector<1x32xf32>
    %454 = arith.addf %452, %453 : vector<1x32xf32>
    %455 = arith.negf %454 : vector<1x32xf32>
    %456 = math.exp %455 : vector<1x32xf32>
    %cst_129 = arith.constant 1.000000e+00 : f32
    %457 = vector.broadcast %cst_129 : f32 to vector<1x32xf32>
    %458 = arith.addf %457, %456 : vector<1x32xf32>
    %459 = arith.divf %457, %458 : vector<1x32xf32>
    %460 = vector.extract_strided_slice %440 {offsets = [0, 256], sizes = [1, 32], strides = [1, 1]} : vector<1x384xf32> to vector<1x32xf32>
    %461 = vector.extract_strided_slice %443 {offsets = [0, 256], sizes = [1, 32], strides = [1, 1]} : vector<1x384xf32> to vector<1x32xf32>
    %462 = arith.mulf %451, %461 : vector<1x32xf32>
    %463 = arith.addf %460, %462 : vector<1x32xf32>
    %464 = math.tanh %463 : vector<1x32xf32>
    %cst_130 = arith.constant 1.000000e+00 : f32
    %465 = vector.broadcast %cst_130 : f32 to vector<1x32xf32>
    %466 = arith.subf %465, %459 : vector<1x32xf32>
    %467 = arith.mulf %466, %464 : vector<1x32xf32>
    %468 = arith.mulf %459, %403 : vector<1x32xf32>
    %469 = arith.addf %467, %468 : vector<1x32xf32>
    %c6_131 = arith.constant 6 : index
    %c0_132 = arith.constant 0 : index
    %470 = vector.load %arg22[%c6_131, %c0_132] : memref<8x32xf32, #tpu.memory_space<vmem>>, vector<1x32xf32>
    tpu.vector_store %arg22[%c6_131, %c0_132], %438 {strides = array<i32>} : memref<8x32xf32, #tpu.memory_space<vmem>>, vector<1x32xf32>,
    %c1_133 = arith.constant 1 : index
    %c0_134 = arith.constant 0 : index
    %471 = vector.load %arg23[%c1_133, %c0_134] : memref<8x32xf32, #tpu.memory_space<vmem>>, vector<1x32xf32>
    tpu.vector_store %arg23[%c1_133, %c0_134], %469 {strides = array<i32>} : memref<8x32xf32, #tpu.memory_space<vmem>>, vector<1x32xf32>,
    %c7_135 = arith.constant 7 : index
    %c0_136 = arith.constant 0 : index
    %472 = vector.load %arg1[%c7_135, %c0_136] : memref<8x32xbf16, #tpu.memory_space<vmem>>, vector<1x32xbf16>
    %c0_137 = arith.constant 0 : index
    %c0_138 = arith.constant 0 : index
    %473 = vector.load %arg1[%c0_137, %c0_138] : memref<8x32xbf16, #tpu.memory_space<vmem>>, vector<1x32xbf16>
    %cst_139 = arith.constant dense<0.000000e+00> : vector<1x384xf32>
    %474 = tpu.matmul %472, %0, %cst_139 {dimension_numbers = #tpu.dot_dimension_numbers<[1], [0], [0], [1], [0, 0, 1, 1], [], []>} : vector<1x32xbf16>, vector<32x384xbf16>, vector<1x384xf32> -> vector<1x384xf32>
    %475 = arith.addf %474, %2 : vector<1x384xf32>
    %476 = arith.truncf %438 : vector<1x32xf32> to vector<1x32xbf16>
    %cst_140 = arith.constant dense<0.000000e+00> : vector<1x384xf32>
    %477 = tpu.matmul %476, %1, %cst_140 {dimension_numbers = #tpu.dot_dimension_numbers<[1], [0], [0], [1], [0, 0, 1, 1], [], []>} : vector<1x32xbf16>, vector<32x384xbf16>, vector<1x384xf32> -> vector<1x384xf32>
    %478 = arith.addf %477, %3 : vector<1x384xf32>
    %479 = vector.extract_strided_slice %475 {offsets = [0, 0], sizes = [1, 32], strides = [1, 1]} : vector<1x384xf32> to vector<1x32xf32>
    %480 = vector.extract_strided_slice %478 {offsets = [0, 0], sizes = [1, 32], strides = [1, 1]} : vector<1x384xf32> to vector<1x32xf32>
    %481 = arith.addf %479, %480 : vector<1x32xf32>
    %482 = arith.negf %481 : vector<1x32xf32>
    %483 = math.exp %482 : vector<1x32xf32>
    %cst_141 = arith.constant 1.000000e+00 : f32
    %484 = vector.broadcast %cst_141 : f32 to vector<1x32xf32>
    %485 = arith.addf %484, %483 : vector<1x32xf32>
    %486 = arith.divf %484, %485 : vector<1x32xf32>
    %487 = vector.extract_strided_slice %475 {offsets = [0, 128], sizes = [1, 32], strides = [1, 1]} : vector<1x384xf32> to vector<1x32xf32>
    %488 = vector.extract_strided_slice %478 {offsets = [0, 128], sizes = [1, 32], strides = [1, 1]} : vector<1x384xf32> to vector<1x32xf32>
    %489 = arith.addf %487, %488 : vector<1x32xf32>
    %490 = arith.negf %489 : vector<1x32xf32>
    %491 = math.exp %490 : vector<1x32xf32>
    %cst_142 = arith.constant 1.000000e+00 : f32
    %492 = vector.broadcast %cst_142 : f32 to vector<1x32xf32>
    %493 = arith.addf %492, %491 : vector<1x32xf32>
    %494 = arith.divf %492, %493 : vector<1x32xf32>
    %495 = vector.extract_strided_slice %475 {offsets = [0, 256], sizes = [1, 32], strides = [1, 1]} : vector<1x384xf32> to vector<1x32xf32>
    %496 = vector.extract_strided_slice %478 {offsets = [0, 256], sizes = [1, 32], strides = [1, 1]} : vector<1x384xf32> to vector<1x32xf32>
    %497 = arith.mulf %486, %496 : vector<1x32xf32>
    %498 = arith.addf %495, %497 : vector<1x32xf32>
    %499 = math.tanh %498 : vector<1x32xf32>
    %cst_143 = arith.constant 1.000000e+00 : f32
    %500 = vector.broadcast %cst_143 : f32 to vector<1x32xf32>
    %501 = arith.subf %500, %494 : vector<1x32xf32>
    %502 = arith.mulf %501, %499 : vector<1x32xf32>
    %503 = arith.mulf %494, %438 : vector<1x32xf32>
    %504 = arith.addf %502, %503 : vector<1x32xf32>
    %cst_144 = arith.constant dense<0.000000e+00> : vector<1x384xf32>
    %505 = tpu.matmul %473, %4, %cst_144 {dimension_numbers = #tpu.dot_dimension_numbers<[1], [0], [0], [1], [0, 0, 1, 1], [], []>} : vector<1x32xbf16>, vector<32x384xbf16>, vector<1x384xf32> -> vector<1x384xf32>
    %506 = arith.addf %505, %6 : vector<1x384xf32>
    %507 = arith.truncf %469 : vector<1x32xf32> to vector<1x32xbf16>
    %cst_145 = arith.constant dense<0.000000e+00> : vector<1x384xf32>
    %508 = tpu.matmul %507, %5, %cst_145 {dimension_numbers = #tpu.dot_dimension_numbers<[1], [0], [0], [1], [0, 0, 1, 1], [], []>} : vector<1x32xbf16>, vector<32x384xbf16>, vector<1x384xf32> -> vector<1x384xf32>
    %509 = arith.addf %508, %7 : vector<1x384xf32>
    %510 = vector.extract_strided_slice %506 {offsets = [0, 0], sizes = [1, 32], strides = [1, 1]} : vector<1x384xf32> to vector<1x32xf32>
    %511 = vector.extract_strided_slice %509 {offsets = [0, 0], sizes = [1, 32], strides = [1, 1]} : vector<1x384xf32> to vector<1x32xf32>
    %512 = arith.addf %510, %511 : vector<1x32xf32>
    %513 = arith.negf %512 : vector<1x32xf32>
    %514 = math.exp %513 : vector<1x32xf32>
    %cst_146 = arith.constant 1.000000e+00 : f32
    %515 = vector.broadcast %cst_146 : f32 to vector<1x32xf32>
    %516 = arith.addf %515, %514 : vector<1x32xf32>
    %517 = arith.divf %515, %516 : vector<1x32xf32>
    %518 = vector.extract_strided_slice %506 {offsets = [0, 128], sizes = [1, 32], strides = [1, 1]} : vector<1x384xf32> to vector<1x32xf32>
    %519 = vector.extract_strided_slice %509 {offsets = [0, 128], sizes = [1, 32], strides = [1, 1]} : vector<1x384xf32> to vector<1x32xf32>
    %520 = arith.addf %518, %519 : vector<1x32xf32>
    %521 = arith.negf %520 : vector<1x32xf32>
    %522 = math.exp %521 : vector<1x32xf32>
    %cst_147 = arith.constant 1.000000e+00 : f32
    %523 = vector.broadcast %cst_147 : f32 to vector<1x32xf32>
    %524 = arith.addf %523, %522 : vector<1x32xf32>
    %525 = arith.divf %523, %524 : vector<1x32xf32>
    %526 = vector.extract_strided_slice %506 {offsets = [0, 256], sizes = [1, 32], strides = [1, 1]} : vector<1x384xf32> to vector<1x32xf32>
    %527 = vector.extract_strided_slice %509 {offsets = [0, 256], sizes = [1, 32], strides = [1, 1]} : vector<1x384xf32> to vector<1x32xf32>
    %528 = arith.mulf %517, %527 : vector<1x32xf32>
    %529 = arith.addf %526, %528 : vector<1x32xf32>
    %530 = math.tanh %529 : vector<1x32xf32>
    %cst_148 = arith.constant 1.000000e+00 : f32
    %531 = vector.broadcast %cst_148 : f32 to vector<1x32xf32>
    %532 = arith.subf %531, %525 : vector<1x32xf32>
    %533 = arith.mulf %532, %530 : vector<1x32xf32>
    %534 = arith.mulf %525, %469 : vector<1x32xf32>
    %535 = arith.addf %533, %534 : vector<1x32xf32>
    %c7_149 = arith.constant 7 : index
    %c0_150 = arith.constant 0 : index
    %536 = vector.load %arg22[%c7_149, %c0_150] : memref<8x32xf32, #tpu.memory_space<vmem>>, vector<1x32xf32>
    tpu.vector_store %arg22[%c7_149, %c0_150], %504 {strides = array<i32>} : memref<8x32xf32, #tpu.memory_space<vmem>>, vector<1x32xf32>,
    %c0_151 = arith.constant 0 : index
    %c0_152 = arith.constant 0 : index
    %537 = vector.load %arg23[%c0_151, %c0_152] : memref<8x32xf32, #tpu.memory_space<vmem>>, vector<1x32xf32>
    tpu.vector_store %arg23[%c0_151, %c0_152], %535 {strides = array<i32>} : memref<8x32xf32, #tpu.memory_space<vmem>>, vector<1x32xf32>,
    %c0_153 = arith.constant 0 : index
    %c0_154 = arith.constant 0 : index
    %538 = vector.load %arg22[%c0_153, %c0_154] : memref<8x32xf32, #tpu.memory_space<vmem>>, vector<8x32xf32>
    %c0_155 = arith.constant 0 : index
    %c0_156 = arith.constant 0 : index
    %539 = vector.load %arg23[%c0_155, %c0_156] : memref<8x32xf32, #tpu.memory_space<vmem>>, vector<8x32xf32>
    %540 = arith.addf %538, %539 : vector<8x32xf32>
    %541 = arith.truncf %540 : vector<8x32xf32> to vector<8x32xbf16>
    %c0_157 = arith.constant 0 : index
    %c0_158 = arith.constant 0 : index
    %542 = vector.load %arg24[%c0_157, %c0_158] : memref<8x32xbf16, #tpu.memory_space<vmem>>, vector<8x32xbf16>
    tpu.vector_store %arg24[%c0_157, %c0_158], %541 {strides = array<i32>} : memref<8x32xbf16, #tpu.memory_space<vmem>>, vector<8x32xbf16>,
    %c0_159 = arith.constant 0 : index
    %c0_160 = arith.constant 0 : index
    %543 = vector.load %arg25[%c0_159, %c0_160] : memref<1x32xf32, #tpu.memory_space<vmem>>, vector<1x32xf32>
    tpu.vector_store %arg25[%c0_159, %c0_160], %504 {strides = array<i32>} : memref<1x32xf32, #tpu.memory_space<vmem>>, vector<1x32xf32>,
    %c1_i32 = arith.constant 1 : i32
    %544 = vector.broadcast %c1_i32 : i32 to vector<1x1xi32>
    %c0_161 = arith.constant 0 : index
    %c0_162 = arith.constant 0 : index
    %545 = vector.load %arg26[%c0_161, %c0_162] : memref<1x1xi32, #tpu.memory_space<vmem>>, vector<1x1xi32>
    tpu.vector_store %arg26[%c0_161, %c0_162], %544 {strides = array<i32>} : memref<1x1xi32, #tpu.memory_space<vmem>>, vector<1x1xi32>,
    %c0_i32 = arith.constant 0 : i32
    %546 = vector.broadcast %c0_i32 : i32 to vector<1x8xi32>
    %c0_163 = arith.constant 0 : index
    %c0_164 = arith.constant 0 : index
    %547 = vector.load %arg20[%c0_163, %c0_164] : memref<1x8xi32, #tpu.memory_space<vmem>>, vector<1x8xi32>
    tpu.vector_store %arg20[%c0_163, %c0_164], %546 {strides = array<i32>} : memref<1x8xi32, #tpu.memory_space<vmem>>, vector<1x8xi32>,
    %cst_165 = arith.constant 0.000000e+00 : f32
    %548 = vector.broadcast %cst_165 : f32 to vector<1x8xf32>
    %c0_166 = arith.constant 0 : index
    %c0_167 = arith.constant 0 : index
    %549 = vector.load %arg21[%c0_166, %c0_167] : memref<1x8xf32, #tpu.memory_space<vmem>>, vector<1x8xf32>
    tpu.vector_store %arg21[%c0_166, %c0_167], %548 {strides = array<i32>} : memref<1x8xf32, #tpu.memory_space<vmem>>, vector<1x8xf32>,
    %550 = tpu.iota {dimensions = array<i32: 1>} : vector<1x64xi32>
    %551 = tpu.iota {dimensions = array<i32: 1>} : vector<1x8xi32>
    %c0_i32_168 = arith.constant 0 : i32
    %c8_i32 = arith.constant 8 : i32
    %552 = arith.addi %c0_i32_168, %c8_i32 : i32
    %c1_i32_169 = arith.constant 1 : i32
    scf.for %arg27 = %c0_i32_168 to %552 step %c1_i32_169  : i32 {
      %c0_171 = arith.constant 0 : index
      %c0_172 = arith.constant 0 : index
      %553 = vector.load %arg26[%c0_171, %c0_172] : memref<1x1xi32, #tpu.memory_space<vmem>>, vector<1x1xi32>
      %554 = vector.extract %553[0, 0] : i32 from vector<1x1xi32>
      %555 = arith.index_cast %554 : i32 to index
      %c0_173 = arith.constant 0 : index
      %c0_174 = arith.constant 0 : index
      %556 = vector.load %arg2[%555, %c0_173, %c0_174] : memref<64x1x32xbf16, #tpu.memory_space<vmem>>, vector<1x1x32xbf16>
      %557 = vector.shape_cast %556 : vector<1x1x32xbf16> to vector<1x32xbf16>
      %c0_175 = arith.constant 0 : index
      %c0_176 = arith.constant 0 : index
      %558 = vector.load %arg25[%c0_175, %c0_176] : memref<1x32xf32, #tpu.memory_space<vmem>>, vector<1x32xf32>
      %c0_177 = arith.constant 0 : index
      %c0_178 = arith.constant 0 : index
      %559 = vector.load %arg11[%c0_177, %c0_178] : memref<32x384xbf16, #tpu.memory_space<vmem>>, vector<32x384xbf16>
      %c0_179 = arith.constant 0 : index
      %c0_180 = arith.constant 0 : index
      %560 = vector.load %arg12[%c0_179, %c0_180] : memref<32x384xbf16, #tpu.memory_space<vmem>>, vector<32x384xbf16>
      %c0_181 = arith.constant 0 : index
      %c0_182 = arith.constant 0 : index
      %561 = vector.load %arg13[%c0_181, %c0_182] : memref<1x384xf32, #tpu.memory_space<vmem>>, vector<1x384xf32>
      %c0_183 = arith.constant 0 : index
      %c0_184 = arith.constant 0 : index
      %562 = vector.load %arg14[%c0_183, %c0_184] : memref<1x384xf32, #tpu.memory_space<vmem>>, vector<1x384xf32>
      %cst_185 = arith.constant dense<0.000000e+00> : vector<1x384xf32>
      %563 = tpu.matmul %557, %559, %cst_185 {dimension_numbers = #tpu.dot_dimension_numbers<[1], [0], [0], [1], [0, 0, 1, 1], [], []>} : vector<1x32xbf16>, vector<32x384xbf16>, vector<1x384xf32> -> vector<1x384xf32>
      %564 = arith.addf %563, %561 : vector<1x384xf32>
      %565 = arith.truncf %558 : vector<1x32xf32> to vector<1x32xbf16>
      %cst_186 = arith.constant dense<0.000000e+00> : vector<1x384xf32>
      %566 = tpu.matmul %565, %560, %cst_186 {dimension_numbers = #tpu.dot_dimension_numbers<[1], [0], [0], [1], [0, 0, 1, 1], [], []>} : vector<1x32xbf16>, vector<32x384xbf16>, vector<1x384xf32> -> vector<1x384xf32>
      %567 = arith.addf %566, %562 : vector<1x384xf32>
      %568 = vector.extract_strided_slice %564 {offsets = [0, 0], sizes = [1, 32], strides = [1, 1]} : vector<1x384xf32> to vector<1x32xf32>
      %569 = vector.extract_strided_slice %567 {offsets = [0, 0], sizes = [1, 32], strides = [1, 1]} : vector<1x384xf32> to vector<1x32xf32>
      %570 = arith.addf %568, %569 : vector<1x32xf32>
      %571 = arith.negf %570 : vector<1x32xf32>
      %572 = math.exp %571 : vector<1x32xf32>
      %cst_187 = arith.constant 1.000000e+00 : f32
      %573 = vector.broadcast %cst_187 : f32 to vector<1x32xf32>
      %574 = arith.addf %573, %572 : vector<1x32xf32>
      %575 = arith.divf %573, %574 : vector<1x32xf32>
      %576 = vector.extract_strided_slice %564 {offsets = [0, 128], sizes = [1, 32], strides = [1, 1]} : vector<1x384xf32> to vector<1x32xf32>
      %577 = vector.extract_strided_slice %567 {offsets = [0, 128], sizes = [1, 32], strides = [1, 1]} : vector<1x384xf32> to vector<1x32xf32>
      %578 = arith.addf %576, %577 : vector<1x32xf32>
      %579 = arith.negf %578 : vector<1x32xf32>
      %580 = math.exp %579 : vector<1x32xf32>
      %cst_188 = arith.constant 1.000000e+00 : f32
      %581 = vector.broadcast %cst_188 : f32 to vector<1x32xf32>
      %582 = arith.addf %581, %580 : vector<1x32xf32>
      %583 = arith.divf %581, %582 : vector<1x32xf32>
      %584 = vector.extract_strided_slice %564 {offsets = [0, 256], sizes = [1, 32], strides = [1, 1]} : vector<1x384xf32> to vector<1x32xf32>
      %585 = vector.extract_strided_slice %567 {offsets = [0, 256], sizes = [1, 32], strides = [1, 1]} : vector<1x384xf32> to vector<1x32xf32>
      %586 = arith.mulf %575, %585 : vector<1x32xf32>
      %587 = arith.addf %584, %586 : vector<1x32xf32>
      %588 = math.tanh %587 : vector<1x32xf32>
      %cst_189 = arith.constant 1.000000e+00 : f32
      %589 = vector.broadcast %cst_189 : f32 to vector<1x32xf32>
      %590 = arith.subf %589, %583 : vector<1x32xf32>
      %591 = arith.mulf %590, %588 : vector<1x32xf32>
      %592 = arith.mulf %583, %558 : vector<1x32xf32>
      %593 = arith.addf %591, %592 : vector<1x32xf32>
      %594 = arith.truncf %593 : vector<1x32xf32> to vector<1x32xbf16>
      %c0_190 = arith.constant 0 : index
      %c0_191 = arith.constant 0 : index
      %595 = vector.load %arg24[%c0_190, %c0_191] : memref<8x32xbf16, #tpu.memory_space<vmem>>, vector<8x32xbf16>
      %cst_192 = arith.constant dense<0.000000e+00> : vector<1x8xf32>
      %596 = tpu.matmul %594, %595, %cst_192 {dimension_numbers = #tpu.dot_dimension_numbers<[1], [1], [0], [0], [0, 0, 1, 0], [], []>} : vector<1x32xbf16>, vector<8x32xbf16>, vector<1x8xf32> -> vector<1x8xf32>
      %cst_193 = arith.constant dense<0xFF800000> : vector<1xf32>
      %597 = vector.multi_reduction <maximumf>, %596, %cst_193 [1] : vector<1x8xf32> to vector<1xf32>
      %598 = vector.shape_cast %597 : vector<1xf32> to vector<1x1xf32>
      %599 = vector.broadcast %598 : vector<1x1xf32> to vector<1x8xf32>
      %600 = arith.subf %596, %599 : vector<1x8xf32>
      %601 = math.exp %600 : vector<1x8xf32>
      %cst_194 = arith.constant dense<0.000000e+00> : vector<1xf32>
      %602 = vector.multi_reduction <add>, %601, %cst_194 [1] : vector<1x8xf32> to vector<1xf32>
      %603 = vector.shape_cast %602 : vector<1xf32> to vector<1x1xf32>
      %604 = tpu.reciprocal %603 {approx = true} : vector<1x1xf32> -> vector<1x1xf32>
      %605 = vector.broadcast %604 : vector<1x1xf32> to vector<1x8xf32>
      %606 = arith.mulf %601, %605 : vector<1x8xf32>
      %607 = arith.truncf %606 : vector<1x8xf32> to vector<1x8xbf16>
      %cst_195 = arith.constant dense<0.000000e+00> : vector<1x32xf32>
      %608 = tpu.matmul %607, %595, %cst_195 {dimension_numbers = #tpu.dot_dimension_numbers<[1], [0], [0], [1], [0, 0, 1, 1], [], []>} : vector<1x8xbf16>, vector<8x32xbf16>, vector<1x32xf32> -> vector<1x32xf32>
      %c0_196 = arith.constant 0 : index
      %c0_197 = arith.constant 0 : index
      %609 = vector.load %arg15[%c0_196, %c0_197] : memref<32x32xbf16, #tpu.memory_space<vmem>>, vector<32x32xbf16>
      %cst_198 = arith.constant dense<0.000000e+00> : vector<1x32xf32>
      %610 = tpu.matmul %594, %609, %cst_198 {dimension_numbers = #tpu.dot_dimension_numbers<[1], [0], [0], [1], [0, 0, 1, 1], [], []>} : vector<1x32xbf16>, vector<32x32xbf16>, vector<1x32xf32> -> vector<1x32xf32>
      %611 = arith.truncf %608 : vector<1x32xf32> to vector<1x32xbf16>
      %c0_199 = arith.constant 0 : index
      %c0_200 = arith.constant 0 : index
      %612 = vector.load %arg16[%c0_199, %c0_200] : memref<32x32xbf16, #tpu.memory_space<vmem>>, vector<32x32xbf16>
      %cst_201 = arith.constant dense<0.000000e+00> : vector<1x32xf32>
      %613 = tpu.matmul %611, %612, %cst_201 {dimension_numbers = #tpu.dot_dimension_numbers<[1], [0], [0], [1], [0, 0, 1, 1], [], []>} : vector<1x32xbf16>, vector<32x32xbf16>, vector<1x32xf32> -> vector<1x32xf32>
      %614 = arith.addf %610, %613 : vector<1x32xf32>
      %c0_202 = arith.constant 0 : index
      %c0_203 = arith.constant 0 : index
      %615 = vector.load %arg17[%c0_202, %c0_203] : memref<1x32xf32, #tpu.memory_space<vmem>>, vector<1x32xf32>
      %616 = arith.addf %614, %615 : vector<1x32xf32>
      %617 = math.tanh %616 : vector<1x32xf32>
      %618 = arith.truncf %617 : vector<1x32xf32> to vector<1x32xbf16>
      %c0_204 = arith.constant 0 : index
      %c0_205 = arith.constant 0 : index
      %619 = vector.load %arg18[%c0_204, %c0_205] : memref<32x64xbf16, #tpu.memory_space<vmem>>, vector<32x64xbf16>
      %cst_206 = arith.constant dense<0.000000e+00> : vector<1x64xf32>
      %620 = tpu.matmul %618, %619, %cst_206 {dimension_numbers = #tpu.dot_dimension_numbers<[1], [0], [0], [1], [0, 0, 1, 1], [], []>} : vector<1x32xbf16>, vector<32x64xbf16>, vector<1x64xf32> -> vector<1x64xf32>
      %c0_207 = arith.constant 0 : index
      %c0_208 = arith.constant 0 : index
      %621 = vector.load %arg19[%c0_207, %c0_208] : memref<1x64xf32, #tpu.memory_space<vmem>>, vector<1x64xf32>
      %622 = arith.addf %620, %621 : vector<1x64xf32>
      %cst_209 = arith.constant dense<0xFF800000> : vector<1xf32>
      %623 = vector.multi_reduction <maximumf>, %622, %cst_209 [1] : vector<1x64xf32> to vector<1xf32>
      %624 = vector.shape_cast %623 : vector<1xf32> to vector<1x1xf32>
      %625 = vector.broadcast %624 : vector<1x1xf32> to vector<1x64xf32>
      %626 = arith.cmpf oeq, %622, %625 : vector<1x64xf32>
      %c64_i32 = arith.constant 64 : i32
      %627 = vector.broadcast %c64_i32 : i32 to vector<1x64xi32>
      %628 = arith.select %626, %550, %627 : vector<1x64xi1>, vector<1x64xi32>
      %cst_210 = arith.constant dense<2147483647> : vector<1xi32>
      %629 = vector.multi_reduction <minsi>, %628, %cst_210 [1] : vector<1x64xi32> to vector<1xi32>
      %630 = vector.shape_cast %629 : vector<1xi32> to vector<1x1xi32>
      %631 = vector.broadcast %624 : vector<1x1xf32> to vector<1x64xf32>
      %632 = arith.subf %622, %631 : vector<1x64xf32>
      %633 = math.exp %632 : vector<1x64xf32>
      %cst_211 = arith.constant dense<0.000000e+00> : vector<1xf32>
      %634 = vector.multi_reduction <add>, %633, %cst_211 [1] : vector<1x64xf32> to vector<1xf32>
      %635 = vector.shape_cast %634 : vector<1xf32> to vector<1x1xf32>
      %cst_212 = arith.constant 1.000000e+00 : f32
      %636 = vector.broadcast %cst_212 : f32 to vector<1x1xf32>
      %637 = arith.divf %636, %635 : vector<1x1xf32>
      %638 = vector.broadcast %arg27 : i32 to vector<1x8xi32>
      %639 = arith.cmpi eq, %551, %638 : vector<1x8xi32>
      %c0_213 = arith.constant 0 : index
      %c0_214 = arith.constant 0 : index
      %640 = vector.load %arg20[%c0_213, %c0_214] : memref<1x8xi32, #tpu.memory_space<vmem>>, vector<1x8xi32>
      %641 = vector.shape_cast %630 : vector<1x1xi32> to vector<1x1xi32>
      %642 = vector.broadcast %641 : vector<1x1xi32> to vector<1x8xi32>
      %643 = arith.select %639, %642, %640 : vector<1x8xi1>, vector<1x8xi32>
      %c0_215 = arith.constant 0 : index
      %c0_216 = arith.constant 0 : index
      %644 = vector.load %arg20[%c0_215, %c0_216] : memref<1x8xi32, #tpu.memory_space<vmem>>, vector<1x8xi32>
      tpu.vector_store %arg20[%c0_215, %c0_216], %643 {strides = array<i32>} : memref<1x8xi32, #tpu.memory_space<vmem>>, vector<1x8xi32>,
      %c0_217 = arith.constant 0 : index
      %c0_218 = arith.constant 0 : index
      %645 = vector.load %arg21[%c0_217, %c0_218] : memref<1x8xf32, #tpu.memory_space<vmem>>, vector<1x8xf32>
      %646 = vector.shape_cast %637 : vector<1x1xf32> to vector<1x1xf32>
      %647 = vector.broadcast %646 : vector<1x1xf32> to vector<1x8xf32>
      %648 = arith.select %639, %647, %645 : vector<1x8xi1>, vector<1x8xf32>
      %c0_219 = arith.constant 0 : index
      %c0_220 = arith.constant 0 : index
      %649 = vector.load %arg21[%c0_219, %c0_220] : memref<1x8xf32, #tpu.memory_space<vmem>>, vector<1x8xf32>
      tpu.vector_store %arg21[%c0_219, %c0_220], %648 {strides = array<i32>} : memref<1x8xf32, #tpu.memory_space<vmem>>, vector<1x8xf32>,
      %c0_221 = arith.constant 0 : index
      %c0_222 = arith.constant 0 : index
      %650 = vector.load %arg25[%c0_221, %c0_222] : memref<1x32xf32, #tpu.memory_space<vmem>>, vector<1x32xf32>
      tpu.vector_store %arg25[%c0_221, %c0_222], %593 {strides = array<i32>} : memref<1x32xf32, #tpu.memory_space<vmem>>, vector<1x32xf32>,
      %c0_223 = arith.constant 0 : index
      %c0_224 = arith.constant 0 : index
      %651 = vector.load %arg26[%c0_223, %c0_224] : memref<1x1xi32, #tpu.memory_space<vmem>>, vector<1x1xi32>
      tpu.vector_store %arg26[%c0_223, %c0_224], %630 {strides = array<i32>} : memref<1x1xi32, #tpu.memory_space<vmem>>, vector<1x1xi32>,
    }
    %c8_i32_170 = arith.constant 8 : i32
    return
  }
  func.func @transform_0(%arg0: i32) -> (i32, i32) {
    %c0_i32 = arith.constant 0 : i32
    %c0_i32_0 = arith.constant 0 : i32
    %c0_i32_1 = arith.constant 0 : i32
    return %c0_i32, %c0_i32_0 : i32, i32
  }
  func.func @transform_1(%arg0: i32) -> (i32, i32, i32) {
    %c0_i32 = arith.constant 0 : i32
    %c0_i32_0 = arith.constant 0 : i32
    %c0_i32_1 = arith.constant 0 : i32
    %c0_i32_2 = arith.constant 0 : i32
    return %c0_i32, %c0_i32_0, %c0_i32_1 : i32, i32, i32
  }
  func.func @transform_2(%arg0: i32) -> (i32, i32) {
    %c0_i32 = arith.constant 0 : i32
    %c0_i32_0 = arith.constant 0 : i32
    %c0_i32_1 = arith.constant 0 : i32
    return %c0_i32, %c0_i32_0 : i32, i32
  }
  func.func @transform_3(%arg0: i32) -> (i32, i32) {
    %c0_i32 = arith.constant 0 : i32
    %c0_i32_0 = arith.constant 0 : i32
    %c0_i32_1 = arith.constant 0 : i32
    return %c0_i32, %c0_i32_0 : i32, i32
  }
  func.func @transform_4(%arg0: i32) -> (i32, i32) {
    %c0_i32 = arith.constant 0 : i32
    %c0_i32_0 = arith.constant 0 : i32
    %c0_i32_1 = arith.constant 0 : i32
    return %c0_i32, %c0_i32_0 : i32, i32
  }
  func.func @transform_5(%arg0: i32) -> (i32, i32) {
    %c0_i32 = arith.constant 0 : i32
    %c0_i32_0 = arith.constant 0 : i32
    %c0_i32_1 = arith.constant 0 : i32
    return %c0_i32, %c0_i32_0 : i32, i32
  }
  func.func @transform_6(%arg0: i32) -> (i32, i32) {
    %c0_i32 = arith.constant 0 : i32
    %c0_i32_0 = arith.constant 0 : i32
    %c0_i32_1 = arith.constant 0 : i32
    return %c0_i32, %c0_i32_0 : i32, i32
  }
  func.func @transform_7(%arg0: i32) -> (i32, i32) {
    %c0_i32 = arith.constant 0 : i32
    %c0_i32_0 = arith.constant 0 : i32
    %c0_i32_1 = arith.constant 0 : i32
    return %c0_i32, %c0_i32_0 : i32, i32
  }
  func.func @transform_8(%arg0: i32) -> (i32, i32) {
    %c0_i32 = arith.constant 0 : i32
    %c0_i32_0 = arith.constant 0 : i32
    %c0_i32_1 = arith.constant 0 : i32
    return %c0_i32, %c0_i32_0 : i32, i32
  }
  func.func @transform_9(%arg0: i32) -> (i32, i32) {
    %c0_i32 = arith.constant 0 : i32
    %c0_i32_0 = arith.constant 0 : i32
    %c0_i32_1 = arith.constant 0 : i32
    return %c0_i32, %c0_i32_0 : i32, i32
  }
  func.func @transform_10(%arg0: i32) -> (i32, i32) {
    %c0_i32 = arith.constant 0 : i32
    %c0_i32_0 = arith.constant 0 : i32
    %c0_i32_1 = arith.constant 0 : i32
    return %c0_i32, %c0_i32_0 : i32, i32
  }
  func.func @transform_11(%arg0: i32) -> (i32, i32) {
    %c0_i32 = arith.constant 0 : i32
    %c0_i32_0 = arith.constant 0 : i32
    %c0_i32_1 = arith.constant 0 : i32
    return %c0_i32, %c0_i32_0 : i32, i32
  }
  func.func @transform_12(%arg0: i32) -> (i32, i32) {
    %c0_i32 = arith.constant 0 : i32
    %c0_i32_0 = arith.constant 0 : i32
    %c0_i32_1 = arith.constant 0 : i32
    return %c0_i32, %c0_i32_0 : i32, i32
  }
  func.func @transform_13(%arg0: i32) -> (i32, i32) {
    %c0_i32 = arith.constant 0 : i32
    %c0_i32_0 = arith.constant 0 : i32
    %c0_i32_1 = arith.constant 0 : i32
    return %c0_i32, %c0_i32_0 : i32, i32
  }
  func.func @transform_14(%arg0: i32) -> (i32, i32) {
    %c0_i32 = arith.constant 0 : i32
    %c0_i32_0 = arith.constant 0 : i32
    %c0_i32_1 = arith.constant 0 : i32
    return %c0_i32, %c0_i32_0 : i32, i32
  }
  func.func @transform_15(%arg0: i32) -> (i32, i32) {
    %c0_i32 = arith.constant 0 : i32
    %c0_i32_0 = arith.constant 0 : i32
    %c0_i32_1 = arith.constant 0 : i32
    return %c0_i32, %c0_i32_0 : i32, i32
  }
  func.func @transform_16(%arg0: i32) -> (i32, i32) {
    %c0_i32 = arith.constant 0 : i32
    %c0_i32_0 = arith.constant 0 : i32
    %c0_i32_1 = arith.constant 0 : i32
    return %c0_i32, %c0_i32_0 : i32, i32
  }
  func.func @transform_17(%arg0: i32) -> (i32, i32) {
    %c0_i32 = arith.constant 0 : i32
    %c0_i32_0 = arith.constant 0 : i32
    %c0_i32_1 = arith.constant 0 : i32
    return %c0_i32, %c0_i32_0 : i32, i32
  }
  func.func @transform_18(%arg0: i32) -> (i32, i32) {
    %c0_i32 = arith.constant 0 : i32
    %c0_i32_0 = arith.constant 0 : i32
    %c0_i32_1 = arith.constant 0 : i32
    return %c0_i32, %c0_i32_0 : i32, i32
  }
  func.func @transform_19(%arg0: i32) -> (i32, i32) {
    %c0_i32 = arith.constant 0 : i32
    %c0_i32_0 = arith.constant 0 : i32
    %c0_i32_1 = arith.constant 0 : i32
    return %c0_i32, %c0_i32_0 : i32, i32
  }
  func.func @transform_20(%arg0: i32) -> (i32, i32) {
    %c0_i32 = arith.constant 0 : i32
    %c0_i32_0 = arith.constant 0 : i32
    %c0_i32_1 = arith.constant 0 : i32
    return %c0_i32, %c0_i32_0 : i32, i32
  }
}

</mosaic_0001>

<llo_original>
// kernel: greedy_search_decoder.1
$region0: #{greedy_search_decoder.1}
  #allocation0 [shape = 'u32[]', space=smem, size = 0x4, offset = 0x4, fixed_abs, tag = 'smem constant byte address 0x4 - core index']
  #allocation1 [shape = 'u32[72,128]{1,0:T(1,128)}', space=vmem, size = 0x9000, scoped, tag = 'internal scratch']
  #allocation2 [shape = 'f32[8,32]{1,0:T(8,128)}', space=vmem, size = 0x1000, scoped, tag = 'scratch operand']
  #allocation3 [shape = 'f32[8,32]{1,0:T(8,128)}', space=vmem, size = 0x1000, scoped, tag = 'scratch operand']
  #allocation4 [shape = 'bf16[8,32]{1,0:T(8,128)(2,1)}', space=vmem, size = 0x800, scoped, tag = 'scratch operand']
  #allocation5 [shape = 'f32[1,32]{1,0:T(1,128)}', space=vmem, size = 0x200, scoped, tag = 'scratch operand']
  #allocation6 [shape = 's32[1,1]{1,0:T(1,128)}', space=vmem, size = 0x200, scoped, tag = 'scratch operand']
  %s0 = inlined_call_operand.vmem [shape: bf16[8,32], index: 0, kind: input, shape index: {}]
  %s1 = inlined_call_operand.vmem [shape: bf16[64,1,32], index: 1, kind: input, shape index: {}]
  %s2 = inlined_call_operand.vmem [shape: bf16[32,384], index: 2, kind: input, shape index: {}]
  %s3 = inlined_call_operand.vmem [shape: bf16[32,384], index: 3, kind: input, shape index: {}]
  %s4 = inlined_call_operand.vmem [shape: f32[1,384], index: 4, kind: input, shape index: {}]
  %s5 = inlined_call_operand.vmem [shape: f32[1,384], index: 5, kind: input, shape index: {}]
  %s6 = inlined_call_operand.vmem [shape: bf16[32,384], index: 6, kind: input, shape index: {}]
  %s7 = inlined_call_operand.vmem [shape: bf16[32,384], index: 7, kind: input, shape index: {}]
  %s8 = inlined_call_operand.vmem [shape: f32[1,384], index: 8, kind: input, shape index: {}]
  %s9 = inlined_call_operand.vmem [shape: f32[1,384], index: 9, kind: input, shape index: {}]
  %s10 = inlined_call_operand.hbm [shape: bf16[32,384], index: 10, kind: input, shape index: {}]
  %s11 = inlined_call_operand.vmem [shape: bf16[32,384], index: 11, kind: input, shape index: {}]
  %s12 = inlined_call_operand.vmem [shape: f32[1,384], index: 12, kind: input, shape index: {}]
  %s13 = inlined_call_operand.vmem [shape: f32[1,384], index: 13, kind: input, shape index: {}]
  %s14 = inlined_call_operand.vmem [shape: bf16[32,32], index: 14, kind: input, shape index: {}]
  %s15 = inlined_call_operand.vmem [shape: bf16[32,32], index: 15, kind: input, shape index: {}]
  %s16 = inlined_call_operand.vmem [shape: f32[1,32], index: 16, kind: input, shape index: {}]
  %s17 = inlined_call_operand.vmem [shape: bf16[32,64], index: 17, kind: input, shape index: {}]
  %s18 = inlined_call_operand.vmem [shape: f32[1,64], index: 18, kind: input, shape index: {}]
  %s19 = inlined_call_operand.hbm [shape: s32[1,8], index: 19, kind: output, shape index: {0}]
  %s20 = inlined_call_operand.hbm [shape: f32[1,8], index: 20, kind: output, shape index: {1}]
  %21 = xla_tuple %s19, %s20
  %s22 = sld [smem:[#allocation0]]
  $region105: #{greedy_search_decoder.1} parent=0
    _
  %s24 = ssub.s32 1, %s22
  %s25 = scalar_select 0, %s24, %s22
  $region1: #{greedy_search_decoder.1} parent=0
    #allocation7 [shape = 'u8[24576]{0}', space=vmem, size = 0x6000, scoped, tag = 'input window, operand 10, single buffered']
    #allocation8 [shape = 's32[1]{0}', space=sflag, size = 0x4, scoped, tag = 'scoped memory for greedy_search_decoder.1']
    #allocation9 [shape = 's32[1]{0}', space=sflag, size = 0x4, scoped, tag = 'scoped memory for greedy_search_decoder.1']
    #allocation10 [shape = 'u8[512]{0}', space=vmem, size = 0x400, scoped, tag = 'output window, operand 0, single buffered']
    #allocation11 [shape = 'u8[512]{0}', space=vmem, size = 0x400, scoped, tag = 'output window, operand 1, single buffered']
    #allocation12 [shape = 's32[1]{0}', space=sflag, size = 0x4, scoped, tag = 'scoped memory for greedy_search_decoder.1']
    %26 = vsyncpa [#allocation8], 0
    %27 = vsyncpa [#allocation9], 0
    %28 = vsyncpa [#allocation12], 0
    // Predicated region
    $region2: #{greedy_search_decoder.1} parent=1 // pred_check
      _
    $region3: #{greedy_search_decoder.1} parent=1 // pred_check_branch
      %30 = sbr.rel (0) target = $region5
    $region4: #{greedy_search_decoder.1} parent=1 // pred_region
      _
    $region5: #{greedy_search_decoder.1} parent=1 // pred_fallthru
      _
    // Predicated region
    $region6: #{greedy_search_decoder.1} parent=1 // pred_check
      _
    $region7: #{greedy_search_decoder.1} parent=1 // pred_check_branch
      %32 = sbr.rel (0) target = $region9
    $region8: #{greedy_search_decoder.1} parent=1 // pred_region
      _
    $region9: #{greedy_search_decoder.1} parent=1 // pred_fallthru
      _
    // Predicated region
    $region10: #{greedy_search_decoder.1} parent=1 // pred_check
      _
    $region11: #{greedy_search_decoder.1} parent=1 // pred_check_branch
      %34 = sbr.rel (0) target = $region13
    $region12: #{greedy_search_decoder.1} parent=1 // pred_region
      _
    $region13: #{greedy_search_decoder.1} parent=1 // pred_fallthru
      _
    // Predicated region
    $region14: #{greedy_search_decoder.1} parent=1 // pred_check
      _
    $region15: #{greedy_search_decoder.1} parent=1 // pred_check_branch
      %36 = sbr.rel (0) target = $region17
    $region16: #{greedy_search_decoder.1} parent=1 // pred_region
      _
    $region17: #{greedy_search_decoder.1} parent=1 // pred_fallthru
      _
    // Predicated region
    $region18: #{greedy_search_decoder.1} parent=1 // pred_check
      _
    $region19: #{greedy_search_decoder.1} parent=1 // pred_check_branch
      %38 = sbr.rel (0) target = $region21
    $region20: #{greedy_search_decoder.1} parent=1 // pred_region
      _
    $region21: #{greedy_search_decoder.1} parent=1 // pred_fallthru
      _
    // Predicated region
    $region22: #{greedy_search_decoder.1} parent=1 // pred_check
      _
    $region23: #{greedy_search_decoder.1} parent=1 // pred_check_branch
      %40 = sbr.rel (0) target = $region25
    $region24: #{greedy_search_decoder.1} parent=1 // pred_region
      _
    $region25: #{greedy_search_decoder.1} parent=1 // pred_fallthru
      _
    // Predicated region
    $region26: #{greedy_search_decoder.1} parent=1 // pred_check
      _
    $region27: #{greedy_search_decoder.1} parent=1 // pred_check_branch
      %42 = sbr.rel (0) target = $region29
    $region28: #{greedy_search_decoder.1} parent=1 // pred_region
      _
    $region29: #{greedy_search_decoder.1} parent=1 // pred_fallthru
      _
    // Predicated region
    $region30: #{greedy_search_decoder.1} parent=1 // pred_check
      _
    $region31: #{greedy_search_decoder.1} parent=1 // pred_check_branch
      %44 = sbr.rel (0) target = $region33
    $region32: #{greedy_search_decoder.1} parent=1 // pred_region
      _
    $region33: #{greedy_search_decoder.1} parent=1 // pred_fallthru
      _
    // Predicated region
    $region34: #{greedy_search_decoder.1} parent=1 // pred_check
      _
    $region35: #{greedy_search_decoder.1} parent=1 // pred_check_branch
      %46 = sbr.rel (0) target = $region37
    $region36: #{greedy_search_decoder.1} parent=1 // pred_region
      _
    $region37: #{greedy_search_decoder.1} parent=1 // pred_fallthru
      _
    // Predicated region
    $region38: #{greedy_search_decoder.1} parent=1 // pred_check
      _
    $region39: #{greedy_search_decoder.1} parent=1 // pred_check_branch
      %48 = sbr.rel (0) target = $region41
    $region40: #{greedy_search_decoder.1} parent=1 // pred_region
      _
    $region41: #{greedy_search_decoder.1} parent=1 // pred_fallthru
      _
    // Predicated region
    $region42: #{greedy_search_decoder.1} parent=1 // pred_check
      _
    $region43: #{greedy_search_decoder.1} parent=1 // pred_check_branch
      %50 = sbr.rel (0) target = $region45
    $region44: #{greedy_search_decoder.1} parent=1 // pred_region
      %52 = vsyncadd [#allocation8], 0
      %s53 = sshll.u32 %s10, 4
      %s54 = int_to_ptr.hbm [resolvable:$true] %s53
      %s55 = sshll.u32 [#allocation7], 4
      %s56 = int_to_ptr.vmem [resolvable:$true] %s55
      %61 = dma.hbm_to_vmem [thread:$0]  %s54, 768, %s56, [#allocation8], 192, 192, 12
    $region45: #{greedy_search_decoder.1} parent=1 // pred_fallthru
      _
    // Predicated region
    $region46: #{greedy_search_decoder.1} parent=1 // pred_check
      _
    $region47: #{greedy_search_decoder.1} parent=1 // pred_check_branch
      %63 = sbr.rel (0) target = $region49
    $region48: #{greedy_search_decoder.1} parent=1 // pred_region
      _
    $region49: #{greedy_search_decoder.1} parent=1 // pred_fallthru
      _
    // Predicated region
    $region50: #{greedy_search_decoder.1} parent=1 // pred_check
      _
    $region51: #{greedy_search_decoder.1} parent=1 // pred_check_branch
      %65 = sbr.rel (0) target = $region53
    $region52: #{greedy_search_decoder.1} parent=1 // pred_region
      _
    $region53: #{greedy_search_decoder.1} parent=1 // pred_fallthru
      _
    // Predicated region
    $region54: #{greedy_search_decoder.1} parent=1 // pred_check
      _
    $region55: #{greedy_search_decoder.1} parent=1 // pred_check_branch
      %67 = sbr.rel (0) target = $region57
    $region56: #{greedy_search_decoder.1} parent=1 // pred_region
      _
    $region57: #{greedy_search_decoder.1} parent=1 // pred_fallthru
      _
    // Predicated region
    $region58: #{greedy_search_decoder.1} parent=1 // pred_check
      _
    $region59: #{greedy_search_decoder.1} parent=1 // pred_check_branch
      %69 = sbr.rel (0) target = $region61
    $region60: #{greedy_search_decoder.1} parent=1 // pred_region
      _
    $region61: #{greedy_search_decoder.1} parent=1 // pred_fallthru
      _
    // Predicated region
    $region62: #{greedy_search_decoder.1} parent=1 // pred_check
      _
    $region63: #{greedy_search_decoder.1} parent=1 // pred_check_branch
      %71 = sbr.rel (0) target = $region65
    $region64: #{greedy_search_decoder.1} parent=1 // pred_region
      _
    $region65: #{greedy_search_decoder.1} parent=1 // pred_fallthru
      _
    // Predicated region
    $region66: #{greedy_search_decoder.1} parent=1 // pred_check
      _
    $region67: #{greedy_search_decoder.1} parent=1 // pred_check_branch
      %73 = sbr.rel (0) target = $region69
    $region68: #{greedy_search_decoder.1} parent=1 // pred_region
      _
    $region69: #{greedy_search_decoder.1} parent=1 // pred_fallthru
      _
    // Predicated region
    $region70: #{greedy_search_decoder.1} parent=1 // pred_check
      _
    $region71: #{greedy_search_decoder.1} parent=1 // pred_check_branch
      %75 = sbr.rel (0) target = $region73
    $region72: #{greedy_search_decoder.1} parent=1 // pred_region
      _
    $region73: #{greedy_search_decoder.1} parent=1 // pred_fallthru
      _
    // Predicated region
    $region74: #{greedy_search_decoder.1} parent=1 // pred_check
      _
    $region75: #{greedy_search_decoder.1} parent=1 // pred_check_branch
      %77 = sbr.rel (0) target = $region77
    $region76: #{greedy_search_decoder.1} parent=1 // pred_region
      _
    $region77: #{greedy_search_decoder.1} parent=1 // pred_fallthru
      _
    // Predicated region
    $region78: #{greedy_search_decoder.1} parent=1 // pred_check
      _
    $region79: #{greedy_search_decoder.1} parent=1 // pred_check_branch
      %79 = sbr.rel (0) target = $region81
    $region80: #{greedy_search_decoder.1} parent=1 // pred_region
      %81 = dma.done [#allocation8], 768
    $region81: #{greedy_search_decoder.1} parent=1 // pred_fallthru
      _
    %v83 = vld [vmem:[%s2] sm:$0xff]
    %v84 = vld [vmem:[%s2 + $0x8] sm:$0xf]
    %v85 = vld [vmem:[%s2 + $0xc] sm:$0xff]
    %v86 = vld [vmem:[%s2 + $0x14] sm:$0xf]
    %v87 = vld [vmem:[%s2 + $0x18] sm:$0xff]
    %v88 = vld [vmem:[%s2 + $0x20] sm:$0xf]
    %v89 = vld [vmem:[%s2 + $0x24] sm:$0xff]
    %v90 = vld [vmem:[%s2 + $0x2c] sm:$0xf]
    %v91 = vld [vmem:[%s3] sm:$0xff]
    %v92 = vld [vmem:[%s3 + $0x8] sm:$0xf]
    %v93 = vld [vmem:[%s3 + $0xc] sm:$0xff]
    %v94 = vld [vmem:[%s3 + $0x14] sm:$0xf]
    %v95 = vld [vmem:[%s3 + $0x18] sm:$0xff]
    %v96 = vld [vmem:[%s3 + $0x20] sm:$0xf]
    %v97 = vld [vmem:[%s3 + $0x24] sm:$0xff]
    %v98 = vld [vmem:[%s3 + $0x2c] sm:$0xf]
    %v99 = vld [vmem:[%s4] sm:$0x7]
    %v100 = vld [vmem:[%s5] sm:$0x7]
    %v101 = vld [vmem:[%s6] sm:$0xff]
    %v102 = vld [vmem:[%s6 + $0x8] sm:$0xf]
    %v103 = vld [vmem:[%s6 + $0xc] sm:$0xff]
    %v104 = vld [vmem:[%s6 + $0x14] sm:$0xf]
    %v105 = vld [vmem:[%s6 + $0x18] sm:$0xff]
    %v106 = vld [vmem:[%s6 + $0x20] sm:$0xf]
    %v107 = vld [vmem:[%s6 + $0x24] sm:$0xff]
    %v108 = vld [vmem:[%s6 + $0x2c] sm:$0xf]
    %v109 = vld [vmem:[%s7] sm:$0xff]
    %v110 = vld [vmem:[%s7 + $0x8] sm:$0xf]
    %v111 = vld [vmem:[%s7 + $0xc] sm:$0xff]
    %v112 = vld [vmem:[%s7 + $0x14] sm:$0xf]
    %v113 = vld [vmem:[%s7 + $0x18] sm:$0xff]
    %v114 = vld [vmem:[%s7 + $0x20] sm:$0xf]
    %v115 = vld [vmem:[%s7 + $0x24] sm:$0xff]
    %v116 = vld [vmem:[%s7 + $0x2c] sm:$0xf]
    %v117 = vld [vmem:[%s8] sm:$0x7]
    %v118 = vld [vmem:[%s9] sm:$0x7]
    %v119 = vld [vmem:[%s0] sm:$0x1]
    %v120 = vld [vmem:[%s0] sm:$0x8]
    %v129 = vunpack.c.l.b16 %v83
    %v130 = vunpack.c.h.b16 %v83
    %v131 = vunpack.c.l.b16 %v84
    %v132 = vunpack.c.l.b16 %v85
    %v133 = vunpack.c.h.b16 %v85
    %v134 = vunpack.c.l.b16 %v86
    %v135 = vunpack.c.l.b16 %v87
    %v136 = vunpack.c.h.b16 %v87
    %v137 = vunpack.c.l.b16 %v88
    %v138 = vunpack.c.l.b16 %v89
    %v139 = vunpack.c.h.b16 %v89
    %v140 = vunpack.c.l.b16 %v90
    %v141 = vpack.c.b16 %v132, %v129
    %v142 = vpack.c.b16 %v133, %v130
    %v143 = vpack.c.b16 %v134, %v131
    %v144 = vpack.c.b16 %v138, %v135
    %v145 = vpack.c.b16 %v139, %v136
    %v146 = vpack.c.b16 %v140, %v137
    %v154 = vperm.slane %v99, 0
    %v155 = vperm.slane %v99, 1
    %v156 = vperm.slane %v99, 2
    %vm160 = vcmask 261120
    %v162 = vsel %vm160, %v119, 0
    %164 = vmatpush.bf16.msra.mxu0 0
    %165 = vmatpush.bf16.msra.mxu0 0
    %166 = vmatpush.bf16.msra.mxu0 0
    %167 = vmatpush.bf16.msra.mxu0 0
    %168 = vmatpush.bf16.msra.mxu0 0
    %169 = vmatpush.bf16.msra.mxu0 0
    %170 = vmatpush.bf16.msra.mxu0 %v144
    %171 = vmatpush.bf16.msra.mxu0 %v141
    %172 = vmatmul.bf16.gmra.mxu0 %v162
    %v173 = vpop.f32.mrf.mxu0
    %v174 = vadd.f32 %v154, %v173
    %v175 = vpop.f32.mrf.mxu0
    %176 = vdwg.mxu0
    %177 = vmatpush.bf16.msra.mxu0 0
    %178 = vmatpush.bf16.msra.mxu0 0
    %179 = vmatpush.bf16.msra.mxu0 0
    %180 = vmatpush.bf16.msra.mxu0 0
    %181 = vmatpush.bf16.msra.mxu0 0
    %182 = vmatpush.bf16.msra.mxu0 0
    %183 = vmatpush.bf16.msra.mxu0 %v145
    %184 = vmatpush.bf16.msra.mxu0 %v142
    %185 = vmatmul.bf16.gmra.mxu0 %v162
    %v186 = vpop.f32.mrf.mxu0
    %v187 = vadd.f32 %v155, %v186
    %v188 = vpop.f32.mrf.mxu0
    %189 = vdwg.mxu0
    %190 = vmatpush.bf16.msra.mxu0 0
    %191 = vmatpush.bf16.msra.mxu0 0
    %192 = vmatpush.bf16.msra.mxu0 0
    %193 = vmatpush.bf16.msra.mxu0 0
    %194 = vmatpush.bf16.msra.mxu0 0
    %195 = vmatpush.bf16.msra.mxu0 0
    %196 = vmatpush.bf16.msra.mxu0 %v146
    %197 = vmatpush.bf16.msra.mxu0 %v143
    %198 = vmatmul.bf16.gmra.mxu0 %v162
    %v199 = vpop.f32.mrf.mxu0
    %v200 = vadd.f32 %v156, %v199
    %v201 = vpop.f32.mrf.mxu0
    %202 = vdwg.mxu0
    %v211 = vunpack.c.l.b16 %v91
    %v212 = vunpack.c.h.b16 %v91
    %v213 = vunpack.c.l.b16 %v92
    %v214 = vunpack.c.l.b16 %v93
    %v215 = vunpack.c.h.b16 %v93
    %v216 = vunpack.c.l.b16 %v94
    %v217 = vunpack.c.l.b16 %v95
    %v218 = vunpack.c.h.b16 %v95
    %v219 = vunpack.c.l.b16 %v96
    %v220 = vunpack.c.l.b16 %v97
    %v221 = vunpack.c.h.b16 %v97
    %v222 = vunpack.c.l.b16 %v98
    %v223 = vpack.c.b16 %v214, %v211
    %v224 = vpack.c.b16 %v215, %v212
    %v225 = vpack.c.b16 %v216, %v213
    %v226 = vpack.c.b16 %v220, %v217
    %v227 = vpack.c.b16 %v221, %v218
    %v228 = vpack.c.b16 %v222, %v219
    %v236 = vperm.slane %v100, 0
    %v237 = vperm.slane %v100, 1
    %v238 = vperm.slane %v100, 2
    %v243 = vsel %vm160, 0, 0
    %245 = vmatpush.bf16.msra.mxu0 0
    %246 = vmatpush.bf16.msra.mxu0 0
    %247 = vmatpush.bf16.msra.mxu0 0
    %248 = vmatpush.bf16.msra.mxu0 0
    %249 = vmatpush.bf16.msra.mxu0 0
    %250 = vmatpush.bf16.msra.mxu0 0
    %251 = vmatpush.bf16.msra.mxu0 %v226
    %252 = vmatpush.bf16.msra.mxu0 %v223
    %253 = vmatmul.bf16.gmra.mxu0 %v243
    %v254 = vpop.f32.mrf.mxu0
    %v255 = vadd.f32 %v236, %v254
    %v256 = vpop.f32.mrf.mxu0
    %257 = vdwg.mxu0
    %258 = vmatpush.bf16.msra.mxu0 0
    %259 = vmatpush.bf16.msra.mxu0 0
    %260 = vmatpush.bf16.msra.mxu0 0
    %261 = vmatpush.bf16.msra.mxu0 0
    %262 = vmatpush.bf16.msra.mxu0 0
    %263 = vmatpush.bf16.msra.mxu0 0
    %264 = vmatpush.bf16.msra.mxu0 %v227
    %265 = vmatpush.bf16.msra.mxu0 %v224
    %266 = vmatmul.bf16.gmra.mxu0 %v243
    %v267 = vpop.f32.mrf.mxu0
    %v268 = vadd.f32 %v237, %v267
    %v269 = vpop.f32.mrf.mxu0
    %270 = vdwg.mxu0
    %271 = vmatpush.bf16.msra.mxu0 0
    %272 = vmatpush.bf16.msra.mxu0 0
    %273 = vmatpush.bf16.msra.mxu0 0
    %274 = vmatpush.bf16.msra.mxu0 0
    %275 = vmatpush.bf16.msra.mxu0 0
    %276 = vmatpush.bf16.msra.mxu0 0
    %277 = vmatpush.bf16.msra.mxu0 %v228
    %278 = vmatpush.bf16.msra.mxu0 %v225
    %279 = vmatmul.bf16.gmra.mxu0 %v243
    %v280 = vpop.f32.mrf.mxu0
    %v281 = vadd.f32 %v238, %v280
    %v282 = vpop.f32.mrf.mxu0
    %283 = vdwg.mxu0
    %v284 = vadd.f32 %v174, %v255
    %v285 = vxor.u32 %v284, 2147483648
    %v286 = vmul.f32 %v285, 1.442695
    %v287 = vpow.pop %v286
    %v288 = vadd.f32 %v287, 1.0
    %v289 = vrcp.pop %v288
    %v290 = vmul.f32 %v288, %v289
    %v291 = vsub.f32 1.0, %v290
    %v292 = vmul.f32 %v289, %v291
    %v293 = vadd.f32 %v289, %v292
    %vm294 = vweird.f32 %v288
    %vm295 = vweird.f32 %v289
    %vm296 = vmor %vm294, %vm295
    %v297 = vsel %vm296, %v289, %v293
    %v298 = vand.u32 2147483647, %v288
    %vm299 = vcmp.eq.f32.partialorder %v298, 8.507059e+37
    %v300 = vand.u32 %v288, 2147483648
    %v301 = vor.u32 1.1754944e-38, %v300
    %v302 = vsel %vm299, %v301, %v297
    %v303 = vmul.f32 1.0, %v302
    %v304 = vadd.f32 %v187, %v268
    %v305 = vxor.u32 %v304, 2147483648
    %v306 = vmul.f32 %v305, 1.442695
    %v307 = vpow.pop %v306
    %v308 = vadd.f32 %v307, 1.0
    %v309 = vrcp.pop %v308
    %v310 = vmul.f32 %v308, %v309
    %v311 = vsub.f32 1.0, %v310
    %v312 = vmul.f32 %v309, %v311
    %v313 = vadd.f32 %v309, %v312
    %vm314 = vweird.f32 %v308
    %vm315 = vweird.f32 %v309
    %vm316 = vmor %vm314, %vm315
    %v317 = vsel %vm316, %v309, %v313
    %v318 = vand.u32 2147483647, %v308
    %vm319 = vcmp.eq.f32.partialorder %v318, 8.507059e+37
    %v320 = vand.u32 %v308, 2147483648
    %v321 = vor.u32 1.1754944e-38, %v320
    %v322 = vsel %vm319, %v321, %v317
    %v323 = vmul.f32 1.0, %v322
    %v324 = vmul.f32 %v303, %v281
    %v325 = vadd.f32 %v200, %v324
    %v326 = vtanh.pop %v325
    %v327 = vsub.f32 1.0, %v323
    %v328 = vmul.f32 %v327, %v326
    %v329 = vmul.f32 %v323, 0.0
    %v330 = vadd.f32 %v328, %v329
    %v332 = vunpack.c.l.b16 %v120
    %v333 = vpack.c.b16 %v332, %v332
    %v335 = vshrl.u32 %v333, 16
    %v337 = vrot.slane %v335, 3
    %v346 = vunpack.c.l.b16 %v101
    %v347 = vunpack.c.h.b16 %v101
    %v348 = vunpack.c.l.b16 %v102
    %v349 = vunpack.c.l.b16 %v103
    %v350 = vunpack.c.h.b16 %v103
    %v351 = vunpack.c.l.b16 %v104
    %v352 = vunpack.c.l.b16 %v105
    %v353 = vunpack.c.h.b16 %v105
    %v354 = vunpack.c.l.b16 %v106
    %v355 = vunpack.c.l.b16 %v107
    %v356 = vunpack.c.h.b16 %v107
    %v357 = vunpack.c.l.b16 %v108
    %v358 = vpack.c.b16 %v349, %v346
    %v359 = vpack.c.b16 %v350, %v347
    %v360 = vpack.c.b16 %v351, %v348
    %v361 = vpack.c.b16 %v355, %v352
    %v362 = vpack.c.b16 %v356, %v353
    %v363 = vpack.c.b16 %v357, %v354
    %v371 = vperm.slane %v117, 0
    %v372 = vperm.slane %v117, 1
    %v373 = vperm.slane %v117, 2
    %v378 = vsel %vm160, %v337, 0
    %380 = vmatpush.bf16.msra.mxu0 0
    %381 = vmatpush.bf16.msra.mxu0 0
    %382 = vmatpush.bf16.msra.mxu0 0
    %383 = vmatpush.bf16.msra.mxu0 0
    %384 = vmatpush.bf16.msra.mxu0 0
    %385 = vmatpush.bf16.msra.mxu0 0
    %386 = vmatpush.bf16.msra.mxu0 %v361
    %387 = vmatpush.bf16.msra.mxu0 %v358
    %388 = vmatmul.bf16.gmra.mxu0 %v378
    %v389 = vpop.f32.mrf.mxu0
    %v390 = vadd.f32 %v371, %v389
    %v391 = vpop.f32.mrf.mxu0
    %392 = vdwg.mxu0
    %393 = vmatpush.bf16.msra.mxu0 0
    %394 = vmatpush.bf16.msra.mxu0 0
    %395 = vmatpush.bf16.msra.mxu0 0
    %396 = vmatpush.bf16.msra.mxu0 0
    %397 = vmatpush.bf16.msra.mxu0 0
    %398 = vmatpush.bf16.msra.mxu0 0
    %399 = vmatpush.bf16.msra.mxu0 %v362
    %400 = vmatpush.bf16.msra.mxu0 %v359
    %401 = vmatmul.bf16.gmra.mxu0 %v378
    %v402 = vpop.f32.mrf.mxu0
    %v403 = vadd.f32 %v372, %v402
    %v404 = vpop.f32.mrf.mxu0
    %405 = vdwg.mxu0
    %406 = vmatpush.bf16.msra.mxu0 0
    %407 = vmatpush.bf16.msra.mxu0 0
    %408 = vmatpush.bf16.msra.mxu0 0
    %409 = vmatpush.bf16.msra.mxu0 0
    %410 = vmatpush.bf16.msra.mxu0 0
    %411 = vmatpush.bf16.msra.mxu0 0
    %412 = vmatpush.bf16.msra.mxu0 %v363
    %413 = vmatpush.bf16.msra.mxu0 %v360
    %414 = vmatmul.bf16.gmra.mxu0 %v378
    %v415 = vpop.f32.mrf.mxu0
    %v416 = vadd.f32 %v373, %v415
    %v417 = vpop.f32.mrf.mxu0
    %418 = vdwg.mxu0
    %v427 = vunpack.c.l.b16 %v109
    %v428 = vunpack.c.h.b16 %v109
    %v429 = vunpack.c.l.b16 %v110
    %v430 = vunpack.c.l.b16 %v111
    %v431 = vunpack.c.h.b16 %v111
    %v432 = vunpack.c.l.b16 %v112
    %v433 = vunpack.c.l.b16 %v113
    %v434 = vunpack.c.h.b16 %v113
    %v435 = vunpack.c.l.b16 %v114
    %v436 = vunpack.c.l.b16 %v115
    %v437 = vunpack.c.h.b16 %v115
    %v438 = vunpack.c.l.b16 %v116
    %v439 = vpack.c.b16 %v430, %v427
    %v440 = vpack.c.b16 %v431, %v428
    %v441 = vpack.c.b16 %v432, %v429
    %v442 = vpack.c.b16 %v436, %v433
    %v443 = vpack.c.b16 %v437, %v434
    %v444 = vpack.c.b16 %v438, %v435
    %v452 = vperm.slane %v118, 0
    %v453 = vperm.slane %v118, 1
    %v454 = vperm.slane %v118, 2
    %458 = vmatpush.bf16.msra.mxu0 0
    %459 = vmatpush.bf16.msra.mxu0 0
    %460 = vmatpush.bf16.msra.mxu0 0
    %461 = vmatpush.bf16.msra.mxu0 0
    %462 = vmatpush.bf16.msra.mxu0 0
    %463 = vmatpush.bf16.msra.mxu0 0
    %464 = vmatpush.bf16.msra.mxu0 %v442
    %465 = vmatpush.bf16.msra.mxu0 %v439
    %466 = vmatmul.bf16.gmra.mxu0 %v243
    %v467 = vpop.f32.mrf.mxu0
    %v468 = vadd.f32 %v452, %v467
    %v469 = vpop.f32.mrf.mxu0
    %470 = vdwg.mxu0
    %471 = vmatpush.bf16.msra.mxu0 0
    %472 = vmatpush.bf16.msra.mxu0 0
    %473 = vmatpush.bf16.msra.mxu0 0
    %474 = vmatpush.bf16.msra.mxu0 0
    %475 = vmatpush.bf16.msra.mxu0 0
    %476 = vmatpush.bf16.msra.mxu0 0
    %477 = vmatpush.bf16.msra.mxu0 %v443
    %478 = vmatpush.bf16.msra.mxu0 %v440
    %479 = vmatmul.bf16.gmra.mxu0 %v243
    %v480 = vpop.f32.mrf.mxu0
    %v481 = vadd.f32 %v453, %v480
    %v482 = vpop.f32.mrf.mxu0
    %483 = vdwg.mxu0
    %484 = vmatpush.bf16.msra.mxu0 0
    %485 = vmatpush.bf16.msra.mxu0 0
    %486 = vmatpush.bf16.msra.mxu0 0
    %487 = vmatpush.bf16.msra.mxu0 0
    %488 = vmatpush.bf16.msra.mxu0 0
    %489 = vmatpush.bf16.msra.mxu0 0
    %490 = vmatpush.bf16.msra.mxu0 %v444
    %491 = vmatpush.bf16.msra.mxu0 %v441
    %492 = vmatmul.bf16.gmra.mxu0 %v243
    %v493 = vpop.f32.mrf.mxu0
    %v494 = vadd.f32 %v454, %v493
    %v495 = vpop.f32.mrf.mxu0
    %496 = vdwg.mxu0
    %v497 = vadd.f32 %v390, %v468
    %v498 = vxor.u32 %v497, 2147483648
    %v499 = vmul.f32 %v498, 1.442695
    %v500 = vpow.pop %v499
    %v501 = vadd.f32 %v500, 1.0
    %v502 = vrcp.pop %v501
    %v503 = vmul.f32 %v501, %v502
    %v504 = vsub.f32 1.0, %v503
    %v505 = vmul.f32 %v502, %v504
    %v506 = vadd.f32 %v502, %v505
    %vm507 = vweird.f32 %v501
    %vm508 = vweird.f32 %v502
    %vm509 = vmor %vm507, %vm508
    %v510 = vsel %vm509, %v502, %v506
    %v511 = vand.u32 2147483647, %v501
    %vm512 = vcmp.eq.f32.partialorder %v511, 8.507059e+37
    %v513 = vand.u32 %v501, 2147483648
    %v514 = vor.u32 1.1754944e-38, %v513
    %v515 = vsel %vm512, %v514, %v510
    %v516 = vmul.f32 1.0, %v515
    %v517 = vadd.f32 %v403, %v481
    %v518 = vxor.u32 %v517, 2147483648
    %v519 = vmul.f32 %v518, 1.442695
    %v520 = vpow.pop %v519
    %v521 = vadd.f32 %v520, 1.0
    %v522 = vrcp.pop %v521
    %v523 = vmul.f32 %v521, %v522
    %v524 = vsub.f32 1.0, %v523
    %v525 = vmul.f32 %v522, %v524
    %v526 = vadd.f32 %v522, %v525
    %vm527 = vweird.f32 %v521
    %vm528 = vweird.f32 %v522
    %vm529 = vmor %vm527, %vm528
    %v530 = vsel %vm529, %v522, %v526
    %v531 = vand.u32 2147483647, %v521
    %vm532 = vcmp.eq.f32.partialorder %v531, 8.507059e+37
    %v533 = vand.u32 %v521, 2147483648
    %v534 = vor.u32 1.1754944e-38, %v533
    %v535 = vsel %vm532, %v534, %v530
    %v536 = vmul.f32 1.0, %v535
    %v537 = vmul.f32 %v516, %v494
    %v538 = vadd.f32 %v416, %v537
    %v539 = vtanh.pop %v538
    %v540 = vsub.f32 1.0, %v536
    %v541 = vmul.f32 %v540, %v539
    %v542 = vmul.f32 %v536, 0.0
    %v543 = vadd.f32 %v541, %v542
    %vm544 = vcmask 253952
    %545 = vst.msk [vmem:[#allocation2] sm:$0x1] %vm544, %v330
    %546 = vst.msk [vmem:[#allocation3 + $0x7] sm:$0x1] %vm544, %v543
    %v547 = vld [vmem:[%s0] sm:$0x1]
    %v548 = vld [vmem:[%s0] sm:$0x8]
    %v550 = vunpack.c.l.b16 %v547
    %v551 = vpack.c.b16 %v550, %v550
    %v553 = vshrl.u32 %v551, 16
    %v556 = vsel %vm160, %v553, 0
    %558 = vmatpush.bf16.msra.mxu0 0
    %559 = vmatpush.bf16.msra.mxu0 0
    %560 = vmatpush.bf16.msra.mxu0 0
    %561 = vmatpush.bf16.msra.mxu0 0
    %562 = vmatpush.bf16.msra.mxu0 0
    %563 = vmatpush.bf16.msra.mxu0 0
    %564 = vmatpush.bf16.msra.mxu0 %v144
    %565 = vmatpush.bf16.msra.mxu0 %v141
    %566 = vmatmul.bf16.gmra.mxu0 %v556
    %v567 = vpop.f32.mrf.mxu0
    %v568 = vadd.f32 %v154, %v567
    %v569 = vpop.f32.mrf.mxu0
    %570 = vdwg.mxu0
    %571 = vmatpush.bf16.msra.mxu0 0
    %572 = vmatpush.bf16.msra.mxu0 0
    %573 = vmatpush.bf16.msra.mxu0 0
    %574 = vmatpush.bf16.msra.mxu0 0
    %575 = vmatpush.bf16.msra.mxu0 0
    %576 = vmatpush.bf16.msra.mxu0 0
    %577 = vmatpush.bf16.msra.mxu0 %v145
    %578 = vmatpush.bf16.msra.mxu0 %v142
    %579 = vmatmul.bf16.gmra.mxu0 %v556
    %v580 = vpop.f32.mrf.mxu0
    %v581 = vadd.f32 %v155, %v580
    %v582 = vpop.f32.mrf.mxu0
    %583 = vdwg.mxu0
    %584 = vmatpush.bf16.msra.mxu0 0
    %585 = vmatpush.bf16.msra.mxu0 0
    %586 = vmatpush.bf16.msra.mxu0 0
    %587 = vmatpush.bf16.msra.mxu0 0
    %588 = vmatpush.bf16.msra.mxu0 0
    %589 = vmatpush.bf16.msra.mxu0 0
    %590 = vmatpush.bf16.msra.mxu0 %v146
    %591 = vmatpush.bf16.msra.mxu0 %v143
    %592 = vmatmul.bf16.gmra.mxu0 %v556
    %v593 = vpop.f32.mrf.mxu0
    %v594 = vadd.f32 %v156, %v593
    %v595 = vpop.f32.mrf.mxu0
    %596 = vdwg.mxu0
    %v597 = vpack.c.bf16 %v330, %v330
    %v599 = vsel %vm160, %v597, 0
    %601 = vmatpush.bf16.msra.mxu0 0
    %602 = vmatpush.bf16.msra.mxu0 0
    %603 = vmatpush.bf16.msra.mxu0 0
    %604 = vmatpush.bf16.msra.mxu0 0
    %605 = vmatpush.bf16.msra.mxu0 0
    %606 = vmatpush.bf16.msra.mxu0 0
    %607 = vmatpush.bf16.msra.mxu0 %v226
    %608 = vmatpush.bf16.msra.mxu0 %v223
    %609 = vmatmul.bf16.gmra.mxu0 %v599
    %v610 = vpop.f32.mrf.mxu0
    %v611 = vadd.f32 %v236, %v610
    %v612 = vpop.f32.mrf.mxu0
    %613 = vdwg.mxu0
    %614 = vmatpush.bf16.msra.mxu0 0
    %615 = vmatpush.bf16.msra.mxu0 0
    %616 = vmatpush.bf16.msra.mxu0 0
    %617 = vmatpush.bf16.msra.mxu0 0
    %618 = vmatpush.bf16.msra.mxu0 0
    %619 = vmatpush.bf16.msra.mxu0 0
    %620 = vmatpush.bf16.msra.mxu0 %v227
    %621 = vmatpush.bf16.msra.mxu0 %v224
    %622 = vmatmul.bf16.gmra.mxu0 %v599
    %v623 = vpop.f32.mrf.mxu0
    %v624 = vadd.f32 %v237, %v623
    %v625 = vpop.f32.mrf.mxu0
    %626 = vdwg.mxu0
    %627 = vmatpush.bf16.msra.mxu0 0
    %628 = vmatpush.bf16.msra.mxu0 0
    %629 = vmatpush.bf16.msra.mxu0 0
    %630 = vmatpush.bf16.msra.mxu0 0
    %631 = vmatpush.bf16.msra.mxu0 0
    %632 = vmatpush.bf16.msra.mxu0 0
    %633 = vmatpush.bf16.msra.mxu0 %v228
    %634 = vmatpush.bf16.msra.mxu0 %v225
    %635 = vmatmul.bf16.gmra.mxu0 %v599
    %v636 = vpop.f32.mrf.mxu0
    %v637 = vadd.f32 %v238, %v636
    %v638 = vpop.f32.mrf.mxu0
    %639 = vdwg.mxu0
    %v640 = vadd.f32 %v568, %v611
    %v641 = vxor.u32 %v640, 2147483648
    %v642 = vmul.f32 %v641, 1.442695
    %v643 = vpow.pop %v642
    %v644 = vadd.f32 %v643, 1.0
    %v645 = vrcp.pop %v644
    %v646 = vmul.f32 %v644, %v645
    %v647 = vsub.f32 1.0, %v646
    %v648 = vmul.f32 %v645, %v647
    %v649 = vadd.f32 %v645, %v648
    %vm650 = vweird.f32 %v644
    %vm651 = vweird.f32 %v645
    %vm652 = vmor %vm650, %vm651
    %v653 = vsel %vm652, %v645, %v649
    %v654 = vand.u32 2147483647, %v644
    %vm655 = vcmp.eq.f32.partialorder %v654, 8.507059e+37
    %v656 = vand.u32 %v644, 2147483648
    %v657 = vor.u32 1.1754944e-38, %v656
    %v658 = vsel %vm655, %v657, %v653
    %v659 = vmul.f32 1.0, %v658
    %v660 = vadd.f32 %v581, %v624
    %v661 = vxor.u32 %v660, 2147483648
    %v662 = vmul.f32 %v661, 1.442695
    %v663 = vpow.pop %v662
    %v664 = vadd.f32 %v663, 1.0
    %v665 = vrcp.pop %v664
    %v666 = vmul.f32 %v664, %v665
    %v667 = vsub.f32 1.0, %v666
    %v668 = vmul.f32 %v665, %v667
    %v669 = vadd.f32 %v665, %v668
    %vm670 = vweird.f32 %v664
    %vm671 = vweird.f32 %v665
    %vm672 = vmor %vm670, %vm671
    %v673 = vsel %vm672, %v665, %v669
    %v674 = vand.u32 2147483647, %v664
    %vm675 = vcmp.eq.f32.partialorder %v674, 8.507059e+37
    %v676 = vand.u32 %v664, 2147483648
    %v677 = vor.u32 1.1754944e-38, %v676
    %v678 = vsel %vm675, %v677, %v673
    %v679 = vmul.f32 1.0, %v678
    %v680 = vmul.f32 %v659, %v637
    %v681 = vadd.f32 %v594, %v680
    %v682 = vtanh.pop %v681
    %v683 = vsub.f32 1.0, %v679
    %v684 = vmul.f32 %v683, %v682
    %v685 = vmul.f32 %v679, %v330
    %v686 = vadd.f32 %v684, %v685
    %v688 = vunpack.c.l.b16 %v548
    %v689 = vpack.c.b16 %v688, %v688
    %v690 = vrot.slane %v689, 3
    %v692 = vsel %vm160, %v690, 0
    %694 = vmatpush.bf16.msra.mxu0 0
    %695 = vmatpush.bf16.msra.mxu0 0
    %696 = vmatpush.bf16.msra.mxu0 0
    %697 = vmatpush.bf16.msra.mxu0 0
    %698 = vmatpush.bf16.msra.mxu0 0
    %699 = vmatpush.bf16.msra.mxu0 0
    %700 = vmatpush.bf16.msra.mxu0 %v361
    %701 = vmatpush.bf16.msra.mxu0 %v358
    %702 = vmatmul.bf16.gmra.mxu0 %v692
    %v703 = vpop.f32.mrf.mxu0
    %v704 = vadd.f32 %v371, %v703
    %v705 = vpop.f32.mrf.mxu0
    %706 = vdwg.mxu0
    %707 = vmatpush.bf16.msra.mxu0 0
    %708 = vmatpush.bf16.msra.mxu0 0
    %709 = vmatpush.bf16.msra.mxu0 0
    %710 = vmatpush.bf16.msra.mxu0 0
    %711 = vmatpush.bf16.msra.mxu0 0
    %712 = vmatpush.bf16.msra.mxu0 0
    %713 = vmatpush.bf16.msra.mxu0 %v362
    %714 = vmatpush.bf16.msra.mxu0 %v359
    %715 = vmatmul.bf16.gmra.mxu0 %v692
    %v716 = vpop.f32.mrf.mxu0
    %v717 = vadd.f32 %v372, %v716
    %v718 = vpop.f32.mrf.mxu0
    %719 = vdwg.mxu0
    %720 = vmatpush.bf16.msra.mxu0 0
    %721 = vmatpush.bf16.msra.mxu0 0
    %722 = vmatpush.bf16.msra.mxu0 0
    %723 = vmatpush.bf16.msra.mxu0 0
    %724 = vmatpush.bf16.msra.mxu0 0
    %725 = vmatpush.bf16.msra.mxu0 0
    %726 = vmatpush.bf16.msra.mxu0 %v363
    %727 = vmatpush.bf16.msra.mxu0 %v360
    %728 = vmatmul.bf16.gmra.mxu0 %v692
    %v729 = vpop.f32.mrf.mxu0
    %v730 = vadd.f32 %v373, %v729
    %v731 = vpop.f32.mrf.mxu0
    %732 = vdwg.mxu0
    %v733 = vpack.c.bf16 %v543, %v543
    %v735 = vsel %vm160, %v733, 0
    %737 = vmatpush.bf16.msra.mxu0 0
    %738 = vmatpush.bf16.msra.mxu0 0
    %739 = vmatpush.bf16.msra.mxu0 0
    %740 = vmatpush.bf16.msra.mxu0 0
    %741 = vmatpush.bf16.msra.mxu0 0
    %742 = vmatpush.bf16.msra.mxu0 0
    %743 = vmatpush.bf16.msra.mxu0 %v442
    %744 = vmatpush.bf16.msra.mxu0 %v439
    %745 = vmatmul.bf16.gmra.mxu0 %v735
    %v746 = vpop.f32.mrf.mxu0
    %v747 = vadd.f32 %v452, %v746
    %v748 = vpop.f32.mrf.mxu0
    %749 = vdwg.mxu0
    %750 = vmatpush.bf16.msra.mxu0 0
    %751 = vmatpush.bf16.msra.mxu0 0
    %752 = vmatpush.bf16.msra.mxu0 0
    %753 = vmatpush.bf16.msra.mxu0 0
    %754 = vmatpush.bf16.msra.mxu0 0
    %755 = vmatpush.bf16.msra.mxu0 0
    %756 = vmatpush.bf16.msra.mxu0 %v443
    %757 = vmatpush.bf16.msra.mxu0 %v440
    %758 = vmatmul.bf16.gmra.mxu0 %v735
    %v759 = vpop.f32.mrf.mxu0
    %v760 = vadd.f32 %v453, %v759
    %v761 = vpop.f32.mrf.mxu0
    %762 = vdwg.mxu0
    %763 = vmatpush.bf16.msra.mxu0 0
    %764 = vmatpush.bf16.msra.mxu0 0
    %765 = vmatpush.bf16.msra.mxu0 0
    %766 = vmatpush.bf16.msra.mxu0 0
    %767 = vmatpush.bf16.msra.mxu0 0
    %768 = vmatpush.bf16.msra.mxu0 0
    %769 = vmatpush.bf16.msra.mxu0 %v444
    %770 = vmatpush.bf16.msra.mxu0 %v441
    %771 = vmatmul.bf16.gmra.mxu0 %v735
    %v772 = vpop.f32.mrf.mxu0
    %v773 = vadd.f32 %v454, %v772
    %v774 = vpop.f32.mrf.mxu0
    %775 = vdwg.mxu0
    %v776 = vadd.f32 %v704, %v747
    %v777 = vxor.u32 %v776, 2147483648
    %v778 = vmul.f32 %v777, 1.442695
    %v779 = vpow.pop %v778
    %v780 = vadd.f32 %v779, 1.0
    %v781 = vrcp.pop %v780
    %v782 = vmul.f32 %v780, %v781
    %v783 = vsub.f32 1.0, %v782
    %v784 = vmul.f32 %v781, %v783
    %v785 = vadd.f32 %v781, %v784
    %vm786 = vweird.f32 %v780
    %vm787 = vweird.f32 %v781
    %vm788 = vmor %vm786, %vm787
    %v789 = vsel %vm788, %v781, %v785
    %v790 = vand.u32 2147483647, %v780
    %vm791 = vcmp.eq.f32.partialorder %v790, 8.507059e+37
    %v792 = vand.u32 %v780, 2147483648
    %v793 = vor.u32 1.1754944e-38, %v792
    %v794 = vsel %vm791, %v793, %v789
    %v795 = vmul.f32 1.0, %v794
    %v796 = vadd.f32 %v717, %v760
    %v797 = vxor.u32 %v796, 2147483648
    %v798 = vmul.f32 %v797, 1.442695
    %v799 = vpow.pop %v798
    %v800 = vadd.f32 %v799, 1.0
    %v801 = vrcp.pop %v800
    %v802 = vmul.f32 %v800, %v801
    %v803 = vsub.f32 1.0, %v802
    %v804 = vmul.f32 %v801, %v803
    %v805 = vadd.f32 %v801, %v804
    %vm806 = vweird.f32 %v800
    %vm807 = vweird.f32 %v801
    %vm808 = vmor %vm806, %vm807
    %v809 = vsel %vm808, %v801, %v805
    %v810 = vand.u32 2147483647, %v800
    %vm811 = vcmp.eq.f32.partialorder %v810, 8.507059e+37
    %v812 = vand.u32 %v800, 2147483648
    %v813 = vor.u32 1.1754944e-38, %v812
    %v814 = vsel %vm811, %v813, %v809
    %v815 = vmul.f32 1.0, %v814
    %v816 = vmul.f32 %v795, %v773
    %v817 = vadd.f32 %v730, %v816
    %v818 = vtanh.pop %v817
    %v819 = vsub.f32 1.0, %v815
    %v820 = vmul.f32 %v819, %v818
    %v821 = vmul.f32 %v815, %v543
    %v822 = vadd.f32 %v820, %v821
    %823 = vst.msk [vmem:[#allocation2 + $0x1] sm:$0x1] %vm544, %v686
    %824 = vst.msk [vmem:[#allocation3 + $0x6] sm:$0x1] %vm544, %v822
    %v825 = vld [vmem:[%s0] sm:$0x2]
    %v826 = vld [vmem:[%s0] sm:$0x4]
    %v828 = vunpack.c.l.b16 %v825
    %v829 = vpack.c.b16 %v828, %v828
    %v830 = vrot.slane %v829, 1
    %v832 = vsel %vm160, %v830, 0
    %834 = vmatpush.bf16.msra.mxu0 0
    %835 = vmatpush.bf16.msra.mxu0 0
    %836 = vmatpush.bf16.msra.mxu0 0
    %837 = vmatpush.bf16.msra.mxu0 0
    %838 = vmatpush.bf16.msra.mxu0 0
    %839 = vmatpush.bf16.msra.mxu0 0
    %840 = vmatpush.bf16.msra.mxu0 %v144
    %841 = vmatpush.bf16.msra.mxu0 %v141
    %842 = vmatmul.bf16.gmra.mxu0 %v832
    %v843 = vpop.f32.mrf.mxu0
    %v844 = vadd.f32 %v154, %v843
    %v845 = vpop.f32.mrf.mxu0
    %846 = vdwg.mxu0
    %847 = vmatpush.bf16.msra.mxu0 0
    %848 = vmatpush.bf16.msra.mxu0 0
    %849 = vmatpush.bf16.msra.mxu0 0
    %850 = vmatpush.bf16.msra.mxu0 0
    %851 = vmatpush.bf16.msra.mxu0 0
    %852 = vmatpush.bf16.msra.mxu0 0
    %853 = vmatpush.bf16.msra.mxu0 %v145
    %854 = vmatpush.bf16.msra.mxu0 %v142
    %855 = vmatmul.bf16.gmra.mxu0 %v832
    %v856 = vpop.f32.mrf.mxu0
    %v857 = vadd.f32 %v155, %v856
    %v858 = vpop.f32.mrf.mxu0
    %859 = vdwg.mxu0
    %860 = vmatpush.bf16.msra.mxu0 0
    %861 = vmatpush.bf16.msra.mxu0 0
    %862 = vmatpush.bf16.msra.mxu0 0
    %863 = vmatpush.bf16.msra.mxu0 0
    %864 = vmatpush.bf16.msra.mxu0 0
    %865 = vmatpush.bf16.msra.mxu0 0
    %866 = vmatpush.bf16.msra.mxu0 %v146
    %867 = vmatpush.bf16.msra.mxu0 %v143
    %868 = vmatmul.bf16.gmra.mxu0 %v832
    %v869 = vpop.f32.mrf.mxu0
    %v870 = vadd.f32 %v156, %v869
    %v871 = vpop.f32.mrf.mxu0
    %872 = vdwg.mxu0
    %v873 = vpack.c.bf16 %v686, %v686
    %v875 = vsel %vm160, %v873, 0
    %877 = vmatpush.bf16.msra.mxu0 0
    %878 = vmatpush.bf16.msra.mxu0 0
    %879 = vmatpush.bf16.msra.mxu0 0
    %880 = vmatpush.bf16.msra.mxu0 0
    %881 = vmatpush.bf16.msra.mxu0 0
    %882 = vmatpush.bf16.msra.mxu0 0
    %883 = vmatpush.bf16.msra.mxu0 %v226
    %884 = vmatpush.bf16.msra.mxu0 %v223
    %885 = vmatmul.bf16.gmra.mxu0 %v875
    %v886 = vpop.f32.mrf.mxu0
    %v887 = vadd.f32 %v236, %v886
    %v888 = vpop.f32.mrf.mxu0
    %889 = vdwg.mxu0
    %890 = vmatpush.bf16.msra.mxu0 0
    %891 = vmatpush.bf16.msra.mxu0 0
    %892 = vmatpush.bf16.msra.mxu0 0
    %893 = vmatpush.bf16.msra.mxu0 0
    %894 = vmatpush.bf16.msra.mxu0 0
    %895 = vmatpush.bf16.msra.mxu0 0
    %896 = vmatpush.bf16.msra.mxu0 %v227
    %897 = vmatpush.bf16.msra.mxu0 %v224
    %898 = vmatmul.bf16.gmra.mxu0 %v875
    %v899 = vpop.f32.mrf.mxu0
    %v900 = vadd.f32 %v237, %v899
    %v901 = vpop.f32.mrf.mxu0
    %902 = vdwg.mxu0
    %903 = vmatpush.bf16.msra.mxu0 0
    %904 = vmatpush.bf16.msra.mxu0 0
    %905 = vmatpush.bf16.msra.mxu0 0
    %906 = vmatpush.bf16.msra.mxu0 0
    %907 = vmatpush.bf16.msra.mxu0 0
    %908 = vmatpush.bf16.msra.mxu0 0
    %909 = vmatpush.bf16.msra.mxu0 %v228
    %910 = vmatpush.bf16.msra.mxu0 %v225
    %911 = vmatmul.bf16.gmra.mxu0 %v875
    %v912 = vpop.f32.mrf.mxu0
    %v913 = vadd.f32 %v238, %v912
    %v914 = vpop.f32.mrf.mxu0
    %915 = vdwg.mxu0
    %v916 = vadd.f32 %v844, %v887
    %v917 = vxor.u32 %v916, 2147483648
    %v918 = vmul.f32 %v917, 1.442695
    %v919 = vpow.pop %v918
    %v920 = vadd.f32 %v919, 1.0
    %v921 = vrcp.pop %v920
    %v922 = vmul.f32 %v920, %v921
    %v923 = vsub.f32 1.0, %v922
    %v924 = vmul.f32 %v921, %v923
    %v925 = vadd.f32 %v921, %v924
    %vm926 = vweird.f32 %v920
    %vm927 = vweird.f32 %v921
    %vm928 = vmor %vm926, %vm927
    %v929 = vsel %vm928, %v921, %v925
    %v930 = vand.u32 2147483647, %v920
    %vm931 = vcmp.eq.f32.partialorder %v930, 8.507059e+37
    %v932 = vand.u32 %v920, 2147483648
    %v933 = vor.u32 1.1754944e-38, %v932
    %v934 = vsel %vm931, %v933, %v929
    %v935 = vmul.f32 1.0, %v934
    %v936 = vadd.f32 %v857, %v900
    %v937 = vxor.u32 %v936, 2147483648
    %v938 = vmul.f32 %v937, 1.442695
    %v939 = vpow.pop %v938
    %v940 = vadd.f32 %v939, 1.0
    %v941 = vrcp.pop %v940
    %v942 = vmul.f32 %v940, %v941
    %v943 = vsub.f32 1.0, %v942
    %v944 = vmul.f32 %v941, %v943
    %v945 = vadd.f32 %v941, %v944
    %vm946 = vweird.f32 %v940
    %vm947 = vweird.f32 %v941
    %vm948 = vmor %vm946, %vm947
    %v949 = vsel %vm948, %v941, %v945
    %v950 = vand.u32 2147483647, %v940
    %vm951 = vcmp.eq.f32.partialorder %v950, 8.507059e+37
    %v952 = vand.u32 %v940, 2147483648
    %v953 = vor.u32 1.1754944e-38, %v952
    %v954 = vsel %vm951, %v953, %v949
    %v955 = vmul.f32 1.0, %v954
    %v956 = vmul.f32 %v935, %v913
    %v957 = vadd.f32 %v870, %v956
    %v958 = vtanh.pop %v957
    %v959 = vsub.f32 1.0, %v955
    %v960 = vmul.f32 %v959, %v958
    %v961 = vmul.f32 %v955, %v686
    %v962 = vadd.f32 %v960, %v961
    %v964 = vunpack.c.l.b16 %v826
    %v965 = vpack.c.b16 %v964, %v964
    %v967 = vshrl.u32 %v965, 16
    %v969 = vrot.slane %v967, 2
    %v971 = vsel %vm160, %v969, 0
    %973 = vmatpush.bf16.msra.mxu0 0
    %974 = vmatpush.bf16.msra.mxu0 0
    %975 = vmatpush.bf16.msra.mxu0 0
    %976 = vmatpush.bf16.msra.mxu0 0
    %977 = vmatpush.bf16.msra.mxu0 0
    %978 = vmatpush.bf16.msra.mxu0 0
    %979 = vmatpush.bf16.msra.mxu0 %v361
    %980 = vmatpush.bf16.msra.mxu0 %v358
    %981 = vmatmul.bf16.gmra.mxu0 %v971
    %v982 = vpop.f32.mrf.mxu0
    %v983 = vadd.f32 %v371, %v982
    %v984 = vpop.f32.mrf.mxu0
    %985 = vdwg.mxu0
    %986 = vmatpush.bf16.msra.mxu0 0
    %987 = vmatpush.bf16.msra.mxu0 0
    %988 = vmatpush.bf16.msra.mxu0 0
    %989 = vmatpush.bf16.msra.mxu0 0
    %990 = vmatpush.bf16.msra.mxu0 0
    %991 = vmatpush.bf16.msra.mxu0 0
    %992 = vmatpush.bf16.msra.mxu0 %v362
    %993 = vmatpush.bf16.msra.mxu0 %v359
    %994 = vmatmul.bf16.gmra.mxu0 %v971
    %v995 = vpop.f32.mrf.mxu0
    %v996 = vadd.f32 %v372, %v995
    %v997 = vpop.f32.mrf.mxu0
    %998 = vdwg.mxu0
    %999 = vmatpush.bf16.msra.mxu0 0
    %1000 = vmatpush.bf16.msra.mxu0 0
    %1001 = vmatpush.bf16.msra.mxu0 0
    %1002 = vmatpush.bf16.msra.mxu0 0
    %1003 = vmatpush.bf16.msra.mxu0 0
    %1004 = vmatpush.bf16.msra.mxu0 0
    %1005 = vmatpush.bf16.msra.mxu0 %v363
    %1006 = vmatpush.bf16.msra.mxu0 %v360
    %1007 = vmatmul.bf16.gmra.mxu0 %v971
    %v1008 = vpop.f32.mrf.mxu0
    %v1009 = vadd.f32 %v373, %v1008
    %v1010 = vpop.f32.mrf.mxu0
    %1011 = vdwg.mxu0
    %v1012 = vpack.c.bf16 %v822, %v822
    %v1014 = vsel %vm160, %v1012, 0
    %1016 = vmatpush.bf16.msra.mxu0 0
    %1017 = vmatpush.bf16.msra.mxu0 0
    %1018 = vmatpush.bf16.msra.mxu0 0
    %1019 = vmatpush.bf16.msra.mxu0 0
    %1020 = vmatpush.bf16.msra.mxu0 0
    %1021 = vmatpush.bf16.msra.mxu0 0
    %1022 = vmatpush.bf16.msra.mxu0 %v442
    %1023 = vmatpush.bf16.msra.mxu0 %v439
    %1024 = vmatmul.bf16.gmra.mxu0 %v1014
    %v1025 = vpop.f32.mrf.mxu0
    %v1026 = vadd.f32 %v452, %v1025
    %v1027 = vpop.f32.mrf.mxu0
    %1028 = vdwg.mxu0
    %1029 = vmatpush.bf16.msra.mxu0 0
    %1030 = vmatpush.bf16.msra.mxu0 0
    %1031 = vmatpush.bf16.msra.mxu0 0
    %1032 = vmatpush.bf16.msra.mxu0 0
    %1033 = vmatpush.bf16.msra.mxu0 0
    %1034 = vmatpush.bf16.msra.mxu0 0
    %1035 = vmatpush.bf16.msra.mxu0 %v443
    %1036 = vmatpush.bf16.msra.mxu0 %v440
    %1037 = vmatmul.bf16.gmra.mxu0 %v1014
    %v1038 = vpop.f32.mrf.mxu0
    %v1039 = vadd.f32 %v453, %v1038
    %v1040 = vpop.f32.mrf.mxu0
    %1041 = vdwg.mxu0
    %1042 = vmatpush.bf16.msra.mxu0 0
    %1043 = vmatpush.bf16.msra.mxu0 0
    %1044 = vmatpush.bf16.msra.mxu0 0
    %1045 = vmatpush.bf16.msra.mxu0 0
    %1046 = vmatpush.bf16.msra.mxu0 0
    %1047 = vmatpush.bf16.msra.mxu0 0
    %1048 = vmatpush.bf16.msra.mxu0 %v444
    %1049 = vmatpush.bf16.msra.mxu0 %v441
    %1050 = vmatmul.bf16.gmra.mxu0 %v1014
    %v1051 = vpop.f32.mrf.mxu0
    %v1052 = vadd.f32 %v454, %v1051
    %v1053 = vpop.f32.mrf.mxu0
    %1054 = vdwg.mxu0
    %v1055 = vadd.f32 %v983, %v1026
    %v1056 = vxor.u32 %v1055, 2147483648
    %v1057 = vmul.f32 %v1056, 1.442695
    %v1058 = vpow.pop %v1057
    %v1059 = vadd.f32 %v1058, 1.0
    %v1060 = vrcp.pop %v1059
    %v1061 = vmul.f32 %v1059, %v1060
    %v1062 = vsub.f32 1.0, %v1061
    %v1063 = vmul.f32 %v1060, %v1062
    %v1064 = vadd.f32 %v1060, %v1063
    %vm1065 = vweird.f32 %v1059
    %vm1066 = vweird.f32 %v1060
    %vm1067 = vmor %vm1065, %vm1066
    %v1068 = vsel %vm1067, %v1060, %v1064
    %v1069 = vand.u32 2147483647, %v1059
    %vm1070 = vcmp.eq.f32.partialorder %v1069, 8.507059e+37
    %v1071 = vand.u32 %v1059, 2147483648
    %v1072 = vor.u32 1.1754944e-38, %v1071
    %v1073 = vsel %vm1070, %v1072, %v1068
    %v1074 = vmul.f32 1.0, %v1073
    %v1075 = vadd.f32 %v996, %v1039
    %v1076 = vxor.u32 %v1075, 2147483648
    %v1077 = vmul.f32 %v1076, 1.442695
    %v1078 = vpow.pop %v1077
    %v1079 = vadd.f32 %v1078, 1.0
    %v1080 = vrcp.pop %v1079
    %v1081 = vmul.f32 %v1079, %v1080
    %v1082 = vsub.f32 1.0, %v1081
    %v1083 = vmul.f32 %v1080, %v1082
    %v1084 = vadd.f32 %v1080, %v1083
    %vm1085 = vweird.f32 %v1079
    %vm1086 = vweird.f32 %v1080
    %vm1087 = vmor %vm1085, %vm1086
    %v1088 = vsel %vm1087, %v1080, %v1084
    %v1089 = vand.u32 2147483647, %v1079
    %vm1090 = vcmp.eq.f32.partialorder %v1089, 8.507059e+37
    %v1091 = vand.u32 %v1079, 2147483648
    %v1092 = vor.u32 1.1754944e-38, %v1091
    %v1093 = vsel %vm1090, %v1092, %v1088
    %v1094 = vmul.f32 1.0, %v1093
    %v1095 = vmul.f32 %v1074, %v1052
    %v1096 = vadd.f32 %v1009, %v1095
    %v1097 = vtanh.pop %v1096
    %v1098 = vsub.f32 1.0, %v1094
    %v1099 = vmul.f32 %v1098, %v1097
    %v1100 = vmul.f32 %v1094, %v822
    %v1101 = vadd.f32 %v1099, %v1100
    %1102 = vst.msk [vmem:[#allocation2 + $0x2] sm:$0x1] %vm544, %v962
    %1103 = vst.msk [vmem:[#allocation3 + $0x5] sm:$0x1] %vm544, %v1101
    %v1104 = vld [vmem:[%s0] sm:$0x2]
    %v1105 = vld [vmem:[%s0] sm:$0x4]
    %v1107 = vunpack.c.l.b16 %v1104
    %v1108 = vpack.c.b16 %v1107, %v1107
    %v1110 = vshrl.u32 %v1108, 16
    %v1112 = vrot.slane %v1110, 1
    %v1114 = vsel %vm160, %v1112, 0
    %1116 = vmatpush.bf16.msra.mxu0 0
    %1117 = vmatpush.bf16.msra.mxu0 0
    %1118 = vmatpush.bf16.msra.mxu0 0
    %1119 = vmatpush.bf16.msra.mxu0 0
    %1120 = vmatpush.bf16.msra.mxu0 0
    %1121 = vmatpush.bf16.msra.mxu0 0
    %1122 = vmatpush.bf16.msra.mxu0 %v144
    %1123 = vmatpush.bf16.msra.mxu0 %v141
    %1124 = vmatmul.bf16.gmra.mxu0 %v1114
    %v1125 = vpop.f32.mrf.mxu0
    %v1126 = vadd.f32 %v154, %v1125
    %v1127 = vpop.f32.mrf.mxu0
    %1128 = vdwg.mxu0
    %1129 = vmatpush.bf16.msra.mxu0 0
    %1130 = vmatpush.bf16.msra.mxu0 0
    %1131 = vmatpush.bf16.msra.mxu0 0
    %1132 = vmatpush.bf16.msra.mxu0 0
    %1133 = vmatpush.bf16.msra.mxu0 0
    %1134 = vmatpush.bf16.msra.mxu0 0
    %1135 = vmatpush.bf16.msra.mxu0 %v145
    %1136 = vmatpush.bf16.msra.mxu0 %v142
    %1137 = vmatmul.bf16.gmra.mxu0 %v1114
    %v1138 = vpop.f32.mrf.mxu0
    %v1139 = vadd.f32 %v155, %v1138
    %v1140 = vpop.f32.mrf.mxu0
    %1141 = vdwg.mxu0
    %1142 = vmatpush.bf16.msra.mxu0 0
    %1143 = vmatpush.bf16.msra.mxu0 0
    %1144 = vmatpush.bf16.msra.mxu0 0
    %1145 = vmatpush.bf16.msra.mxu0 0
    %1146 = vmatpush.bf16.msra.mxu0 0
    %1147 = vmatpush.bf16.msra.mxu0 0
    %1148 = vmatpush.bf16.msra.mxu0 %v146
    %1149 = vmatpush.bf16.msra.mxu0 %v143
    %1150 = vmatmul.bf16.gmra.mxu0 %v1114
    %v1151 = vpop.f32.mrf.mxu0
    %v1152 = vadd.f32 %v156, %v1151
    %v1153 = vpop.f32.mrf.mxu0
    %1154 = vdwg.mxu0
    %v1155 = vpack.c.bf16 %v962, %v962
    %v1157 = vsel %vm160, %v1155, 0
    %1159 = vmatpush.bf16.msra.mxu0 0
    %1160 = vmatpush.bf16.msra.mxu0 0
    %1161 = vmatpush.bf16.msra.mxu0 0
    %1162 = vmatpush.bf16.msra.mxu0 0
    %1163 = vmatpush.bf16.msra.mxu0 0
    %1164 = vmatpush.bf16.msra.mxu0 0
    %1165 = vmatpush.bf16.msra.mxu0 %v226
    %1166 = vmatpush.bf16.msra.mxu0 %v223
    %1167 = vmatmul.bf16.gmra.mxu0 %v1157
    %v1168 = vpop.f32.mrf.mxu0
    %v1169 = vadd.f32 %v236, %v1168
    %v1170 = vpop.f32.mrf.mxu0
    %1171 = vdwg.mxu0
    %1172 = vmatpush.bf16.msra.mxu0 0
    %1173 = vmatpush.bf16.msra.mxu0 0
    %1174 = vmatpush.bf16.msra.mxu0 0
    %1175 = vmatpush.bf16.msra.mxu0 0
    %1176 = vmatpush.bf16.msra.mxu0 0
    %1177 = vmatpush.bf16.msra.mxu0 0
    %1178 = vmatpush.bf16.msra.mxu0 %v227
    %1179 = vmatpush.bf16.msra.mxu0 %v224
    %1180 = vmatmul.bf16.gmra.mxu0 %v1157
    %v1181 = vpop.f32.mrf.mxu0
    %v1182 = vadd.f32 %v237, %v1181
    %v1183 = vpop.f32.mrf.mxu0
    %1184 = vdwg.mxu0
    %1185 = vmatpush.bf16.msra.mxu0 0
    %1186 = vmatpush.bf16.msra.mxu0 0
    %1187 = vmatpush.bf16.msra.mxu0 0
    %1188 = vmatpush.bf16.msra.mxu0 0
    %1189 = vmatpush.bf16.msra.mxu0 0
    %1190 = vmatpush.bf16.msra.mxu0 0
    %1191 = vmatpush.bf16.msra.mxu0 %v228
    %1192 = vmatpush.bf16.msra.mxu0 %v225
    %1193 = vmatmul.bf16.gmra.mxu0 %v1157
    %v1194 = vpop.f32.mrf.mxu0
    %v1195 = vadd.f32 %v238, %v1194
    %v1196 = vpop.f32.mrf.mxu0
    %1197 = vdwg.mxu0
    %v1198 = vadd.f32 %v1126, %v1169
    %v1199 = vxor.u32 %v1198, 2147483648
    %v1200 = vmul.f32 %v1199, 1.442695
    %v1201 = vpow.pop %v1200
    %v1202 = vadd.f32 %v1201, 1.0
    %v1203 = vrcp.pop %v1202
    %v1204 = vmul.f32 %v1202, %v1203
    %v1205 = vsub.f32 1.0, %v1204
    %v1206 = vmul.f32 %v1203, %v1205
    %v1207 = vadd.f32 %v1203, %v1206
    %vm1208 = vweird.f32 %v1202
    %vm1209 = vweird.f32 %v1203
    %vm1210 = vmor %vm1208, %vm1209
    %v1211 = vsel %vm1210, %v1203, %v1207
    %v1212 = vand.u32 2147483647, %v1202
    %vm1213 = vcmp.eq.f32.partialorder %v1212, 8.507059e+37
    %v1214 = vand.u32 %v1202, 2147483648
    %v1215 = vor.u32 1.1754944e-38, %v1214
    %v1216 = vsel %vm1213, %v1215, %v1211
    %v1217 = vmul.f32 1.0, %v1216
    %v1218 = vadd.f32 %v1139, %v1182
    %v1219 = vxor.u32 %v1218, 2147483648
    %v1220 = vmul.f32 %v1219, 1.442695
    %v1221 = vpow.pop %v1220
    %v1222 = vadd.f32 %v1221, 1.0
    %v1223 = vrcp.pop %v1222
    %v1224 = vmul.f32 %v1222, %v1223
    %v1225 = vsub.f32 1.0, %v1224
    %v1226 = vmul.f32 %v1223, %v1225
    %v1227 = vadd.f32 %v1223, %v1226
    %vm1228 = vweird.f32 %v1222
    %vm1229 = vweird.f32 %v1223
    %vm1230 = vmor %vm1228, %vm1229
    %v1231 = vsel %vm1230, %v1223, %v1227
    %v1232 = vand.u32 2147483647, %v1222
    %vm1233 = vcmp.eq.f32.partialorder %v1232, 8.507059e+37
    %v1234 = vand.u32 %v1222, 2147483648
    %v1235 = vor.u32 1.1754944e-38, %v1234
    %v1236 = vsel %vm1233, %v1235, %v1231
    %v1237 = vmul.f32 1.0, %v1236
    %v1238 = vmul.f32 %v1217, %v1195
    %v1239 = vadd.f32 %v1152, %v1238
    %v1240 = vtanh.pop %v1239
    %v1241 = vsub.f32 1.0, %v1237
    %v1242 = vmul.f32 %v1241, %v1240
    %v1243 = vmul.f32 %v1237, %v962
    %v1244 = vadd.f32 %v1242, %v1243
    %v1246 = vunpack.c.l.b16 %v1105
    %v1247 = vpack.c.b16 %v1246, %v1246
    %v1248 = vrot.slane %v1247, 2
    %v1250 = vsel %vm160, %v1248, 0
    %1252 = vmatpush.bf16.msra.mxu0 0
    %1253 = vmatpush.bf16.msra.mxu0 0
    %1254 = vmatpush.bf16.msra.mxu0 0
    %1255 = vmatpush.bf16.msra.mxu0 0
    %1256 = vmatpush.bf16.msra.mxu0 0
    %1257 = vmatpush.bf16.msra.mxu0 0
    %1258 = vmatpush.bf16.msra.mxu0 %v361
    %1259 = vmatpush.bf16.msra.mxu0 %v358
    %1260 = vmatmul.bf16.gmra.mxu0 %v1250
    %v1261 = vpop.f32.mrf.mxu0
    %v1262 = vadd.f32 %v371, %v1261
    %v1263 = vpop.f32.mrf.mxu0
    %1264 = vdwg.mxu0
    %1265 = vmatpush.bf16.msra.mxu0 0
    %1266 = vmatpush.bf16.msra.mxu0 0
    %1267 = vmatpush.bf16.msra.mxu0 0
    %1268 = vmatpush.bf16.msra.mxu0 0
    %1269 = vmatpush.bf16.msra.mxu0 0
    %1270 = vmatpush.bf16.msra.mxu0 0
    %1271 = vmatpush.bf16.msra.mxu0 %v362
    %1272 = vmatpush.bf16.msra.mxu0 %v359
    %1273 = vmatmul.bf16.gmra.mxu0 %v1250
    %v1274 = vpop.f32.mrf.mxu0
    %v1275 = vadd.f32 %v372, %v1274
    %v1276 = vpop.f32.mrf.mxu0
    %1277 = vdwg.mxu0
    %1278 = vmatpush.bf16.msra.mxu0 0
    %1279 = vmatpush.bf16.msra.mxu0 0
    %1280 = vmatpush.bf16.msra.mxu0 0
    %1281 = vmatpush.bf16.msra.mxu0 0
    %1282 = vmatpush.bf16.msra.mxu0 0
    %1283 = vmatpush.bf16.msra.mxu0 0
    %1284 = vmatpush.bf16.msra.mxu0 %v363
    %1285 = vmatpush.bf16.msra.mxu0 %v360
    %1286 = vmatmul.bf16.gmra.mxu0 %v1250
    %v1287 = vpop.f32.mrf.mxu0
    %v1288 = vadd.f32 %v373, %v1287
    %v1289 = vpop.f32.mrf.mxu0
    %1290 = vdwg.mxu0
    %v1291 = vpack.c.bf16 %v1101, %v1101
    %v1293 = vsel %vm160, %v1291, 0
    %1295 = vmatpush.bf16.msra.mxu0 0
    %1296 = vmatpush.bf16.msra.mxu0 0
    %1297 = vmatpush.bf16.msra.mxu0 0
    %1298 = vmatpush.bf16.msra.mxu0 0
    %1299 = vmatpush.bf16.msra.mxu0 0
    %1300 = vmatpush.bf16.msra.mxu0 0
    %1301 = vmatpush.bf16.msra.mxu0 %v442
    %1302 = vmatpush.bf16.msra.mxu0 %v439
    %1303 = vmatmul.bf16.gmra.mxu0 %v1293
    %v1304 = vpop.f32.mrf.mxu0
    %v1305 = vadd.f32 %v452, %v1304
    %v1306 = vpop.f32.mrf.mxu0
    %1307 = vdwg.mxu0
    %1308 = vmatpush.bf16.msra.mxu0 0
    %1309 = vmatpush.bf16.msra.mxu0 0
    %1310 = vmatpush.bf16.msra.mxu0 0
    %1311 = vmatpush.bf16.msra.mxu0 0
    %1312 = vmatpush.bf16.msra.mxu0 0
    %1313 = vmatpush.bf16.msra.mxu0 0
    %1314 = vmatpush.bf16.msra.mxu0 %v443
    %1315 = vmatpush.bf16.msra.mxu0 %v440
    %1316 = vmatmul.bf16.gmra.mxu0 %v1293
    %v1317 = vpop.f32.mrf.mxu0
    %v1318 = vadd.f32 %v453, %v1317
    %v1319 = vpop.f32.mrf.mxu0
    %1320 = vdwg.mxu0
    %1321 = vmatpush.bf16.msra.mxu0 0
    %1322 = vmatpush.bf16.msra.mxu0 0
    %1323 = vmatpush.bf16.msra.mxu0 0
    %1324 = vmatpush.bf16.msra.mxu0 0
    %1325 = vmatpush.bf16.msra.mxu0 0
    %1326 = vmatpush.bf16.msra.mxu0 0
    %1327 = vmatpush.bf16.msra.mxu0 %v444
    %1328 = vmatpush.bf16.msra.mxu0 %v441
    %1329 = vmatmul.bf16.gmra.mxu0 %v1293
    %v1330 = vpop.f32.mrf.mxu0
    %v1331 = vadd.f32 %v454, %v1330
    %v1332 = vpop.f32.mrf.mxu0
    %1333 = vdwg.mxu0
    %v1334 = vadd.f32 %v1262, %v1305
    %v1335 = vxor.u32 %v1334, 2147483648
    %v1336 = vmul.f32 %v1335, 1.442695
    %v1337 = vpow.pop %v1336
    %v1338 = vadd.f32 %v1337, 1.0
    %v1339 = vrcp.pop %v1338
    %v1340 = vmul.f32 %v1338, %v1339
    %v1341 = vsub.f32 1.0, %v1340
    %v1342 = vmul.f32 %v1339, %v1341
    %v1343 = vadd.f32 %v1339, %v1342
    %vm1344 = vweird.f32 %v1338
    %vm1345 = vweird.f32 %v1339
    %vm1346 = vmor %vm1344, %vm1345
    %v1347 = vsel %vm1346, %v1339, %v1343
    %v1348 = vand.u32 2147483647, %v1338
    %vm1349 = vcmp.eq.f32.partialorder %v1348, 8.507059e+37
    %v1350 = vand.u32 %v1338, 2147483648
    %v1351 = vor.u32 1.1754944e-38, %v1350
    %v1352 = vsel %vm1349, %v1351, %v1347
    %v1353 = vmul.f32 1.0, %v1352
    %v1354 = vadd.f32 %v1275, %v1318
    %v1355 = vxor.u32 %v1354, 2147483648
    %v1356 = vmul.f32 %v1355, 1.442695
    %v1357 = vpow.pop %v1356
    %v1358 = vadd.f32 %v1357, 1.0
    %v1359 = vrcp.pop %v1358
    %v1360 = vmul.f32 %v1358, %v1359
    %v1361 = vsub.f32 1.0, %v1360
    %v1362 = vmul.f32 %v1359, %v1361
    %v1363 = vadd.f32 %v1359, %v1362
    %vm1364 = vweird.f32 %v1358
    %vm1365 = vweird.f32 %v1359
    %vm1366 = vmor %vm1364, %vm1365
    %v1367 = vsel %vm1366, %v1359, %v1363
    %v1368 = vand.u32 2147483647, %v1358
    %vm1369 = vcmp.eq.f32.partialorder %v1368, 8.507059e+37
    %v1370 = vand.u32 %v1358, 2147483648
    %v1371 = vor.u32 1.1754944e-38, %v1370
    %v1372 = vsel %vm1369, %v1371, %v1367
    %v1373 = vmul.f32 1.0, %v1372
    %v1374 = vmul.f32 %v1353, %v1331
    %v1375 = vadd.f32 %v1288, %v1374
    %v1376 = vtanh.pop %v1375
    %v1377 = vsub.f32 1.0, %v1373
    %v1378 = vmul.f32 %v1377, %v1376
    %v1379 = vmul.f32 %v1373, %v1101
    %v1380 = vadd.f32 %v1378, %v1379
    %1381 = vst.msk [vmem:[#allocation2 + $0x3] sm:$0x1] %vm544, %v1244
    %1382 = vst.msk [vmem:[#allocation3 + $0x4] sm:$0x1] %vm544, %v1380
    %v1383 = vld [vmem:[%s0] sm:$0x4]
    %v1384 = vld [vmem:[%s0] sm:$0x2]
    %v1386 = vunpack.c.l.b16 %v1383
    %v1387 = vpack.c.b16 %v1386, %v1386
    %v1388 = vrot.slane %v1387, 2
    %v1390 = vsel %vm160, %v1388, 0
    %1392 = vmatpush.bf16.msra.mxu0 0
    %1393 = vmatpush.bf16.msra.mxu0 0
    %1394 = vmatpush.bf16.msra.mxu0 0
    %1395 = vmatpush.bf16.msra.mxu0 0
    %1396 = vmatpush.bf16.msra.mxu0 0
    %1397 = vmatpush.bf16.msra.mxu0 0
    %1398 = vmatpush.bf16.msra.mxu0 %v144
    %1399 = vmatpush.bf16.msra.mxu0 %v141
    %1400 = vmatmul.bf16.gmra.mxu0 %v1390
    %v1401 = vpop.f32.mrf.mxu0
    %v1402 = vadd.f32 %v154, %v1401
    %v1403 = vpop.f32.mrf.mxu0
    %1404 = vdwg.mxu0
    %1405 = vmatpush.bf16.msra.mxu0 0
    %1406 = vmatpush.bf16.msra.mxu0 0
    %1407 = vmatpush.bf16.msra.mxu0 0
    %1408 = vmatpush.bf16.msra.mxu0 0
    %1409 = vmatpush.bf16.msra.mxu0 0
    %1410 = vmatpush.bf16.msra.mxu0 0
    %1411 = vmatpush.bf16.msra.mxu0 %v145
    %1412 = vmatpush.bf16.msra.mxu0 %v142
    %1413 = vmatmul.bf16.gmra.mxu0 %v1390
    %v1414 = vpop.f32.mrf.mxu0
    %v1415 = vadd.f32 %v155, %v1414
    %v1416 = vpop.f32.mrf.mxu0
    %1417 = vdwg.mxu0
    %1418 = vmatpush.bf16.msra.mxu0 0
    %1419 = vmatpush.bf16.msra.mxu0 0
    %1420 = vmatpush.bf16.msra.mxu0 0
    %1421 = vmatpush.bf16.msra.mxu0 0
    %1422 = vmatpush.bf16.msra.mxu0 0
    %1423 = vmatpush.bf16.msra.mxu0 0
    %1424 = vmatpush.bf16.msra.mxu0 %v146
    %1425 = vmatpush.bf16.msra.mxu0 %v143
    %1426 = vmatmul.bf16.gmra.mxu0 %v1390
    %v1427 = vpop.f32.mrf.mxu0
    %v1428 = vadd.f32 %v156, %v1427
    %v1429 = vpop.f32.mrf.mxu0
    %1430 = vdwg.mxu0
    %v1431 = vpack.c.bf16 %v1244, %v1244
    %v1433 = vsel %vm160, %v1431, 0
    %1435 = vmatpush.bf16.msra.mxu0 0
    %1436 = vmatpush.bf16.msra.mxu0 0
    %1437 = vmatpush.bf16.msra.mxu0 0
    %1438 = vmatpush.bf16.msra.mxu0 0
    %1439 = vmatpush.bf16.msra.mxu0 0
    %1440 = vmatpush.bf16.msra.mxu0 0
    %1441 = vmatpush.bf16.msra.mxu0 %v226
    %1442 = vmatpush.bf16.msra.mxu0 %v223
    %1443 = vmatmul.bf16.gmra.mxu0 %v1433
    %v1444 = vpop.f32.mrf.mxu0
    %v1445 = vadd.f32 %v236, %v1444
    %v1446 = vpop.f32.mrf.mxu0
    %1447 = vdwg.mxu0
    %1448 = vmatpush.bf16.msra.mxu0 0
    %1449 = vmatpush.bf16.msra.mxu0 0
    %1450 = vmatpush.bf16.msra.mxu0 0
    %1451 = vmatpush.bf16.msra.mxu0 0
    %1452 = vmatpush.bf16.msra.mxu0 0
    %1453 = vmatpush.bf16.msra.mxu0 0
    %1454 = vmatpush.bf16.msra.mxu0 %v227
    %1455 = vmatpush.bf16.msra.mxu0 %v224
    %1456 = vmatmul.bf16.gmra.mxu0 %v1433
    %v1457 = vpop.f32.mrf.mxu0
    %v1458 = vadd.f32 %v237, %v1457
    %v1459 = vpop.f32.mrf.mxu0
    %1460 = vdwg.mxu0
    %1461 = vmatpush.bf16.msra.mxu0 0
    %1462 = vmatpush.bf16.msra.mxu0 0
    %1463 = vmatpush.bf16.msra.mxu0 0
    %1464 = vmatpush.bf16.msra.mxu0 0
    %1465 = vmatpush.bf16.msra.mxu0 0
    %1466 = vmatpush.bf16.msra.mxu0 0
    %1467 = vmatpush.bf16.msra.mxu0 %v228
    %1468 = vmatpush.bf16.msra.mxu0 %v225
    %1469 = vmatmul.bf16.gmra.mxu0 %v1433
    %v1470 = vpop.f32.mrf.mxu0
    %v1471 = vadd.f32 %v238, %v1470
    %v1472 = vpop.f32.mrf.mxu0
    %1473 = vdwg.mxu0
    %v1474 = vadd.f32 %v1402, %v1445
    %v1475 = vxor.u32 %v1474, 2147483648
    %v1476 = vmul.f32 %v1475, 1.442695
    %v1477 = vpow.pop %v1476
    %v1478 = vadd.f32 %v1477, 1.0
    %v1479 = vrcp.pop %v1478
    %v1480 = vmul.f32 %v1478, %v1479
    %v1481 = vsub.f32 1.0, %v1480
    %v1482 = vmul.f32 %v1479, %v1481
    %v1483 = vadd.f32 %v1479, %v1482
    %vm1484 = vweird.f32 %v1478
    %vm1485 = vweird.f32 %v1479
    %vm1486 = vmor %vm1484, %vm1485
    %v1487 = vsel %vm1486, %v1479, %v1483
    %v1488 = vand.u32 2147483647, %v1478
    %vm1489 = vcmp.eq.f32.partialorder %v1488, 8.507059e+37
    %v1490 = vand.u32 %v1478, 2147483648
    %v1491 = vor.u32 1.1754944e-38, %v1490
    %v1492 = vsel %vm1489, %v1491, %v1487
    %v1493 = vmul.f32 1.0, %v1492
    %v1494 = vadd.f32 %v1415, %v1458
    %v1495 = vxor.u32 %v1494, 2147483648
    %v1496 = vmul.f32 %v1495, 1.442695
    %v1497 = vpow.pop %v1496
    %v1498 = vadd.f32 %v1497, 1.0
    %v1499 = vrcp.pop %v1498
    %v1500 = vmul.f32 %v1498, %v1499
    %v1501 = vsub.f32 1.0, %v1500
    %v1502 = vmul.f32 %v1499, %v1501
    %v1503 = vadd.f32 %v1499, %v1502
    %vm1504 = vweird.f32 %v1498
    %vm1505 = vweird.f32 %v1499
    %vm1506 = vmor %vm1504, %vm1505
    %v1507 = vsel %vm1506, %v1499, %v1503
    %v1508 = vand.u32 2147483647, %v1498
    %vm1509 = vcmp.eq.f32.partialorder %v1508, 8.507059e+37
    %v1510 = vand.u32 %v1498, 2147483648
    %v1511 = vor.u32 1.1754944e-38, %v1510
    %v1512 = vsel %vm1509, %v1511, %v1507
    %v1513 = vmul.f32 1.0, %v1512
    %v1514 = vmul.f32 %v1493, %v1471
    %v1515 = vadd.f32 %v1428, %v1514
    %v1516 = vtanh.pop %v1515
    %v1517 = vsub.f32 1.0, %v1513
    %v1518 = vmul.f32 %v1517, %v1516
    %v1519 = vmul.f32 %v1513, %v1244
    %v1520 = vadd.f32 %v1518, %v1519
    %v1522 = vunpack.c.l.b16 %v1384
    %v1523 = vpack.c.b16 %v1522, %v1522
    %v1525 = vshrl.u32 %v1523, 16
    %v1527 = vrot.slane %v1525, 1
    %v1529 = vsel %vm160, %v1527, 0
    %1531 = vmatpush.bf16.msra.mxu0 0
    %1532 = vmatpush.bf16.msra.mxu0 0
    %1533 = vmatpush.bf16.msra.mxu0 0
    %1534 = vmatpush.bf16.msra.mxu0 0
    %1535 = vmatpush.bf16.msra.mxu0 0
    %1536 = vmatpush.bf16.msra.mxu0 0
    %1537 = vmatpush.bf16.msra.mxu0 %v361
    %1538 = vmatpush.bf16.msra.mxu0 %v358
    %1539 = vmatmul.bf16.gmra.mxu0 %v1529
    %v1540 = vpop.f32.mrf.mxu0
    %v1541 = vadd.f32 %v371, %v1540
    %v1542 = vpop.f32.mrf.mxu0
    %1543 = vdwg.mxu0
    %1544 = vmatpush.bf16.msra.mxu0 0
    %1545 = vmatpush.bf16.msra.mxu0 0
    %1546 = vmatpush.bf16.msra.mxu0 0
    %1547 = vmatpush.bf16.msra.mxu0 0
    %1548 = vmatpush.bf16.msra.mxu0 0
    %1549 = vmatpush.bf16.msra.mxu0 0
    %1550 = vmatpush.bf16.msra.mxu0 %v362
    %1551 = vmatpush.bf16.msra.mxu0 %v359
    %1552 = vmatmul.bf16.gmra.mxu0 %v1529
    %v1553 = vpop.f32.mrf.mxu0
    %v1554 = vadd.f32 %v372, %v1553
    %v1555 = vpop.f32.mrf.mxu0
    %1556 = vdwg.mxu0
    %1557 = vmatpush.bf16.msra.mxu0 0
    %1558 = vmatpush.bf16.msra.mxu0 0
    %1559 = vmatpush.bf16.msra.mxu0 0
    %1560 = vmatpush.bf16.msra.mxu0 0
    %1561 = vmatpush.bf16.msra.mxu0 0
    %1562 = vmatpush.bf16.msra.mxu0 0
    %1563 = vmatpush.bf16.msra.mxu0 %v363
    %1564 = vmatpush.bf16.msra.mxu0 %v360
    %1565 = vmatmul.bf16.gmra.mxu0 %v1529
    %v1566 = vpop.f32.mrf.mxu0
    %v1567 = vadd.f32 %v373, %v1566
    %v1568 = vpop.f32.mrf.mxu0
    %1569 = vdwg.mxu0
    %v1570 = vpack.c.bf16 %v1380, %v1380
    %v1572 = vsel %vm160, %v1570, 0
    %1574 = vmatpush.bf16.msra.mxu0 0
    %1575 = vmatpush.bf16.msra.mxu0 0
    %1576 = vmatpush.bf16.msra.mxu0 0
    %1577 = vmatpush.bf16.msra.mxu0 0
    %1578 = vmatpush.bf16.msra.mxu0 0
    %1579 = vmatpush.bf16.msra.mxu0 0
    %1580 = vmatpush.bf16.msra.mxu0 %v442
    %1581 = vmatpush.bf16.msra.mxu0 %v439
    %1582 = vmatmul.bf16.gmra.mxu0 %v1572
    %v1583 = vpop.f32.mrf.mxu0
    %v1584 = vadd.f32 %v452, %v1583
    %v1585 = vpop.f32.mrf.mxu0
    %1586 = vdwg.mxu0
    %1587 = vmatpush.bf16.msra.mxu0 0
    %1588 = vmatpush.bf16.msra.mxu0 0
    %1589 = vmatpush.bf16.msra.mxu0 0
    %1590 = vmatpush.bf16.msra.mxu0 0
    %1591 = vmatpush.bf16.msra.mxu0 0
    %1592 = vmatpush.bf16.msra.mxu0 0
    %1593 = vmatpush.bf16.msra.mxu0 %v443
    %1594 = vmatpush.bf16.msra.mxu0 %v440
    %1595 = vmatmul.bf16.gmra.mxu0 %v1572
    %v1596 = vpop.f32.mrf.mxu0
    %v1597 = vadd.f32 %v453, %v1596
    %v1598 = vpop.f32.mrf.mxu0
    %1599 = vdwg.mxu0
    %1600 = vmatpush.bf16.msra.mxu0 0
    %1601 = vmatpush.bf16.msra.mxu0 0
    %1602 = vmatpush.bf16.msra.mxu0 0
    %1603 = vmatpush.bf16.msra.mxu0 0
    %1604 = vmatpush.bf16.msra.mxu0 0
    %1605 = vmatpush.bf16.msra.mxu0 0
    %1606 = vmatpush.bf16.msra.mxu0 %v444
    %1607 = vmatpush.bf16.msra.mxu0 %v441
    %1608 = vmatmul.bf16.gmra.mxu0 %v1572
    %v1609 = vpop.f32.mrf.mxu0
    %v1610 = vadd.f32 %v454, %v1609
    %v1611 = vpop.f32.mrf.mxu0
    %1612 = vdwg.mxu0
    %v1613 = vadd.f32 %v1541, %v1584
    %v1614 = vxor.u32 %v1613, 2147483648
    %v1615 = vmul.f32 %v1614, 1.442695
    %v1616 = vpow.pop %v1615
    %v1617 = vadd.f32 %v1616, 1.0
    %v1618 = vrcp.pop %v1617
    %v1619 = vmul.f32 %v1617, %v1618
    %v1620 = vsub.f32 1.0, %v1619
    %v1621 = vmul.f32 %v1618, %v1620
    %v1622 = vadd.f32 %v1618, %v1621
    %vm1623 = vweird.f32 %v1617
    %vm1624 = vweird.f32 %v1618
    %vm1625 = vmor %vm1623, %vm1624
    %v1626 = vsel %vm1625, %v1618, %v1622
    %v1627 = vand.u32 2147483647, %v1617
    %vm1628 = vcmp.eq.f32.partialorder %v1627, 8.507059e+37
    %v1629 = vand.u32 %v1617, 2147483648
    %v1630 = vor.u32 1.1754944e-38, %v1629
    %v1631 = vsel %vm1628, %v1630, %v1626
    %v1632 = vmul.f32 1.0, %v1631
    %v1633 = vadd.f32 %v1554, %v1597
    %v1634 = vxor.u32 %v1633, 2147483648
    %v1635 = vmul.f32 %v1634, 1.442695
    %v1636 = vpow.pop %v1635
    %v1637 = vadd.f32 %v1636, 1.0
    %v1638 = vrcp.pop %v1637
    %v1639 = vmul.f32 %v1637, %v1638
    %v1640 = vsub.f32 1.0, %v1639
    %v1641 = vmul.f32 %v1638, %v1640
    %v1642 = vadd.f32 %v1638, %v1641
    %vm1643 = vweird.f32 %v1637
    %vm1644 = vweird.f32 %v1638
    %vm1645 = vmor %vm1643, %vm1644
    %v1646 = vsel %vm1645, %v1638, %v1642
    %v1647 = vand.u32 2147483647, %v1637
    %vm1648 = vcmp.eq.f32.partialorder %v1647, 8.507059e+37
    %v1649 = vand.u32 %v1637, 2147483648
    %v1650 = vor.u32 1.1754944e-38, %v1649
    %v1651 = vsel %vm1648, %v1650, %v1646
    %v1652 = vmul.f32 1.0, %v1651
    %v1653 = vmul.f32 %v1632, %v1610
    %v1654 = vadd.f32 %v1567, %v1653
    %v1655 = vtanh.pop %v1654
    %v1656 = vsub.f32 1.0, %v1652
    %v1657 = vmul.f32 %v1656, %v1655
    %v1658 = vmul.f32 %v1652, %v1380
    %v1659 = vadd.f32 %v1657, %v1658
    %1660 = vst.msk [vmem:[#allocation2 + $0x4] sm:$0x1] %vm544, %v1520
    %1661 = vst.msk [vmem:[#allocation3 + $0x3] sm:$0x1] %vm544, %v1659
    %v1662 = vld [vmem:[%s0] sm:$0x4]
    %v1663 = vld [vmem:[%s0] sm:$0x2]
    %v1665 = vunpack.c.l.b16 %v1662
    %v1666 = vpack.c.b16 %v1665, %v1665
    %v1668 = vshrl.u32 %v1666, 16
    %v1670 = vrot.slane %v1668, 2
    %v1672 = vsel %vm160, %v1670, 0
    %1674 = vmatpush.bf16.msra.mxu0 0
    %1675 = vmatpush.bf16.msra.mxu0 0
    %1676 = vmatpush.bf16.msra.mxu0 0
    %1677 = vmatpush.bf16.msra.mxu0 0
    %1678 = vmatpush.bf16.msra.mxu0 0
    %1679 = vmatpush.bf16.msra.mxu0 0
    %1680 = vmatpush.bf16.msra.mxu0 %v144
    %1681 = vmatpush.bf16.msra.mxu0 %v141
    %1682 = vmatmul.bf16.gmra.mxu0 %v1672
    %v1683 = vpop.f32.mrf.mxu0
    %v1684 = vadd.f32 %v154, %v1683
    %v1685 = vpop.f32.mrf.mxu0
    %1686 = vdwg.mxu0
    %1687 = vmatpush.bf16.msra.mxu0 0
    %1688 = vmatpush.bf16.msra.mxu0 0
    %1689 = vmatpush.bf16.msra.mxu0 0
    %1690 = vmatpush.bf16.msra.mxu0 0
    %1691 = vmatpush.bf16.msra.mxu0 0
    %1692 = vmatpush.bf16.msra.mxu0 0
    %1693 = vmatpush.bf16.msra.mxu0 %v145
    %1694 = vmatpush.bf16.msra.mxu0 %v142
    %1695 = vmatmul.bf16.gmra.mxu0 %v1672
    %v1696 = vpop.f32.mrf.mxu0
    %v1697 = vadd.f32 %v155, %v1696
    %v1698 = vpop.f32.mrf.mxu0
    %1699 = vdwg.mxu0
    %1700 = vmatpush.bf16.msra.mxu0 0
    %1701 = vmatpush.bf16.msra.mxu0 0
    %1702 = vmatpush.bf16.msra.mxu0 0
    %1703 = vmatpush.bf16.msra.mxu0 0
    %1704 = vmatpush.bf16.msra.mxu0 0
    %1705 = vmatpush.bf16.msra.mxu0 0
    %1706 = vmatpush.bf16.msra.mxu0 %v146
    %1707 = vmatpush.bf16.msra.mxu0 %v143
    %1708 = vmatmul.bf16.gmra.mxu0 %v1672
    %v1709 = vpop.f32.mrf.mxu0
    %v1710 = vadd.f32 %v156, %v1709
    %v1711 = vpop.f32.mrf.mxu0
    %1712 = vdwg.mxu0
    %v1713 = vpack.c.bf16 %v1520, %v1520
    %v1715 = vsel %vm160, %v1713, 0
    %1717 = vmatpush.bf16.msra.mxu0 0
    %1718 = vmatpush.bf16.msra.mxu0 0
    %1719 = vmatpush.bf16.msra.mxu0 0
    %1720 = vmatpush.bf16.msra.mxu0 0
    %1721 = vmatpush.bf16.msra.mxu0 0
    %1722 = vmatpush.bf16.msra.mxu0 0
    %1723 = vmatpush.bf16.msra.mxu0 %v226
    %1724 = vmatpush.bf16.msra.mxu0 %v223
    %1725 = vmatmul.bf16.gmra.mxu0 %v1715
    %v1726 = vpop.f32.mrf.mxu0
    %v1727 = vadd.f32 %v236, %v1726
    %v1728 = vpop.f32.mrf.mxu0
    %1729 = vdwg.mxu0
    %1730 = vmatpush.bf16.msra.mxu0 0
    %1731 = vmatpush.bf16.msra.mxu0 0
    %1732 = vmatpush.bf16.msra.mxu0 0
    %1733 = vmatpush.bf16.msra.mxu0 0
    %1734 = vmatpush.bf16.msra.mxu0 0
    %1735 = vmatpush.bf16.msra.mxu0 0
    %1736 = vmatpush.bf16.msra.mxu0 %v227
    %1737 = vmatpush.bf16.msra.mxu0 %v224
    %1738 = vmatmul.bf16.gmra.mxu0 %v1715
    %v1739 = vpop.f32.mrf.mxu0
    %v1740 = vadd.f32 %v237, %v1739
    %v1741 = vpop.f32.mrf.mxu0
    %1742 = vdwg.mxu0
    %1743 = vmatpush.bf16.msra.mxu0 0
    %1744 = vmatpush.bf16.msra.mxu0 0
    %1745 = vmatpush.bf16.msra.mxu0 0
    %1746 = vmatpush.bf16.msra.mxu0 0
    %1747 = vmatpush.bf16.msra.mxu0 0
    %1748 = vmatpush.bf16.msra.mxu0 0
    %1749 = vmatpush.bf16.msra.mxu0 %v228
    %1750 = vmatpush.bf16.msra.mxu0 %v225
    %1751 = vmatmul.bf16.gmra.mxu0 %v1715
    %v1752 = vpop.f32.mrf.mxu0
    %v1753 = vadd.f32 %v238, %v1752
    %v1754 = vpop.f32.mrf.mxu0
    %1755 = vdwg.mxu0
    %v1756 = vadd.f32 %v1684, %v1727
    %v1757 = vxor.u32 %v1756, 2147483648
    %v1758 = vmul.f32 %v1757, 1.442695
    %v1759 = vpow.pop %v1758
    %v1760 = vadd.f32 %v1759, 1.0
    %v1761 = vrcp.pop %v1760
    %v1762 = vmul.f32 %v1760, %v1761
    %v1763 = vsub.f32 1.0, %v1762
    %v1764 = vmul.f32 %v1761, %v1763
    %v1765 = vadd.f32 %v1761, %v1764
    %vm1766 = vweird.f32 %v1760
    %vm1767 = vweird.f32 %v1761
    %vm1768 = vmor %vm1766, %vm1767
    %v1769 = vsel %vm1768, %v1761, %v1765
    %v1770 = vand.u32 2147483647, %v1760
    %vm1771 = vcmp.eq.f32.partialorder %v1770, 8.507059e+37
    %v1772 = vand.u32 %v1760, 2147483648
    %v1773 = vor.u32 1.1754944e-38, %v1772
    %v1774 = vsel %vm1771, %v1773, %v1769
    %v1775 = vmul.f32 1.0, %v1774
    %v1776 = vadd.f32 %v1697, %v1740
    %v1777 = vxor.u32 %v1776, 2147483648
    %v1778 = vmul.f32 %v1777, 1.442695
    %v1779 = vpow.pop %v1778
    %v1780 = vadd.f32 %v1779, 1.0
    %v1781 = vrcp.pop %v1780
    %v1782 = vmul.f32 %v1780, %v1781
    %v1783 = vsub.f32 1.0, %v1782
    %v1784 = vmul.f32 %v1781, %v1783
    %v1785 = vadd.f32 %v1781, %v1784
    %vm1786 = vweird.f32 %v1780
    %vm1787 = vweird.f32 %v1781
    %vm1788 = vmor %vm1786, %vm1787
    %v1789 = vsel %vm1788, %v1781, %v1785
    %v1790 = vand.u32 2147483647, %v1780
    %vm1791 = vcmp.eq.f32.partialorder %v1790, 8.507059e+37
    %v1792 = vand.u32 %v1780, 2147483648
    %v1793 = vor.u32 1.1754944e-38, %v1792
    %v1794 = vsel %vm1791, %v1793, %v1789
    %v1795 = vmul.f32 1.0, %v1794
    %v1796 = vmul.f32 %v1775, %v1753
    %v1797 = vadd.f32 %v1710, %v1796
    %v1798 = vtanh.pop %v1797
    %v1799 = vsub.f32 1.0, %v1795
    %v1800 = vmul.f32 %v1799, %v1798
    %v1801 = vmul.f32 %v1795, %v1520
    %v1802 = vadd.f32 %v1800, %v1801
    %v1804 = vunpack.c.l.b16 %v1663
    %v1805 = vpack.c.b16 %v1804, %v1804
    %v1806 = vrot.slane %v1805, 1
    %v1808 = vsel %vm160, %v1806, 0
    %1810 = vmatpush.bf16.msra.mxu0 0
    %1811 = vmatpush.bf16.msra.mxu0 0
    %1812 = vmatpush.bf16.msra.mxu0 0
    %1813 = vmatpush.bf16.msra.mxu0 0
    %1814 = vmatpush.bf16.msra.mxu0 0
    %1815 = vmatpush.bf16.msra.mxu0 0
    %1816 = vmatpush.bf16.msra.mxu0 %v361
    %1817 = vmatpush.bf16.msra.mxu0 %v358
    %1818 = vmatmul.bf16.gmra.mxu0 %v1808
    %v1819 = vpop.f32.mrf.mxu0
    %v1820 = vadd.f32 %v371, %v1819
    %v1821 = vpop.f32.mrf.mxu0
    %1822 = vdwg.mxu0
    %1823 = vmatpush.bf16.msra.mxu0 0
    %1824 = vmatpush.bf16.msra.mxu0 0
    %1825 = vmatpush.bf16.msra.mxu0 0
    %1826 = vmatpush.bf16.msra.mxu0 0
    %1827 = vmatpush.bf16.msra.mxu0 0
    %1828 = vmatpush.bf16.msra.mxu0 0
    %1829 = vmatpush.bf16.msra.mxu0 %v362
    %1830 = vmatpush.bf16.msra.mxu0 %v359
    %1831 = vmatmul.bf16.gmra.mxu0 %v1808
    %v1832 = vpop.f32.mrf.mxu0
    %v1833 = vadd.f32 %v372, %v1832
    %v1834 = vpop.f32.mrf.mxu0
    %1835 = vdwg.mxu0
    %1836 = vmatpush.bf16.msra.mxu0 0
    %1837 = vmatpush.bf16.msra.mxu0 0
    %1838 = vmatpush.bf16.msra.mxu0 0
    %1839 = vmatpush.bf16.msra.mxu0 0
    %1840 = vmatpush.bf16.msra.mxu0 0
    %1841 = vmatpush.bf16.msra.mxu0 0
    %1842 = vmatpush.bf16.msra.mxu0 %v363
    %1843 = vmatpush.bf16.msra.mxu0 %v360
    %1844 = vmatmul.bf16.gmra.mxu0 %v1808
    %v1845 = vpop.f32.mrf.mxu0
    %v1846 = vadd.f32 %v373, %v1845
    %v1847 = vpop.f32.mrf.mxu0
    %1848 = vdwg.mxu0
    %v1849 = vpack.c.bf16 %v1659, %v1659
    %v1851 = vsel %vm160, %v1849, 0
    %1853 = vmatpush.bf16.msra.mxu0 0
    %1854 = vmatpush.bf16.msra.mxu0 0
    %1855 = vmatpush.bf16.msra.mxu0 0
    %1856 = vmatpush.bf16.msra.mxu0 0
    %1857 = vmatpush.bf16.msra.mxu0 0
    %1858 = vmatpush.bf16.msra.mxu0 0
    %1859 = vmatpush.bf16.msra.mxu0 %v442
    %1860 = vmatpush.bf16.msra.mxu0 %v439
    %1861 = vmatmul.bf16.gmra.mxu0 %v1851
    %v1862 = vpop.f32.mrf.mxu0
    %v1863 = vadd.f32 %v452, %v1862
    %v1864 = vpop.f32.mrf.mxu0
    %1865 = vdwg.mxu0
    %1866 = vmatpush.bf16.msra.mxu0 0
    %1867 = vmatpush.bf16.msra.mxu0 0
    %1868 = vmatpush.bf16.msra.mxu0 0
    %1869 = vmatpush.bf16.msra.mxu0 0
    %1870 = vmatpush.bf16.msra.mxu0 0
    %1871 = vmatpush.bf16.msra.mxu0 0
    %1872 = vmatpush.bf16.msra.mxu0 %v443
    %1873 = vmatpush.bf16.msra.mxu0 %v440
    %1874 = vmatmul.bf16.gmra.mxu0 %v1851
    %v1875 = vpop.f32.mrf.mxu0
    %v1876 = vadd.f32 %v453, %v1875
    %v1877 = vpop.f32.mrf.mxu0
    %1878 = vdwg.mxu0
    %1879 = vmatpush.bf16.msra.mxu0 0
    %1880 = vmatpush.bf16.msra.mxu0 0
    %1881 = vmatpush.bf16.msra.mxu0 0
    %1882 = vmatpush.bf16.msra.mxu0 0
    %1883 = vmatpush.bf16.msra.mxu0 0
    %1884 = vmatpush.bf16.msra.mxu0 0
    %1885 = vmatpush.bf16.msra.mxu0 %v444
    %1886 = vmatpush.bf16.msra.mxu0 %v441
    %1887 = vmatmul.bf16.gmra.mxu0 %v1851
    %v1888 = vpop.f32.mrf.mxu0
    %v1889 = vadd.f32 %v454, %v1888
    %v1890 = vpop.f32.mrf.mxu0
    %1891 = vdwg.mxu0
    %v1892 = vadd.f32 %v1820, %v1863
    %v1893 = vxor.u32 %v1892, 2147483648
    %v1894 = vmul.f32 %v1893, 1.442695
    %v1895 = vpow.pop %v1894
    %v1896 = vadd.f32 %v1895, 1.0
    %v1897 = vrcp.pop %v1896
    %v1898 = vmul.f32 %v1896, %v1897
    %v1899 = vsub.f32 1.0, %v1898
    %v1900 = vmul.f32 %v1897, %v1899
    %v1901 = vadd.f32 %v1897, %v1900
    %vm1902 = vweird.f32 %v1896
    %vm1903 = vweird.f32 %v1897
    %vm1904 = vmor %vm1902, %vm1903
    %v1905 = vsel %vm1904, %v1897, %v1901
    %v1906 = vand.u32 2147483647, %v1896
    %vm1907 = vcmp.eq.f32.partialorder %v1906, 8.507059e+37
    %v1908 = vand.u32 %v1896, 2147483648
    %v1909 = vor.u32 1.1754944e-38, %v1908
    %v1910 = vsel %vm1907, %v1909, %v1905
    %v1911 = vmul.f32 1.0, %v1910
    %v1912 = vadd.f32 %v1833, %v1876
    %v1913 = vxor.u32 %v1912, 2147483648
    %v1914 = vmul.f32 %v1913, 1.442695
    %v1915 = vpow.pop %v1914
    %v1916 = vadd.f32 %v1915, 1.0
    %v1917 = vrcp.pop %v1916
    %v1918 = vmul.f32 %v1916, %v1917
    %v1919 = vsub.f32 1.0, %v1918
    %v1920 = vmul.f32 %v1917, %v1919
    %v1921 = vadd.f32 %v1917, %v1920
    %vm1922 = vweird.f32 %v1916
    %vm1923 = vweird.f32 %v1917
    %vm1924 = vmor %vm1922, %vm1923
    %v1925 = vsel %vm1924, %v1917, %v1921
    %v1926 = vand.u32 2147483647, %v1916
    %vm1927 = vcmp.eq.f32.partialorder %v1926, 8.507059e+37
    %v1928 = vand.u32 %v1916, 2147483648
    %v1929 = vor.u32 1.1754944e-38, %v1928
    %v1930 = vsel %vm1927, %v1929, %v1925
    %v1931 = vmul.f32 1.0, %v1930
    %v1932 = vmul.f32 %v1911, %v1889
    %v1933 = vadd.f32 %v1846, %v1932
    %v1934 = vtanh.pop %v1933
    %v1935 = vsub.f32 1.0, %v1931
    %v1936 = vmul.f32 %v1935, %v1934
    %v1937 = vmul.f32 %v1931, %v1659
    %v1938 = vadd.f32 %v1936, %v1937
    %1939 = vst.msk [vmem:[#allocation2 + $0x5] sm:$0x1] %vm544, %v1802
    %1940 = vst.msk [vmem:[#allocation3 + $0x2] sm:$0x1] %vm544, %v1938
    %v1941 = vld [vmem:[%s0] sm:$0x8]
    %v1942 = vld [vmem:[%s0] sm:$0x1]
    %v1944 = vunpack.c.l.b16 %v1941
    %v1945 = vpack.c.b16 %v1944, %v1944
    %v1946 = vrot.slane %v1945, 3
    %v1948 = vsel %vm160, %v1946, 0
    %1950 = vmatpush.bf16.msra.mxu0 0
    %1951 = vmatpush.bf16.msra.mxu0 0
    %1952 = vmatpush.bf16.msra.mxu0 0
    %1953 = vmatpush.bf16.msra.mxu0 0
    %1954 = vmatpush.bf16.msra.mxu0 0
    %1955 = vmatpush.bf16.msra.mxu0 0
    %1956 = vmatpush.bf16.msra.mxu0 %v144
    %1957 = vmatpush.bf16.msra.mxu0 %v141
    %1958 = vmatmul.bf16.gmra.mxu0 %v1948
    %v1959 = vpop.f32.mrf.mxu0
    %v1960 = vadd.f32 %v154, %v1959
    %v1961 = vpop.f32.mrf.mxu0
    %1962 = vdwg.mxu0
    %1963 = vmatpush.bf16.msra.mxu0 0
    %1964 = vmatpush.bf16.msra.mxu0 0
    %1965 = vmatpush.bf16.msra.mxu0 0
    %1966 = vmatpush.bf16.msra.mxu0 0
    %1967 = vmatpush.bf16.msra.mxu0 0
    %1968 = vmatpush.bf16.msra.mxu0 0
    %1969 = vmatpush.bf16.msra.mxu0 %v145
    %1970 = vmatpush.bf16.msra.mxu0 %v142
    %1971 = vmatmul.bf16.gmra.mxu0 %v1948
    %v1972 = vpop.f32.mrf.mxu0
    %v1973 = vadd.f32 %v155, %v1972
    %v1974 = vpop.f32.mrf.mxu0
    %1975 = vdwg.mxu0
    %1976 = vmatpush.bf16.msra.mxu0 0
    %1977 = vmatpush.bf16.msra.mxu0 0
    %1978 = vmatpush.bf16.msra.mxu0 0
    %1979 = vmatpush.bf16.msra.mxu0 0
    %1980 = vmatpush.bf16.msra.mxu0 0
    %1981 = vmatpush.bf16.msra.mxu0 0
    %1982 = vmatpush.bf16.msra.mxu0 %v146
    %1983 = vmatpush.bf16.msra.mxu0 %v143
    %1984 = vmatmul.bf16.gmra.mxu0 %v1948
    %v1985 = vpop.f32.mrf.mxu0
    %v1986 = vadd.f32 %v156, %v1985
    %v1987 = vpop.f32.mrf.mxu0
    %1988 = vdwg.mxu0
    %v1989 = vpack.c.bf16 %v1802, %v1802
    %v1991 = vsel %vm160, %v1989, 0
    %1993 = vmatpush.bf16.msra.mxu0 0
    %1994 = vmatpush.bf16.msra.mxu0 0
    %1995 = vmatpush.bf16.msra.mxu0 0
    %1996 = vmatpush.bf16.msra.mxu0 0
    %1997 = vmatpush.bf16.msra.mxu0 0
    %1998 = vmatpush.bf16.msra.mxu0 0
    %1999 = vmatpush.bf16.msra.mxu0 %v226
    %2000 = vmatpush.bf16.msra.mxu0 %v223
    %2001 = vmatmul.bf16.gmra.mxu0 %v1991
    %v2002 = vpop.f32.mrf.mxu0
    %v2003 = vadd.f32 %v236, %v2002
    %v2004 = vpop.f32.mrf.mxu0
    %2005 = vdwg.mxu0
    %2006 = vmatpush.bf16.msra.mxu0 0
    %2007 = vmatpush.bf16.msra.mxu0 0
    %2008 = vmatpush.bf16.msra.mxu0 0
    %2009 = vmatpush.bf16.msra.mxu0 0
    %2010 = vmatpush.bf16.msra.mxu0 0
    %2011 = vmatpush.bf16.msra.mxu0 0
    %2012 = vmatpush.bf16.msra.mxu0 %v227
    %2013 = vmatpush.bf16.msra.mxu0 %v224
    %2014 = vmatmul.bf16.gmra.mxu0 %v1991
    %v2015 = vpop.f32.mrf.mxu0
    %v2016 = vadd.f32 %v237, %v2015
    %v2017 = vpop.f32.mrf.mxu0
    %2018 = vdwg.mxu0
    %2019 = vmatpush.bf16.msra.mxu0 0
    %2020 = vmatpush.bf16.msra.mxu0 0
    %2021 = vmatpush.bf16.msra.mxu0 0
    %2022 = vmatpush.bf16.msra.mxu0 0
    %2023 = vmatpush.bf16.msra.mxu0 0
    %2024 = vmatpush.bf16.msra.mxu0 0
    %2025 = vmatpush.bf16.msra.mxu0 %v228
    %2026 = vmatpush.bf16.msra.mxu0 %v225
    %2027 = vmatmul.bf16.gmra.mxu0 %v1991
    %v2028 = vpop.f32.mrf.mxu0
    %v2029 = vadd.f32 %v238, %v2028
    %v2030 = vpop.f32.mrf.mxu0
    %2031 = vdwg.mxu0
    %v2032 = vadd.f32 %v1960, %v2003
    %v2033 = vxor.u32 %v2032, 2147483648
    %v2034 = vmul.f32 %v2033, 1.442695
    %v2035 = vpow.pop %v2034
    %v2036 = vadd.f32 %v2035, 1.0
    %v2037 = vrcp.pop %v2036
    %v2038 = vmul.f32 %v2036, %v2037
    %v2039 = vsub.f32 1.0, %v2038
    %v2040 = vmul.f32 %v2037, %v2039
    %v2041 = vadd.f32 %v2037, %v2040
    %vm2042 = vweird.f32 %v2036
    %vm2043 = vweird.f32 %v2037
    %vm2044 = vmor %vm2042, %vm2043
    %v2045 = vsel %vm2044, %v2037, %v2041
    %v2046 = vand.u32 2147483647, %v2036
    %vm2047 = vcmp.eq.f32.partialorder %v2046, 8.507059e+37
    %v2048 = vand.u32 %v2036, 2147483648
    %v2049 = vor.u32 1.1754944e-38, %v2048
    %v2050 = vsel %vm2047, %v2049, %v2045
    %v2051 = vmul.f32 1.0, %v2050
    %v2052 = vadd.f32 %v1973, %v2016
    %v2053 = vxor.u32 %v2052, 2147483648
    %v2054 = vmul.f32 %v2053, 1.442695
    %v2055 = vpow.pop %v2054
    %v2056 = vadd.f32 %v2055, 1.0
    %v2057 = vrcp.pop %v2056
    %v2058 = vmul.f32 %v2056, %v2057
    %v2059 = vsub.f32 1.0, %v2058
    %v2060 = vmul.f32 %v2057, %v2059
    %v2061 = vadd.f32 %v2057, %v2060
    %vm2062 = vweird.f32 %v2056
    %vm2063 = vweird.f32 %v2057
    %vm2064 = vmor %vm2062, %vm2063
    %v2065 = vsel %vm2064, %v2057, %v2061
    %v2066 = vand.u32 2147483647, %v2056
    %vm2067 = vcmp.eq.f32.partialorder %v2066, 8.507059e+37
    %v2068 = vand.u32 %v2056, 2147483648
    %v2069 = vor.u32 1.1754944e-38, %v2068
    %v2070 = vsel %vm2067, %v2069, %v2065
    %v2071 = vmul.f32 1.0, %v2070
    %v2072 = vmul.f32 %v2051, %v2029
    %v2073 = vadd.f32 %v1986, %v2072
    %v2074 = vtanh.pop %v2073
    %v2075 = vsub.f32 1.0, %v2071
    %v2076 = vmul.f32 %v2075, %v2074
    %v2077 = vmul.f32 %v2071, %v1802
    %v2078 = vadd.f32 %v2076, %v2077
    %v2080 = vunpack.c.l.b16 %v1942
    %v2081 = vpack.c.b16 %v2080, %v2080
    %v2083 = vshrl.u32 %v2081, 16
    %v2086 = vsel %vm160, %v2083, 0
    %2088 = vmatpush.bf16.msra.mxu0 0
    %2089 = vmatpush.bf16.msra.mxu0 0
    %2090 = vmatpush.bf16.msra.mxu0 0
    %2091 = vmatpush.bf16.msra.mxu0 0
    %2092 = vmatpush.bf16.msra.mxu0 0
    %2093 = vmatpush.bf16.msra.mxu0 0
    %2094 = vmatpush.bf16.msra.mxu0 %v361
    %2095 = vmatpush.bf16.msra.mxu0 %v358
    %2096 = vmatmul.bf16.gmra.mxu0 %v2086
    %v2097 = vpop.f32.mrf.mxu0
    %v2098 = vadd.f32 %v371, %v2097
    %v2099 = vpop.f32.mrf.mxu0
    %2100 = vdwg.mxu0
    %2101 = vmatpush.bf16.msra.mxu0 0
    %2102 = vmatpush.bf16.msra.mxu0 0
    %2103 = vmatpush.bf16.msra.mxu0 0
    %2104 = vmatpush.bf16.msra.mxu0 0
    %2105 = vmatpush.bf16.msra.mxu0 0
    %2106 = vmatpush.bf16.msra.mxu0 0
    %2107 = vmatpush.bf16.msra.mxu0 %v362
    %2108 = vmatpush.bf16.msra.mxu0 %v359
    %2109 = vmatmul.bf16.gmra.mxu0 %v2086
    %v2110 = vpop.f32.mrf.mxu0
    %v2111 = vadd.f32 %v372, %v2110
    %v2112 = vpop.f32.mrf.mxu0
    %2113 = vdwg.mxu0
    %2114 = vmatpush.bf16.msra.mxu0 0
    %2115 = vmatpush.bf16.msra.mxu0 0
    %2116 = vmatpush.bf16.msra.mxu0 0
    %2117 = vmatpush.bf16.msra.mxu0 0
    %2118 = vmatpush.bf16.msra.mxu0 0
    %2119 = vmatpush.bf16.msra.mxu0 0
    %2120 = vmatpush.bf16.msra.mxu0 %v363
    %2121 = vmatpush.bf16.msra.mxu0 %v360
    %2122 = vmatmul.bf16.gmra.mxu0 %v2086
    %v2123 = vpop.f32.mrf.mxu0
    %v2124 = vadd.f32 %v373, %v2123
    %v2125 = vpop.f32.mrf.mxu0
    %2126 = vdwg.mxu0
    %v2127 = vpack.c.bf16 %v1938, %v1938
    %v2129 = vsel %vm160, %v2127, 0
    %2131 = vmatpush.bf16.msra.mxu0 0
    %2132 = vmatpush.bf16.msra.mxu0 0
    %2133 = vmatpush.bf16.msra.mxu0 0
    %2134 = vmatpush.bf16.msra.mxu0 0
    %2135 = vmatpush.bf16.msra.mxu0 0
    %2136 = vmatpush.bf16.msra.mxu0 0
    %2137 = vmatpush.bf16.msra.mxu0 %v442
    %2138 = vmatpush.bf16.msra.mxu0 %v439
    %2139 = vmatmul.bf16.gmra.mxu0 %v2129
    %v2140 = vpop.f32.mrf.mxu0
    %v2141 = vadd.f32 %v452, %v2140
    %v2142 = vpop.f32.mrf.mxu0
    %2143 = vdwg.mxu0
    %2144 = vmatpush.bf16.msra.mxu0 0
    %2145 = vmatpush.bf16.msra.mxu0 0
    %2146 = vmatpush.bf16.msra.mxu0 0
    %2147 = vmatpush.bf16.msra.mxu0 0
    %2148 = vmatpush.bf16.msra.mxu0 0
    %2149 = vmatpush.bf16.msra.mxu0 0
    %2150 = vmatpush.bf16.msra.mxu0 %v443
    %2151 = vmatpush.bf16.msra.mxu0 %v440
    %2152 = vmatmul.bf16.gmra.mxu0 %v2129
    %v2153 = vpop.f32.mrf.mxu0
    %v2154 = vadd.f32 %v453, %v2153
    %v2155 = vpop.f32.mrf.mxu0
    %2156 = vdwg.mxu0
    %2157 = vmatpush.bf16.msra.mxu0 0
    %2158 = vmatpush.bf16.msra.mxu0 0
    %2159 = vmatpush.bf16.msra.mxu0 0
    %2160 = vmatpush.bf16.msra.mxu0 0
    %2161 = vmatpush.bf16.msra.mxu0 0
    %2162 = vmatpush.bf16.msra.mxu0 0
    %2163 = vmatpush.bf16.msra.mxu0 %v444
    %2164 = vmatpush.bf16.msra.mxu0 %v441
    %2165 = vmatmul.bf16.gmra.mxu0 %v2129
    %v2166 = vpop.f32.mrf.mxu0
    %v2167 = vadd.f32 %v454, %v2166
    %v2168 = vpop.f32.mrf.mxu0
    %2169 = vdwg.mxu0
    %v2170 = vadd.f32 %v2098, %v2141
    %v2171 = vxor.u32 %v2170, 2147483648
    %v2172 = vmul.f32 %v2171, 1.442695
    %v2173 = vpow.pop %v2172
    %v2174 = vadd.f32 %v2173, 1.0
    %v2175 = vrcp.pop %v2174
    %v2176 = vmul.f32 %v2174, %v2175
    %v2177 = vsub.f32 1.0, %v2176
    %v2178 = vmul.f32 %v2175, %v2177
    %v2179 = vadd.f32 %v2175, %v2178
    %vm2180 = vweird.f32 %v2174
    %vm2181 = vweird.f32 %v2175
    %vm2182 = vmor %vm2180, %vm2181
    %v2183 = vsel %vm2182, %v2175, %v2179
    %v2184 = vand.u32 2147483647, %v2174
    %vm2185 = vcmp.eq.f32.partialorder %v2184, 8.507059e+37
    %v2186 = vand.u32 %v2174, 2147483648
    %v2187 = vor.u32 1.1754944e-38, %v2186
    %v2188 = vsel %vm2185, %v2187, %v2183
    %v2189 = vmul.f32 1.0, %v2188
    %v2190 = vadd.f32 %v2111, %v2154
    %v2191 = vxor.u32 %v2190, 2147483648
    %v2192 = vmul.f32 %v2191, 1.442695
    %v2193 = vpow.pop %v2192
    %v2194 = vadd.f32 %v2193, 1.0
    %v2195 = vrcp.pop %v2194
    %v2196 = vmul.f32 %v2194, %v2195
    %v2197 = vsub.f32 1.0, %v2196
    %v2198 = vmul.f32 %v2195, %v2197
    %v2199 = vadd.f32 %v2195, %v2198
    %vm2200 = vweird.f32 %v2194
    %vm2201 = vweird.f32 %v2195
    %vm2202 = vmor %vm2200, %vm2201
    %v2203 = vsel %vm2202, %v2195, %v2199
    %v2204 = vand.u32 2147483647, %v2194
    %vm2205 = vcmp.eq.f32.partialorder %v2204, 8.507059e+37
    %v2206 = vand.u32 %v2194, 2147483648
    %v2207 = vor.u32 1.1754944e-38, %v2206
    %v2208 = vsel %vm2205, %v2207, %v2203
    %v2209 = vmul.f32 1.0, %v2208
    %v2210 = vmul.f32 %v2189, %v2167
    %v2211 = vadd.f32 %v2124, %v2210
    %v2212 = vtanh.pop %v2211
    %v2213 = vsub.f32 1.0, %v2209
    %v2214 = vmul.f32 %v2213, %v2212
    %v2215 = vmul.f32 %v2209, %v1938
    %v2216 = vadd.f32 %v2214, %v2215
    %2217 = vst.msk [vmem:[#allocation2 + $0x6] sm:$0x1] %vm544, %v2078
    %2218 = vst.msk [vmem:[#allocation3 + $0x1] sm:$0x1] %vm544, %v2216
    %v2219 = vld [vmem:[%s0] sm:$0x8]
    %v2220 = vld [vmem:[%s0] sm:$0x1]
    %v2222 = vunpack.c.l.b16 %v2219
    %v2223 = vpack.c.b16 %v2222, %v2222
    %v2225 = vshrl.u32 %v2223, 16
    %v2227 = vrot.slane %v2225, 3
    %v2229 = vsel %vm160, %v2227, 0
    %2231 = vmatpush.bf16.msra.mxu0 0
    %2232 = vmatpush.bf16.msra.mxu0 0
    %2233 = vmatpush.bf16.msra.mxu0 0
    %2234 = vmatpush.bf16.msra.mxu0 0
    %2235 = vmatpush.bf16.msra.mxu0 0
    %2236 = vmatpush.bf16.msra.mxu0 0
    %2237 = vmatpush.bf16.msra.mxu0 %v144
    %2238 = vmatpush.bf16.msra.mxu0 %v141
    %2239 = vmatmul.bf16.gmra.mxu0 %v2229
    %v2240 = vpop.f32.mrf.mxu0
    %v2241 = vadd.f32 %v154, %v2240
    %v2242 = vpop.f32.mrf.mxu0
    %2243 = vdwg.mxu0
    %2244 = vmatpush.bf16.msra.mxu0 0
    %2245 = vmatpush.bf16.msra.mxu0 0
    %2246 = vmatpush.bf16.msra.mxu0 0
    %2247 = vmatpush.bf16.msra.mxu0 0
    %2248 = vmatpush.bf16.msra.mxu0 0
    %2249 = vmatpush.bf16.msra.mxu0 0
    %2250 = vmatpush.bf16.msra.mxu0 %v145
    %2251 = vmatpush.bf16.msra.mxu0 %v142
    %2252 = vmatmul.bf16.gmra.mxu0 %v2229
    %v2253 = vpop.f32.mrf.mxu0
    %v2254 = vadd.f32 %v155, %v2253
    %v2255 = vpop.f32.mrf.mxu0
    %2256 = vdwg.mxu0
    %2257 = vmatpush.bf16.msra.mxu0 0
    %2258 = vmatpush.bf16.msra.mxu0 0
    %2259 = vmatpush.bf16.msra.mxu0 0
    %2260 = vmatpush.bf16.msra.mxu0 0
    %2261 = vmatpush.bf16.msra.mxu0 0
    %2262 = vmatpush.bf16.msra.mxu0 0
    %2263 = vmatpush.bf16.msra.mxu0 %v146
    %2264 = vmatpush.bf16.msra.mxu0 %v143
    %2265 = vmatmul.bf16.gmra.mxu0 %v2229
    %v2266 = vpop.f32.mrf.mxu0
    %v2267 = vadd.f32 %v156, %v2266
    %v2268 = vpop.f32.mrf.mxu0
    %2269 = vdwg.mxu0
    %v2270 = vpack.c.bf16 %v2078, %v2078
    %v2272 = vsel %vm160, %v2270, 0
    %2274 = vmatpush.bf16.msra.mxu0 0
    %2275 = vmatpush.bf16.msra.mxu0 0
    %2276 = vmatpush.bf16.msra.mxu0 0
    %2277 = vmatpush.bf16.msra.mxu0 0
    %2278 = vmatpush.bf16.msra.mxu0 0
    %2279 = vmatpush.bf16.msra.mxu0 0
    %2280 = vmatpush.bf16.msra.mxu0 %v226
    %2281 = vmatpush.bf16.msra.mxu0 %v223
    %2282 = vmatmul.bf16.gmra.mxu0 %v2272
    %v2283 = vpop.f32.mrf.mxu0
    %v2284 = vadd.f32 %v236, %v2283
    %v2285 = vpop.f32.mrf.mxu0
    %2286 = vdwg.mxu0
    %2287 = vmatpush.bf16.msra.mxu0 0
    %2288 = vmatpush.bf16.msra.mxu0 0
    %2289 = vmatpush.bf16.msra.mxu0 0
    %2290 = vmatpush.bf16.msra.mxu0 0
    %2291 = vmatpush.bf16.msra.mxu0 0
    %2292 = vmatpush.bf16.msra.mxu0 0
    %2293 = vmatpush.bf16.msra.mxu0 %v227
    %2294 = vmatpush.bf16.msra.mxu0 %v224
    %2295 = vmatmul.bf16.gmra.mxu0 %v2272
    %v2296 = vpop.f32.mrf.mxu0
    %v2297 = vadd.f32 %v237, %v2296
    %v2298 = vpop.f32.mrf.mxu0
    %2299 = vdwg.mxu0
    %2300 = vmatpush.bf16.msra.mxu0 0
    %2301 = vmatpush.bf16.msra.mxu0 0
    %2302 = vmatpush.bf16.msra.mxu0 0
    %2303 = vmatpush.bf16.msra.mxu0 0
    %2304 = vmatpush.bf16.msra.mxu0 0
    %2305 = vmatpush.bf16.msra.mxu0 0
    %2306 = vmatpush.bf16.msra.mxu0 %v228
    %2307 = vmatpush.bf16.msra.mxu0 %v225
    %2308 = vmatmul.bf16.gmra.mxu0 %v2272
    %v2309 = vpop.f32.mrf.mxu0
    %v2310 = vadd.f32 %v238, %v2309
    %v2311 = vpop.f32.mrf.mxu0
    %2312 = vdwg.mxu0
    %v2313 = vadd.f32 %v2241, %v2284
    %v2314 = vxor.u32 %v2313, 2147483648
    %v2315 = vmul.f32 %v2314, 1.442695
    %v2316 = vpow.pop %v2315
    %v2317 = vadd.f32 %v2316, 1.0
    %v2318 = vrcp.pop %v2317
    %v2319 = vmul.f32 %v2317, %v2318
    %v2320 = vsub.f32 1.0, %v2319
    %v2321 = vmul.f32 %v2318, %v2320
    %v2322 = vadd.f32 %v2318, %v2321
    %vm2323 = vweird.f32 %v2317
    %vm2324 = vweird.f32 %v2318
    %vm2325 = vmor %vm2323, %vm2324
    %v2326 = vsel %vm2325, %v2318, %v2322
    %v2327 = vand.u32 2147483647, %v2317
    %vm2328 = vcmp.eq.f32.partialorder %v2327, 8.507059e+37
    %v2329 = vand.u32 %v2317, 2147483648
    %v2330 = vor.u32 1.1754944e-38, %v2329
    %v2331 = vsel %vm2328, %v2330, %v2326
    %v2332 = vmul.f32 1.0, %v2331
    %v2333 = vadd.f32 %v2254, %v2297
    %v2334 = vxor.u32 %v2333, 2147483648
    %v2335 = vmul.f32 %v2334, 1.442695
    %v2336 = vpow.pop %v2335
    %v2337 = vadd.f32 %v2336, 1.0
    %v2338 = vrcp.pop %v2337
    %v2339 = vmul.f32 %v2337, %v2338
    %v2340 = vsub.f32 1.0, %v2339
    %v2341 = vmul.f32 %v2338, %v2340
    %v2342 = vadd.f32 %v2338, %v2341
    %vm2343 = vweird.f32 %v2337
    %vm2344 = vweird.f32 %v2338
    %vm2345 = vmor %vm2343, %vm2344
    %v2346 = vsel %vm2345, %v2338, %v2342
    %v2347 = vand.u32 2147483647, %v2337
    %vm2348 = vcmp.eq.f32.partialorder %v2347, 8.507059e+37
    %v2349 = vand.u32 %v2337, 2147483648
    %v2350 = vor.u32 1.1754944e-38, %v2349
    %v2351 = vsel %vm2348, %v2350, %v2346
    %v2352 = vmul.f32 1.0, %v2351
    %v2353 = vmul.f32 %v2332, %v2310
    %v2354 = vadd.f32 %v2267, %v2353
    %v2355 = vtanh.pop %v2354
    %v2356 = vsub.f32 1.0, %v2352
    %v2357 = vmul.f32 %v2356, %v2355
    %v2358 = vmul.f32 %v2352, %v2078
    %v2359 = vadd.f32 %v2357, %v2358
    %v2361 = vsel %vm160, %v2220, 0
    %2363 = vmatpush.bf16.msra.mxu0 0
    %2364 = vmatpush.bf16.msra.mxu0 0
    %2365 = vmatpush.bf16.msra.mxu0 0
    %2366 = vmatpush.bf16.msra.mxu0 0
    %2367 = vmatpush.bf16.msra.mxu0 0
    %2368 = vmatpush.bf16.msra.mxu0 0
    %2369 = vmatpush.bf16.msra.mxu0 %v361
    %2370 = vmatpush.bf16.msra.mxu0 %v358
    %2371 = vmatmul.bf16.gmra.mxu0 %v2361
    %v2372 = vpop.f32.mrf.mxu0
    %v2373 = vadd.f32 %v371, %v2372
    %v2374 = vpop.f32.mrf.mxu0
    %2375 = vdwg.mxu0
    %2376 = vmatpush.bf16.msra.mxu0 0
    %2377 = vmatpush.bf16.msra.mxu0 0
    %2378 = vmatpush.bf16.msra.mxu0 0
    %2379 = vmatpush.bf16.msra.mxu0 0
    %2380 = vmatpush.bf16.msra.mxu0 0
    %2381 = vmatpush.bf16.msra.mxu0 0
    %2382 = vmatpush.bf16.msra.mxu0 %v362
    %2383 = vmatpush.bf16.msra.mxu0 %v359
    %2384 = vmatmul.bf16.gmra.mxu0 %v2361
    %v2385 = vpop.f32.mrf.mxu0
    %v2386 = vadd.f32 %v372, %v2385
    %v2387 = vpop.f32.mrf.mxu0
    %2388 = vdwg.mxu0
    %2389 = vmatpush.bf16.msra.mxu0 0
    %2390 = vmatpush.bf16.msra.mxu0 0
    %2391 = vmatpush.bf16.msra.mxu0 0
    %2392 = vmatpush.bf16.msra.mxu0 0
    %2393 = vmatpush.bf16.msra.mxu0 0
    %2394 = vmatpush.bf16.msra.mxu0 0
    %2395 = vmatpush.bf16.msra.mxu0 %v363
    %2396 = vmatpush.bf16.msra.mxu0 %v360
    %2397 = vmatmul.bf16.gmra.mxu0 %v2361
    %v2398 = vpop.f32.mrf.mxu0
    %v2399 = vadd.f32 %v373, %v2398
    %v2400 = vpop.f32.mrf.mxu0
    %2401 = vdwg.mxu0
    %v2402 = vpack.c.bf16 %v2216, %v2216
    %v2404 = vsel %vm160, %v2402, 0
    %2406 = vmatpush.bf16.msra.mxu0 0
    %2407 = vmatpush.bf16.msra.mxu0 0
    %2408 = vmatpush.bf16.msra.mxu0 0
    %2409 = vmatpush.bf16.msra.mxu0 0
    %2410 = vmatpush.bf16.msra.mxu0 0
    %2411 = vmatpush.bf16.msra.mxu0 0
    %2412 = vmatpush.bf16.msra.mxu0 %v442
    %2413 = vmatpush.bf16.msra.mxu0 %v439
    %2414 = vmatmul.bf16.gmra.mxu0 %v2404
    %v2415 = vpop.f32.mrf.mxu0
    %v2416 = vadd.f32 %v452, %v2415
    %v2417 = vpop.f32.mrf.mxu0
    %2418 = vdwg.mxu0
    %2419 = vmatpush.bf16.msra.mxu0 0
    %2420 = vmatpush.bf16.msra.mxu0 0
    %2421 = vmatpush.bf16.msra.mxu0 0
    %2422 = vmatpush.bf16.msra.mxu0 0
    %2423 = vmatpush.bf16.msra.mxu0 0
    %2424 = vmatpush.bf16.msra.mxu0 0
    %2425 = vmatpush.bf16.msra.mxu0 %v443
    %2426 = vmatpush.bf16.msra.mxu0 %v440
    %2427 = vmatmul.bf16.gmra.mxu0 %v2404
    %v2428 = vpop.f32.mrf.mxu0
    %v2429 = vadd.f32 %v453, %v2428
    %v2430 = vpop.f32.mrf.mxu0
    %2431 = vdwg.mxu0
    %2432 = vmatpush.bf16.msra.mxu0 0
    %2433 = vmatpush.bf16.msra.mxu0 0
    %2434 = vmatpush.bf16.msra.mxu0 0
    %2435 = vmatpush.bf16.msra.mxu0 0
    %2436 = vmatpush.bf16.msra.mxu0 0
    %2437 = vmatpush.bf16.msra.mxu0 0
    %2438 = vmatpush.bf16.msra.mxu0 %v444
    %2439 = vmatpush.bf16.msra.mxu0 %v441
    %2440 = vmatmul.bf16.gmra.mxu0 %v2404
    %v2441 = vpop.f32.mrf.mxu0
    %v2442 = vadd.f32 %v454, %v2441
    %v2443 = vpop.f32.mrf.mxu0
    %2444 = vdwg.mxu0
    %v2445 = vadd.f32 %v2373, %v2416
    %v2446 = vxor.u32 %v2445, 2147483648
    %v2447 = vmul.f32 %v2446, 1.442695
    %v2448 = vpow.pop %v2447
    %v2449 = vadd.f32 %v2448, 1.0
    %v2450 = vrcp.pop %v2449
    %v2451 = vmul.f32 %v2449, %v2450
    %v2452 = vsub.f32 1.0, %v2451
    %v2453 = vmul.f32 %v2450, %v2452
    %v2454 = vadd.f32 %v2450, %v2453
    %vm2455 = vweird.f32 %v2449
    %vm2456 = vweird.f32 %v2450
    %vm2457 = vmor %vm2455, %vm2456
    %v2458 = vsel %vm2457, %v2450, %v2454
    %v2459 = vand.u32 2147483647, %v2449
    %vm2460 = vcmp.eq.f32.partialorder %v2459, 8.507059e+37
    %v2461 = vand.u32 %v2449, 2147483648
    %v2462 = vor.u32 1.1754944e-38, %v2461
    %v2463 = vsel %vm2460, %v2462, %v2458
    %v2464 = vmul.f32 1.0, %v2463
    %v2465 = vadd.f32 %v2386, %v2429
    %v2466 = vxor.u32 %v2465, 2147483648
    %v2467 = vmul.f32 %v2466, 1.442695
    %v2468 = vpow.pop %v2467
    %v2469 = vadd.f32 %v2468, 1.0
    %v2470 = vrcp.pop %v2469
    %v2471 = vmul.f32 %v2469, %v2470
    %v2472 = vsub.f32 1.0, %v2471
    %v2473 = vmul.f32 %v2470, %v2472
    %v2474 = vadd.f32 %v2470, %v2473
    %vm2475 = vweird.f32 %v2469
    %vm2476 = vweird.f32 %v2470
    %vm2477 = vmor %vm2475, %vm2476
    %v2478 = vsel %vm2477, %v2470, %v2474
    %v2479 = vand.u32 2147483647, %v2469
    %vm2480 = vcmp.eq.f32.partialorder %v2479, 8.507059e+37
    %v2481 = vand.u32 %v2469, 2147483648
    %v2482 = vor.u32 1.1754944e-38, %v2481
    %v2483 = vsel %vm2480, %v2482, %v2478
    %v2484 = vmul.f32 1.0, %v2483
    %v2485 = vmul.f32 %v2464, %v2442
    %v2486 = vadd.f32 %v2399, %v2485
    %v2487 = vtanh.pop %v2486
    %v2488 = vsub.f32 1.0, %v2484
    %v2489 = vmul.f32 %v2488, %v2487
    %v2490 = vmul.f32 %v2484, %v2216
    %v2491 = vadd.f32 %v2489, %v2490
    %2492 = vst.msk [vmem:[#allocation2 + $0x7] sm:$0x1] %vm544, %v2359
    %2493 = vst.msk [vmem:[#allocation3] sm:$0x1] %vm544, %v2491
    %v2494 = vld [vmem:[#allocation2] sm:$0xff]
    %v2495 = vld [vmem:[#allocation3] sm:$0xff]
    %v2496 = vadd.f32 %v2494, %v2495
    %v2497 = vpack.c.bf16 %v2496, %v2496
    %vm2498 = vcmask 257024
    %2499 = vst.msk [vmem:[#allocation4] sm:$0xf] %vm2498, %v2497
    %2500 = vst.msk [vmem:[#allocation5] sm:$0x1] %vm544, %v2359
    %vm2501 = vcmask 0
    %2502 = vst.msk [vmem:[#allocation6] sm:$0x1] %vm2501, 1
    %vm2503 = vcmask 57344
    %2504 = vst.msk [vmem:[#allocation10] sm:$0x1] %vm2503, 0
    %2505 = vst.msk [vmem:[#allocation11] sm:$0x1] %vm2503, 0.0
    %v2506 = vlaneseq
    %v2507 = vand.u32 %v2506, 127
    loop: start=0, step=1, limit=8
    $region82: #{greedy_search_decoder.1} parent=1 // loop_pre_header
      _
    $region83: #{greedy_search_decoder.1} parent=1 // loop_header
      %s2509 = sphi 0, %s2513
      %p2510 = scmp.ge.s32.totalorder %s2509, 8
    $region84: #{greedy_search_decoder.1} parent=1 // loop_header_branch
      %2512 = sbr.rel (%p2510) target = $region88
    $region85: #{greedy_search_decoder.1} parent=1 // loop_body
      %v2514 = vld [vmem:[#allocation6] sm:$0x1]
      %s2515 = vtos %v2514
      %s2516 = scalar_lea.vmem %s1, %s2515
      %v2517 = vld [vmem:[%s2516] sm:$0x1]
      %v2518 = vld [vmem:[#allocation5] sm:$0x1]
      %v2519 = vld [vmem:[#allocation7] sm:$0xff]
      %v2520 = vld [vmem:[#allocation7 + $0x8] sm:$0xf]
      %v2521 = vld [vmem:[#allocation7 + $0xc] sm:$0xff]
      %v2522 = vld [vmem:[#allocation7 + $0x14] sm:$0xf]
      %v2523 = vld [vmem:[#allocation7 + $0x18] sm:$0xff]
      %v2524 = vld [vmem:[#allocation7 + $0x20] sm:$0xf]
      %v2525 = vld [vmem:[#allocation7 + $0x24] sm:$0xff]
      %v2526 = vld [vmem:[#allocation7 + $0x2c] sm:$0xf]
      %v2527 = vld [vmem:[%s11] sm:$0xff]
      %v2528 = vld [vmem:[%s11 + $0x8] sm:$0xf]
      %v2529 = vld [vmem:[%s11 + $0xc] sm:$0xff]
      %v2530 = vld [vmem:[%s11 + $0x14] sm:$0xf]
      %v2531 = vld [vmem:[%s11 + $0x18] sm:$0xff]
      %v2532 = vld [vmem:[%s11 + $0x20] sm:$0xf]
      %v2533 = vld [vmem:[%s11 + $0x24] sm:$0xff]
      %v2534 = vld [vmem:[%s11 + $0x2c] sm:$0xf]
      %v2535 = vld [vmem:[%s12] sm:$0x7]
      %v2536 = vld [vmem:[%s13] sm:$0x7]
      %v2545 = vunpack.c.l.b16 %v2519
      %v2546 = vunpack.c.h.b16 %v2519
      %v2547 = vunpack.c.l.b16 %v2520
      %v2548 = vunpack.c.l.b16 %v2521
      %v2549 = vunpack.c.h.b16 %v2521
      %v2550 = vunpack.c.l.b16 %v2522
      %v2551 = vunpack.c.l.b16 %v2523
      %v2552 = vunpack.c.h.b16 %v2523
      %v2553 = vunpack.c.l.b16 %v2524
      %v2554 = vunpack.c.l.b16 %v2525
      %v2555 = vunpack.c.h.b16 %v2525
      %v2556 = vunpack.c.l.b16 %v2526
      %v2557 = vpack.c.b16 %v2548, %v2545
      %v2558 = vpack.c.b16 %v2549, %v2546
      %v2559 = vpack.c.b16 %v2550, %v2547
      %v2560 = vpack.c.b16 %v2554, %v2551
      %v2561 = vpack.c.b16 %v2555, %v2552
      %v2562 = vpack.c.b16 %v2556, %v2553
      %v2570 = vperm.slane %v2535, 0
      %v2571 = vperm.slane %v2535, 1
      %v2572 = vperm.slane %v2535, 2
      %v2577 = vsel %vm160, %v2517, 0
      %2579 = vmatpush.bf16.msra.mxu0 0
      %2580 = vmatpush.bf16.msra.mxu0 0
      %2581 = vmatpush.bf16.msra.mxu0 0
      %2582 = vmatpush.bf16.msra.mxu0 0
      %2583 = vmatpush.bf16.msra.mxu0 0
      %2584 = vmatpush.bf16.msra.mxu0 0
      %2585 = vmatpush.bf16.msra.mxu0 %v2560
      %2586 = vmatpush.bf16.msra.mxu0 %v2557
      %2587 = vmatmul.bf16.gmra.mxu0 %v2577
      %v2588 = vpop.f32.mrf.mxu0
      %v2589 = vadd.f32 %v2570, %v2588
      %v2590 = vpop.f32.mrf.mxu0
      %2591 = vdwg.mxu0
      %2592 = vmatpush.bf16.msra.mxu0 0
      %2593 = vmatpush.bf16.msra.mxu0 0
      %2594 = vmatpush.bf16.msra.mxu0 0
      %2595 = vmatpush.bf16.msra.mxu0 0
      %2596 = vmatpush.bf16.msra.mxu0 0
      %2597 = vmatpush.bf16.msra.mxu0 0
      %2598 = vmatpush.bf16.msra.mxu0 %v2561
      %2599 = vmatpush.bf16.msra.mxu0 %v2558
      %2600 = vmatmul.bf16.gmra.mxu0 %v2577
      %v2601 = vpop.f32.mrf.mxu0
      %v2602 = vadd.f32 %v2571, %v2601
      %v2603 = vpop.f32.mrf.mxu0
      %2604 = vdwg.mxu0
      %2605 = vmatpush.bf16.msra.mxu0 0
      %2606 = vmatpush.bf16.msra.mxu0 0
      %2607 = vmatpush.bf16.msra.mxu0 0
      %2608 = vmatpush.bf16.msra.mxu0 0
      %2609 = vmatpush.bf16.msra.mxu0 0
      %2610 = vmatpush.bf16.msra.mxu0 0
      %2611 = vmatpush.bf16.msra.mxu0 %v2562
      %2612 = vmatpush.bf16.msra.mxu0 %v2559
      %2613 = vmatmul.bf16.gmra.mxu0 %v2577
      %v2614 = vpop.f32.mrf.mxu0
      %v2615 = vadd.f32 %v2572, %v2614
      %v2616 = vpop.f32.mrf.mxu0
      %2617 = vdwg.mxu0
      %v2618 = vpack.c.bf16 %v2518, %v2518
      %v2627 = vunpack.c.l.b16 %v2527
      %v2628 = vunpack.c.h.b16 %v2527
      %v2629 = vunpack.c.l.b16 %v2528
      %v2630 = vunpack.c.l.b16 %v2529
      %v2631 = vunpack.c.h.b16 %v2529
      %v2632 = vunpack.c.l.b16 %v2530
      %v2633 = vunpack.c.l.b16 %v2531
      %v2634 = vunpack.c.h.b16 %v2531
      %v2635 = vunpack.c.l.b16 %v2532
      %v2636 = vunpack.c.l.b16 %v2533
      %v2637 = vunpack.c.h.b16 %v2533
      %v2638 = vunpack.c.l.b16 %v2534
      %v2639 = vpack.c.b16 %v2630, %v2627
      %v2640 = vpack.c.b16 %v2631, %v2628
      %v2641 = vpack.c.b16 %v2632, %v2629
      %v2642 = vpack.c.b16 %v2636, %v2633
      %v2643 = vpack.c.b16 %v2637, %v2634
      %v2644 = vpack.c.b16 %v2638, %v2635
      %v2652 = vperm.slane %v2536, 0
      %v2653 = vperm.slane %v2536, 1
      %v2654 = vperm.slane %v2536, 2
      %v2659 = vsel %vm160, %v2618, 0
      %2661 = vmatpush.bf16.msra.mxu0 0
      %2662 = vmatpush.bf16.msra.mxu0 0
      %2663 = vmatpush.bf16.msra.mxu0 0
      %2664 = vmatpush.bf16.msra.mxu0 0
      %2665 = vmatpush.bf16.msra.mxu0 0
      %2666 = vmatpush.bf16.msra.mxu0 0
      %2667 = vmatpush.bf16.msra.mxu0 %v2642
      %2668 = vmatpush.bf16.msra.mxu0 %v2639
      %2669 = vmatmul.bf16.gmra.mxu0 %v2659
      %v2670 = vpop.f32.mrf.mxu0
      %v2671 = vadd.f32 %v2652, %v2670
      %v2672 = vpop.f32.mrf.mxu0
      %2673 = vdwg.mxu0
      %2674 = vmatpush.bf16.msra.mxu0 0
      %2675 = vmatpush.bf16.msra.mxu0 0
      %2676 = vmatpush.bf16.msra.mxu0 0
      %2677 = vmatpush.bf16.msra.mxu0 0
      %2678 = vmatpush.bf16.msra.mxu0 0
      %2679 = vmatpush.bf16.msra.mxu0 0
      %2680 = vmatpush.bf16.msra.mxu0 %v2643
      %2681 = vmatpush.bf16.msra.mxu0 %v2640
      %2682 = vmatmul.bf16.gmra.mxu0 %v2659
      %v2683 = vpop.f32.mrf.mxu0
      %v2684 = vadd.f32 %v2653, %v2683
      %v2685 = vpop.f32.mrf.mxu0
      %2686 = vdwg.mxu0
      %2687 = vmatpush.bf16.msra.mxu0 0
      %2688 = vmatpush.bf16.msra.mxu0 0
      %2689 = vmatpush.bf16.msra.mxu0 0
      %2690 = vmatpush.bf16.msra.mxu0 0
      %2691 = vmatpush.bf16.msra.mxu0 0
      %2692 = vmatpush.bf16.msra.mxu0 0
      %2693 = vmatpush.bf16.msra.mxu0 %v2644
      %2694 = vmatpush.bf16.msra.mxu0 %v2641
      %2695 = vmatmul.bf16.gmra.mxu0 %v2659
      %v2696 = vpop.f32.mrf.mxu0
      %v2697 = vadd.f32 %v2654, %v2696
      %v2698 = vpop.f32.mrf.mxu0
      %2699 = vdwg.mxu0
      %v2700 = vadd.f32 %v2589, %v2671
      %v2701 = vxor.u32 %v2700, 2147483648
      %v2702 = vmul.f32 %v2701, 1.442695
      %v2703 = vpow.pop %v2702
      %v2704 = vadd.f32 %v2703, 1.0
      %v2705 = vrcp.pop %v2704
      %v2706 = vmul.f32 %v2704, %v2705
      %v2707 = vsub.f32 1.0, %v2706
      %v2708 = vmul.f32 %v2705, %v2707
      %v2709 = vadd.f32 %v2705, %v2708
      %vm2710 = vweird.f32 %v2704
      %vm2711 = vweird.f32 %v2705
      %vm2712 = vmor %vm2710, %vm2711
      %v2713 = vsel %vm2712, %v2705, %v2709
      %v2714 = vand.u32 2147483647, %v2704
      %vm2715 = vcmp.eq.f32.partialorder %v2714, 8.507059e+37
      %v2716 = vand.u32 %v2704, 2147483648
      %v2717 = vor.u32 1.1754944e-38, %v2716
      %v2718 = vsel %vm2715, %v2717, %v2713
      %v2719 = vmul.f32 1.0, %v2718
      %v2720 = vadd.f32 %v2602, %v2684
      %v2721 = vxor.u32 %v2720, 2147483648
      %v2722 = vmul.f32 %v2721, 1.442695
      %v2723 = vpow.pop %v2722
      %v2724 = vadd.f32 %v2723, 1.0
      %v2725 = vrcp.pop %v2724
      %v2726 = vmul.f32 %v2724, %v2725
      %v2727 = vsub.f32 1.0, %v2726
      %v2728 = vmul.f32 %v2725, %v2727
      %v2729 = vadd.f32 %v2725, %v2728
      %vm2730 = vweird.f32 %v2724
      %vm2731 = vweird.f32 %v2725
      %vm2732 = vmor %vm2730, %vm2731
      %v2733 = vsel %vm2732, %v2725, %v2729
      %v2734 = vand.u32 2147483647, %v2724
      %vm2735 = vcmp.eq.f32.partialorder %v2734, 8.507059e+37
      %v2736 = vand.u32 %v2724, 2147483648
      %v2737 = vor.u32 1.1754944e-38, %v2736
      %v2738 = vsel %vm2735, %v2737, %v2733
      %v2739 = vmul.f32 1.0, %v2738
      %v2740 = vmul.f32 %v2719, %v2697
      %v2741 = vadd.f32 %v2615, %v2740
      %v2742 = vtanh.pop %v2741
      %v2743 = vsub.f32 1.0, %v2739
      %v2744 = vmul.f32 %v2743, %v2742
      %v2745 = vmul.f32 %v2739, %v2518
      %v2746 = vadd.f32 %v2744, %v2745
      %v2747 = vpack.c.bf16 %v2746, %v2746
      %v2748 = vld [vmem:[#allocation4] sm:$0xf]
      %v2750 = vsel %vm160, %v2747, 0
      %v2753 = vsel %vm160, %v2748, 0
      %2755 = vmatpush.bf16.xpose.msra.mxu0 0
      %2756 = vmatpush.bf16.xpose.msra.mxu0 0
      %2757 = vmatpush.bf16.xpose.msra.mxu0 0
      %2758 = vmatpush.bf16.xpose.msra.mxu0 0
      %2759 = vmatpush.bf16.xpose.msra.mxu0 0
      %2760 = vmatpush.bf16.xpose.msra.mxu0 0
      %2761 = vmatpush.bf16.xpose.msra.mxu0 0
      %2762 = vmatpush.bf16.xpose.msra.mxu0 %v2753
      %2763 = vmatmul.bf16.gmra.mxu0 %v2750
      %v2764 = vpop.f32.mrf.mxu0
      %v2765 = vadd.f32 0.0, %v2764
      %v2766 = vpop.f32.mrf.mxu0
      %2767 = vdwg.mxu0
      %v2768 = vsel %vm2503, %v2765, -inf
      %2769 = vmax.xlane.f32.xlu0 %v2768
      %v2770 = vpop.xlane.xlu0 %2769
      %v2771 = vsub.f32 %v2765, %v2770
      %v2772 = vmul.f32 %v2771, 1.442695
      %v2773 = vpow.pop %v2772
      %v2774 = vsel %vm2503, %v2773, 0.0
      %2775 = vadd.xlane.f32.xlu0 %v2774
      %v2776 = vpop.xlane.xlu0 %2775
      %v2777 = vrcp.pop %v2776
      %v2778 = vmul.f32 %v2773, %v2777
      %v2779 = vpack.c.bf16 %v2778, %v2778
      %vm2780 = vcmask 64512
      %v2782 = vsel %vm2780, %v2779, 0
      %vm2784 = vcmask 1043456
      %v2785 = vsel %vm2784, %v2748, 0
      %2787 = vmatpush.bf16.msra.mxu0 0
      %2788 = vmatpush.bf16.msra.mxu0 0
      %2789 = vmatpush.bf16.msra.mxu0 0
      %2790 = vmatpush.bf16.msra.mxu0 0
      %2791 = vmatpush.bf16.msra.mxu0 0
      %2792 = vmatpush.bf16.msra.mxu0 0
      %2793 = vmatpush.bf16.msra.mxu0 0
      %2794 = vmatpush.bf16.msra.mxu0 %v2785
      %2795 = vmatmul.bf16.gmra.mxu0 %v2782
      %v2796 = vpop.f32.mrf.mxu0
      %v2797 = vadd.f32 0.0, %v2796
      %v2798 = vpop.f32.mrf.mxu0
      %2799 = vdwg.mxu0
      %v2800 = vld [vmem:[%s14] sm:$0xf]
      %v2801 = vld [vmem:[%s14 + $0x4] sm:$0xf]
      %v2802 = vld [vmem:[%s14 + $0x8] sm:$0xf]
      %v2803 = vld [vmem:[%s14 + $0xc] sm:$0xf]
      %v2804 = vpack.c.bf16 %v2797, %v2797
      %v2805 = vld [vmem:[%s15] sm:$0xf]
      %v2806 = vld [vmem:[%s15 + $0x4] sm:$0xf]
      %v2807 = vld [vmem:[%s15 + $0x8] sm:$0xf]
      %v2808 = vld [vmem:[%s15 + $0xc] sm:$0xf]
      %v2813 = vunpack.c.l.b16 %v2805
      %v2814 = vunpack.c.l.b16 %v2806
      %v2815 = vunpack.c.l.b16 %v2807
      %v2816 = vunpack.c.l.b16 %v2808
      %v2817 = vpack.c.b16 %v2814, %v2813
      %v2818 = vpack.c.b16 %v2816, %v2815
      %v2822 = vsel %vm160, %v2804, 0
      %2824 = vmatpush.bf16.msra.mxu0 0
      %2825 = vmatpush.bf16.msra.mxu0 0
      %2826 = vmatpush.bf16.msra.mxu0 0
      %2827 = vmatpush.bf16.msra.mxu0 0
      %2828 = vmatpush.bf16.msra.mxu0 0
      %2829 = vmatpush.bf16.msra.mxu0 0
      %2830 = vmatpush.bf16.msra.mxu0 %v2818
      %2831 = vmatpush.bf16.msra.mxu0 %v2817
      %2832 = vmatmul.bf16.gmra.mxu0 %v2822
      %v2833 = vpop.f32.mrf.mxu0
      %v2834 = vadd.f32 0.0, %v2833
      %v2835 = vpop.f32.mrf.mxu0
      %2836 = vdwg.mxu0
      %v2841 = vunpack.c.l.b16 %v2800
      %v2842 = vunpack.c.l.b16 %v2801
      %v2843 = vunpack.c.l.b16 %v2802
      %v2844 = vunpack.c.l.b16 %v2803
      %v2845 = vpack.c.b16 %v2842, %v2841
      %v2846 = vpack.c.b16 %v2844, %v2843
      %2849 = vmatpush.bf16.msra.mxu0 0
      %2850 = vmatpush.bf16.msra.mxu0 0
      %2851 = vmatpush.bf16.msra.mxu0 0
      %2852 = vmatpush.bf16.msra.mxu0 0
      %2853 = vmatpush.bf16.msra.mxu0 0
      %2854 = vmatpush.bf16.msra.mxu0 0
      %2855 = vmatpush.bf16.msra.mxu0 %v2846
      %2856 = vmatpush.bf16.msra.mxu0 %v2845
      %2857 = vmatmul.bf16.gmra.mxu0 %v2750
      %v2858 = vpop.f32.mrf.mxu0
      %v2859 = vadd.f32 %v2834, %v2858
      %v2860 = vpop.f32.mrf.mxu0
      %2861 = vdwg.mxu0
      %v2862 = vld [vmem:[%s16] sm:$0x1]
      %v2863 = vadd.f32 %v2859, %v2862
      %v2864 = vtanh.pop %v2863
      %v2865 = vpack.c.bf16 %v2864, %v2864
      %v2866 = vld [vmem:[%s17] sm:$0xf]
      %v2867 = vld [vmem:[%s17 + $0x4] sm:$0xf]
      %v2868 = vld [vmem:[%s17 + $0x8] sm:$0xf]
      %v2869 = vld [vmem:[%s17 + $0xc] sm:$0xf]
      %v2870 = vld [vmem:[%s18] sm:$0x1]
      %v2875 = vunpack.c.l.b16 %v2866
      %v2876 = vunpack.c.l.b16 %v2867
      %v2877 = vunpack.c.l.b16 %v2868
      %v2878 = vunpack.c.l.b16 %v2869
      %v2879 = vpack.c.b16 %v2876, %v2875
      %v2880 = vpack.c.b16 %v2878, %v2877
      %v2884 = vsel %vm160, %v2865, 0
      %2886 = vmatpush.bf16.msra.mxu0 0
      %2887 = vmatpush.bf16.msra.mxu0 0
      %2888 = vmatpush.bf16.msra.mxu0 0
      %2889 = vmatpush.bf16.msra.mxu0 0
      %2890 = vmatpush.bf16.msra.mxu0 0
      %2891 = vmatpush.bf16.msra.mxu0 0
      %2892 = vmatpush.bf16.msra.mxu0 %v2880
      %2893 = vmatpush.bf16.msra.mxu0 %v2879
      %2894 = vmatmul.bf16.gmra.mxu0 %v2884
      %v2895 = vpop.f32.mrf.mxu0
      %v2896 = vadd.f32 %v2870, %v2895
      %v2897 = vpop.f32.mrf.mxu0
      %2898 = vdwg.mxu0
      %vm2899 = vcmask 516096
      %v2900 = vsel %vm2899, %v2896, -inf
      %2901 = vmax.xlane.f32.xlu0 %v2900
      %v2902 = vpop.xlane.xlu0 %2901
      %vm2903 = vcmp.eq.f32.partialorder %v2896, %v2902
      %v2904 = vsel %vm2903, %v2507, 64
      %v2905 = vsel %vm2899, %v2904, 2147483647
      %v2906 = vand.u32 %v2905, 65535
      %v2907 = vshra.s32 %v2905, 16
      %v2908 = vcvt.s32.f32 %v2906
      %v2909 = vcvt.s32.f32 %v2907
      %2910 = vmin.xlane.f32.xlu0 %v2909
      %v2911 = vpop.xlane.xlu0 %2910
      %vm2912 = vcmp.eq.f32.partialorder %v2909, %v2911
      %v2913 = vsel %vm2912, %v2908, inf
      %2914 = vmin.xlane.f32.xlu0 %v2913
      %v2915 = vpop.xlane.xlu0 %2914
      %v2916 = vcvt.f32.s32 %v2915
      %v2917 = vcvt.f32.s32 %v2911
      %v2918 = vshll.u32 %v2917, 16
      %v2919 = vadd.s32 %v2918, %v2916
      %v2920 = vsub.f32 %v2896, %v2902
      %v2921 = vmul.f32 %v2920, 1.442695
      %v2922 = vpow.pop %v2921
      %v2923 = vsel %vm2899, %v2922, 0.0
      %2924 = vadd.xlane.f32.xlu0 %v2923
      %v2925 = vpop.xlane.xlu0 %2924
      %v2926 = vrcp.pop %v2925
      %v2927 = vmul.f32 %v2925, %v2926
      %v2928 = vsub.f32 1.0, %v2927
      %v2929 = vmul.f32 %v2926, %v2928
      %v2930 = vadd.f32 %v2926, %v2929
      %vm2931 = vweird.f32 %v2925
      %vm2932 = vweird.f32 %v2926
      %vm2933 = vmor %vm2931, %vm2932
      %v2934 = vsel %vm2933, %v2926, %v2930
      %v2935 = vand.u32 2147483647, %v2925
      %vm2936 = vcmp.eq.f32.partialorder %v2935, 8.507059e+37
      %v2937 = vand.u32 %v2925, 2147483648
      %v2938 = vor.u32 1.1754944e-38, %v2937
      %v2939 = vsel %vm2936, %v2938, %v2934
      %v2940 = vmul.f32 1.0, %v2939
      %v2941 = vstv %s2509
      %vm2942 = vcmp.eq.s32.totalorder %v2507, %v2941
      %v2943 = vld [vmem:[#allocation10] sm:$0x1]
      %v2944 = vsel %vm2942, %v2919, %v2943
      %2945 = vst.msk [vmem:[#allocation10] sm:$0x1] %vm2503, %v2944
      %v2946 = vld [vmem:[#allocation11] sm:$0x1]
      %v2947 = vsel %vm2942, %v2940, %v2946
      %2948 = vst.msk [vmem:[#allocation11] sm:$0x1] %vm2503, %v2947
      %2949 = vst.msk [vmem:[#allocation5] sm:$0x1] %vm544, %v2746
      %2950 = vst.msk [vmem:[#allocation6] sm:$0x1] %vm2501, %v2919
    $region86: #{greedy_search_decoder.1} parent=1 // loop_footer
      %s2513 = sadd.s32 1, %s2509
    $region87: #{greedy_search_decoder.1} parent=1 // loop_footer_branch
      %2508 = sbr.rel target = $region83
    $region88: #{greedy_search_decoder.1} parent=1 // loop_exit
      _
    // Predicated region
    $region89: #{greedy_search_decoder.1} parent=1 // pred_check
      _
    $region90: #{greedy_search_decoder.1} parent=1 // pred_check_branch
      %2952 = sbr.rel (0) target = $region92
    $region91: #{greedy_search_decoder.1} parent=1 // pred_region
      %2954 = vsyncadd [#allocation9], 0
      %s2956 = sshll.u32 [#allocation10], 4
      %s2957 = int_to_ptr.vmem [resolvable:$true] %s2956
      %s2958 = sshll.u32 %s19, 4
      %s2959 = int_to_ptr.hbm [resolvable:$true] %s2958
      %2961 = dma.vmem_to_hbm [thread:$0]  %s2957, 16, %s2959, [#allocation9]
    $region92: #{greedy_search_decoder.1} parent=1 // pred_fallthru
      _
    // Predicated region
    $region93: #{greedy_search_decoder.1} parent=1 // pred_check
      _
    $region94: #{greedy_search_decoder.1} parent=1 // pred_check_branch
      %2963 = sbr.rel (0) target = $region96
    $region95: #{greedy_search_decoder.1} parent=1 // pred_region
      %2965 = vsyncadd [#allocation12], 0
      %s2967 = sshll.u32 [#allocation11], 4
      %s2968 = int_to_ptr.vmem [resolvable:$true] %s2967
      %s2969 = sshll.u32 %s20, 4
      %s2970 = int_to_ptr.hbm [resolvable:$true] %s2969
      %2972 = dma.vmem_to_hbm [thread:$0]  %s2968, 16, %s2970, [#allocation12]
    $region96: #{greedy_search_decoder.1} parent=1 // pred_fallthru
      _
    // Predicated region
    $region97: #{greedy_search_decoder.1} parent=1 // pred_check
      _
    $region98: #{greedy_search_decoder.1} parent=1 // pred_check_branch
      %2974 = sbr.rel (0) target = $region100
    $region99: #{greedy_search_decoder.1} parent=1 // pred_region
      %2976 = dma.done [#allocation9], 16
    $region100: #{greedy_search_decoder.1} parent=1 // pred_fallthru
      _
    // Predicated region
    $region101: #{greedy_search_decoder.1} parent=1 // pred_check
      _
    $region102: #{greedy_search_decoder.1} parent=1 // pred_check_branch
      %2978 = sbr.rel (0) target = $region104
    $region103: #{greedy_search_decoder.1} parent=1 // pred_region
      %2980 = dma.done [#allocation12], 16
    $region104: #{greedy_search_decoder.1} parent=1 // pred_fallthru
      _
    %2981 = vsyncpa [#allocation8], 1
    %2982 = vsyncpa [#allocation9], 1
    %2983 = vsyncpa [#allocation12], 1

</llo_original>
